<compile_context>
chip_gen: v5e
topology: v5e:2x2
jax: 0.10.0
libtpu: 0.0.40
codegen_flags: <defaults>
</compile_context>

<pallas_src>
import functools
import math

import jax
import jax.numpy as jnp
from jax.experimental import pallas as pl
from jax.experimental.pallas import tpu as pltpu

FC_WIDTH = 200   # module-spec hidden width of the FC head
FC_PAD = 256     # padded to a lane-friendly width
CLS_PAD = 128    # class dim padded to one full vreg lane width


# ----------------------------- fused BiLSTM + MLP + softmax kernel -----------------------------
def _bilstm_mlp_kernel(x_ref, wih_ref, whh_ref, bias_ref, gmask_ref,
                       w1_ref, b1_ref, w2_ref, b2_ref, w3_ref, b3_ref, w4_ref, b4_ref,
                       out_ref, xp_sc, hcat_sc, *, T, B, H):
    """Fused bidirectional LSTM (both directions in one recurrence) + MLP head + softmax.

    x_ref:    (T*B, I)  f32  time-major rows (row t*B + b = time t, batch b)
    wih_ref:  (I, 8H)   bf16 combined input->gate weights, columns [i_f,i_b,f_f,f_b,o_f,o_b,g_f,g_b]
    whh_ref:  (2H, 8H)  bf16 direction-block-diagonal recurrent weights (rows = [h_fwd | h_bwd])
    bias_ref: (1, 8H)   f32  b_ih + b_hh in the same combined column layout
    gmask_ref:(1, 8H)   f32  1.0 on forward-direction columns, 0.0 on backward columns
    w*/b*:    MLP weights (bf16) / biases (f32), padded to FC_PAD / CLS_PAD
    out_ref:  (T*B, CLS_PAD) f32 softmax probabilities (padded classes ~ 0)
    xp_sc:    (T*B, 8H) f32  hoisted input projection (+ bias), both directions
    hcat_sc:  (T*B, 2H) f32  [h_fwd | h_bwd] activations, lane-dense 2H wide
    """
    # ---- hoisted input projection: one MXU matmul for all timesteps & both directions ----
    xp_sc[...] = jnp.dot(x_ref[...].astype(jnp.bfloat16), wih_ref[...],
                         preferred_element_type=jnp.float32) + bias_ref[...]

    whh = whh_ref[...]                                     # (2H, 8H), resident across steps
    is_fwd_col = gmask_ref[...] != 0.0                     # (1, 8H) direction mask (hoisted)

    h = jnp.zeros((B, 2 * H), jnp.float32)                 # [h_fwd | h_bwd]
    c = jnp.zeros((B, 2 * H), jnp.float32)                 # [c_fwd | c_bwd]

    # Statically unrolled time loop: both direction chains advance through a single
    # (B,2H)@(2H,8H) MXU matmul per step; all row offsets are compile-time constants.
    for t in range(T):
        rt = T - 1 - t                                     # backward-direction time index
        rec = jnp.dot(h.astype(jnp.bfloat16), whh, preferred_element_type=jnp.float32)
        x_f = xp_sc[t * B:(t + 1) * B, :]                  # fwd columns used from time t
        x_b = xp_sc[rt * B:(rt + 1) * B, :]                # bwd columns used from time rt
        pre = rec + jnp.where(is_fwd_col, x_f, x_b)        # (B, 8H)

        # gate slabs (each 2H = 128 lanes, lane-aligned): [i | f | o | g]
        sg = 1.0 / (1.0 + jnp.exp(-pre[:, :6 * H]))        # sigmoid over i, f, o slabs
        gg = jnp.tanh(pre[:, 6 * H:])                      # tanh over g slab
        i_g = sg[:, :2 * H]
        f_g = sg[:, 2 * H:4 * H]
        o_g = sg[:, 4 * H:]

        c = f_g * c + i_g * gg
        h = o_g * jnp.tanh(c)

        hcat_sc[t * B:(t + 1) * B, :H] = h[:, :H]          # fwd half -> rows of time t
        hcat_sc[rt * B:(rt + 1) * B, H:] = h[:, H:]        # bwd half -> rows of time rt

    # ---- MLP head + softmax epilogue (activations never leave VMEM) ----
    a = hcat_sc[...].astype(jnp.bfloat16)                  # (T*B, 2H) lane-dense fwd||bwd
    h1 = jnp.maximum(jnp.dot(a, w1_ref[...],
                             preferred_element_type=jnp.float32) + b1_ref[...], 0.0)
    h2 = jnp.maximum(jnp.dot(h1.astype(jnp.bfloat16), w2_ref[...],
                             preferred_element_type=jnp.float32) + b2_ref[...], 0.0)
    h3 = jnp.maximum(jnp.dot(h2.astype(jnp.bfloat16), w3_ref[...],
                             preferred_element_type=jnp.float32) + b3_ref[...], 0.0)
    logits = jnp.dot(h3.astype(jnp.bfloat16), w4_ref[...],
                     preferred_element_type=jnp.float32) + b4_ref[...]

    m = jnp.max(logits, axis=-1, keepdims=True)
    e = jnp.exp(logits - m)
    out_ref[...] = e / jnp.sum(e, axis=-1, keepdims=True)  # exact normalization


# ----------------------------- parameters -----------------------------
def init_params(key, input_size, hidden_size, class_num):
    """Raw f32 parameters. LSTM gate order is (i, f, o, g).
    NOTE: PyTorch nn.LSTM uses gate order (i, f, g, o); imported nn.LSTM weights would
    need a gate permutation before packing."""
    H = hidden_size
    keys = iter(jax.random.split(key, 64))

    def u(shape, scale):
        return jax.random.uniform(next(keys), shape, jnp.float32, -scale, scale)

    s = 1.0 / math.sqrt(H)
    w_ih = [[u((input_size, H), s) for _ in range(4)] for _ in range(2)]   # [dir][gate]
    w_hh = [[u((H, H), s) for _ in range(4)] for _ in range(2)]
    b = [[u((1, H), s) + u((1, H), s) for _ in range(4)] for _ in range(2)]  # b_ih + b_hh

    s1 = 1.0 / math.sqrt(2 * H)
    s2 = 1.0 / math.sqrt(FC_WIDTH)
    fc = (u((2 * H, FC_WIDTH), s1), u((1, FC_WIDTH), s1),
          u((FC_WIDTH, FC_WIDTH), s2), u((1, FC_WIDTH), s2),
          u((FC_WIDTH, FC_WIDTH), s2), u((1, FC_WIDTH), s2),
          u((FC_WIDTH, class_num), s2), u((1, class_num), s2))
    return {"w_ih": w_ih, "w_hh": w_hh, "b": b, "fc": fc}


def pack_params(raw, hidden_size):
    """Pack raw params into the combined / padded layouts the kernel expects."""
    H = hidden_size
    w_ih, w_hh, b = raw["w_ih"], raw["w_hh"], raw["b"]
    w1, b1, w2, b2, w3, b3, w4, b4 = raw["fc"]

    # combined gate-column layout [i_f, i_b, f_f, f_b, o_f, o_b, g_f, g_b] (each H wide)
    w_ih_c = jnp.concatenate([w_ih[d][k] for k in range(4) for d in range(2)], axis=1)
    b_c = jnp.concatenate([b[d][k] for k in range(4) for d in range(2)], axis=1)
    zer = jnp.zeros((H, H), jnp.float32)
    w_hh_c = jnp.concatenate(
        [jnp.concatenate([w_hh[0][k] if d == 0 else zer,
                          w_hh[1][k] if d == 1 else zer], axis=0)
         for k in range(4) for d in range(2)], axis=1)                      # (2H, 8H)

    # 1.0 on forward-direction columns, 0.0 on backward-direction columns
    gmask = jnp.tile(jnp.concatenate([jnp.ones((1, H), jnp.float32),
                                      jnp.zeros((1, H), jnp.float32)], axis=1), (1, 4))

    def pad_cols(a, width, value=0.0):
        return jnp.pad(a, ((0, 0), (0, width - a.shape[1])), constant_values=value)

    def pad_rows(a, height):
        return jnp.pad(a, ((0, height - a.shape[0]), (0, 0)))

    bf = jnp.bfloat16
    return (w_ih_c.astype(bf), w_hh_c.astype(bf), b_c, gmask,
            pad_cols(w1, FC_PAD).astype(bf), pad_cols(b1, FC_PAD),
            pad_rows(pad_cols(w2, FC_PAD), FC_PAD).astype(bf), pad_cols(b2, FC_PAD),
            pad_rows(pad_cols(w3, FC_PAD), FC_PAD).astype(bf), pad_cols(b3, FC_PAD),
            pad_rows(pad_cols(w4, CLS_PAD), FC_PAD).astype(bf),
            pad_cols(b4, CLS_PAD, value=-1e30))   # padded classes -> ~0 probability


# ----------------------------- full forward -----------------------------
def abstract_pu_forward(x_bti, packed, class_num):
    """x_bti: (B, T, I) batch-first like the PyTorch module. Returns (B, T, class_num)."""
    (w_ih_c, w_hh_c, b_c, gmask, w1, b1, w2, b2, w3, b3, w4, b4) = packed
    B, T, I = x_bti.shape
    H = w_hh_c.shape[0] // 2
    CLSP = w4.shape[1]

    # TODO(synk): fold these tiny transposes into the kernel's row indexing at larger shapes.
    x2d = jnp.transpose(x_bti, (1, 0, 2)).reshape(T * B, I)   # time-major rows

    kernel = functools.partial(_bilstm_mlp_kernel, T=T, B=B, H=H)
    inputs = (x2d, w_ih_c, w_hh_c, b_c, gmask, w1, b1, w2, b2, w3, b3, w4, b4)
    full = lambda i: (0, 0)

    probs = pl.pallas_call(
        kernel,
        out_shape=jax.ShapeDtypeStruct((T * B, CLSP), jnp.float32),
        grid=(1,),
        in_specs=[pl.BlockSpec(a.shape, full) for a in inputs],
        out_specs=pl.BlockSpec((T * B, CLSP), full),
        scratch_shapes=[pltpu.VMEM((T * B, 8 * H), jnp.float32),   # hoisted x-projection
                        pltpu.VMEM((T * B, 2 * H), jnp.float32)],  # fwd||bwd activations
        compiler_params=pltpu.CompilerParams(dimension_semantics=("arbitrary",)),
    )(*inputs)

    probs = probs[:, :class_num].reshape(T, B, class_num)
    return jnp.transpose(probs, (1, 0, 2))


# ----------------------------- pure-JAX reference (same bf16/f32 numerics) -----------------------------
def _mm(a, b):
    return jnp.dot(a.astype(jnp.bfloat16), b.astype(jnp.bfloat16),
                   preferred_element_type=jnp.float32)


def reference_forward(x_bti, raw, class_num):
    w_ih, w_hh, b = raw["w_ih"], raw["w_hh"], raw["b"]
    w1, b1, w2, b2, w3, b3, w4, b4 = raw["fc"]
    B, T, _ = x_bti.shape
    H = w_hh[0][0].shape[0]
    x_tbi = jnp.transpose(x_bti, (1, 0, 2))

    def run_dir(d):
        h = jnp.zeros((B, H), jnp.float32)
        c = jnp.zeros((B, H), jnp.float32)
        outs = [None] * T
        order = range(T) if d == 0 else range(T - 1, -1, -1)
        for t in order:
            xt = x_tbi[t]
            pre = [_mm(xt, w_ih[d][k]) + _mm(h, w_hh[d][k]) + b[d][k] for k in range(4)]
            i_g = 1.0 / (1.0 + jnp.exp(-pre[0]))
            f_g = 1.0 / (1.0 + jnp.exp(-pre[1]))
            o_g = 1.0 / (1.0 + jnp.exp(-pre[2]))
            g_g = jnp.tanh(pre[3])
            c = f_g * c + i_g * g_g
            h = o_g * jnp.tanh(c)
            outs[t] = h
        return jnp.stack(outs)                                     # (T, B, H)

    act = jnp.concatenate([run_dir(0), run_dir(1)], axis=-1).reshape(T * B, 2 * H)
    h1 = jnp.maximum(_mm(act, w1) + b1, 0.0)
    h2 = jnp.maximum(_mm(h1, w2) + b2, 0.0)
    h3 = jnp.maximum(_mm(h2, w3) + b3, 0.0)
    logits = _mm(h3, w4) + b4
    p = jax.nn.softmax(logits, axis=-1)
    return jnp.transpose(p.reshape(T, B, class_num), (1, 0, 2))


if __name__ == "__main__":
    # Small, module-consistent shapes (batch-first (B, T, inputSize) input).
    B, T = 2, 8
    INPUT_SIZE, HIDDEN_SIZE, CLASS_NUM = 32, 64, 4

    key = jax.random.PRNGKey(0)
    k_x, k_p = jax.random.split(key)
    x = jax.random.normal(k_x, (B, T, INPUT_SIZE), jnp.float32)

    raw = init_params(k_p, INPUT_SIZE, HIDDEN_SIZE, CLASS_NUM)
    packed = pack_params(raw, HIDDEN_SIZE)

    fwd = jax.jit(functools.partial(abstract_pu_forward, class_num=CLASS_NUM))
    out = jax.block_until_ready(fwd(x, packed))

    assert out.shape == (B, T, CLASS_NUM)
    assert bool(jnp.all(jnp.isfinite(out)))
    assert bool(jnp.allclose(jnp.sum(out, axis=-1), 1.0, atol=1e-4))

    ref = reference_forward(x, raw, CLASS_NUM)
    max_err = float(jnp.max(jnp.abs(out - ref)))
    assert max_err < 1e-2, f"kernel vs reference max abs diff = {max_err}"

    # TODO(synk): forward()/train_mini_batch() are abstract in AbstractPU; this implements the
    # canonical lstm -> fc -> softmax composition of its submodules (inference path, no dropout).
    print("KERNEL_OK")
</pallas_src>

<mosaic_0001>
module attributes {stable_mosaic.version = 11 : i64} {
  func.func @_bilstm_mlp_kernel(%arg0: i32, %arg1: memref<16x32xf32, #tpu.memory_space<vmem>>, %arg2: memref<32x512xbf16, #tpu.memory_space<vmem>>, %arg3: memref<128x512xbf16, #tpu.memory_space<vmem>>, %arg4: memref<1x512xf32, #tpu.memory_space<vmem>>, %arg5: memref<1x512xf32, #tpu.memory_space<vmem>>, %arg6: memref<128x256xbf16, #tpu.memory_space<vmem>>, %arg7: memref<1x256xf32, #tpu.memory_space<vmem>>, %arg8: memref<256x256xbf16, #tpu.memory_space<vmem>>, %arg9: memref<1x256xf32, #tpu.memory_space<vmem>>, %arg10: memref<256x256xbf16, #tpu.memory_space<vmem>>, %arg11: memref<1x256xf32, #tpu.memory_space<vmem>>, %arg12: memref<256x128xbf16, #tpu.memory_space<vmem>>, %arg13: memref<1x128xf32, #tpu.memory_space<vmem>>, %arg14: memref<16x128xf32, #tpu.memory_space<vmem>>, %arg15: memref<16x512xf32, #tpu.memory_space<vmem>>, %arg16: memref<16x128xf32, #tpu.memory_space<vmem>>) attributes {dimension_semantics = [#tpu.dimension_semantics<arbitrary>], iteration_bounds = array<i64: 1>, scalar_prefetch = 0 : i64, scratch_operands = 2 : i64, tpu.core_type = #tpu.core_type<tc>, window_params = [{pipeline_mode = #tpu.pipeline_mode<synchronous>, transform_indices = @transform_0, window_bounds = array<i64: 16, 32>}, {pipeline_mode = #tpu.pipeline_mode<synchronous>, transform_indices = @transform_1, window_bounds = array<i64: 32, 512>}, {pipeline_mode = #tpu.pipeline_mode<synchronous>, transform_indices = @transform_2, window_bounds = array<i64: 128, 512>}, {pipeline_mode = #tpu.pipeline_mode<synchronous>, transform_indices = @transform_3, window_bounds = array<i64: 1, 512>}, {pipeline_mode = #tpu.pipeline_mode<synchronous>, transform_indices = @transform_4, window_bounds = array<i64: 1, 512>}, {pipeline_mode = #tpu.pipeline_mode<synchronous>, transform_indices = @transform_5, window_bounds = array<i64: 128, 256>}, {pipeline_mode = #tpu.pipeline_mode<synchronous>, transform_indices = @transform_6, window_bounds = array<i64: 1, 256>}, {pipeline_mode = #tpu.pipeline_mode<synchronous>, transform_indices = @transform_7, window_bounds = array<i64: 256, 256>}, {pipeline_mode = #tpu.pipeline_mode<synchronous>, transform_indices = @transform_8, window_bounds = array<i64: 1, 256>}, {pipeline_mode = #tpu.pipeline_mode<synchronous>, transform_indices = @transform_9, window_bounds = array<i64: 256, 256>}, {pipeline_mode = #tpu.pipeline_mode<synchronous>, transform_indices = @transform_10, window_bounds = array<i64: 1, 256>}, {pipeline_mode = #tpu.pipeline_mode<synchronous>, transform_indices = @transform_11, window_bounds = array<i64: 256, 128>}, {pipeline_mode = #tpu.pipeline_mode<synchronous>, transform_indices = @transform_12, window_bounds = array<i64: 1, 128>}, {pipeline_mode = #tpu.pipeline_mode<synchronous>, transform_indices = @transform_13, window_bounds = array<i64: 16, 128>}]} {
    %c0 = arith.constant 0 : index
    %c0_0 = arith.constant 0 : index
    %0 = vector.load %arg1[%c0, %c0_0] : memref<16x32xf32, #tpu.memory_space<vmem>>, vector<16x32xf32>
    %1 = arith.truncf %0 : vector<16x32xf32> to vector<16x32xbf16>
    %c0_1 = arith.constant 0 : index
    %c0_2 = arith.constant 0 : index
    %2 = vector.load %arg2[%c0_1, %c0_2] : memref<32x512xbf16, #tpu.memory_space<vmem>>, vector<32x512xbf16>
    %cst = arith.constant dense<0.000000e+00> : vector<16x512xf32>
    %3 = tpu.matmul %1, %2, %cst {dimension_numbers = #tpu.dot_dimension_numbers<[1], [0], [0], [1], [0, 0, 1, 1], [], []>} : vector<16x32xbf16>, vector<32x512xbf16>, vector<16x512xf32> -> vector<16x512xf32>
    %c0_3 = arith.constant 0 : index
    %c0_4 = arith.constant 0 : index
    %4 = vector.load %arg4[%c0_3, %c0_4] : memref<1x512xf32, #tpu.memory_space<vmem>>, vector<1x512xf32>
    %5 = vector.broadcast %4 : vector<1x512xf32> to vector<16x512xf32>
    %6 = arith.addf %3, %5 : vector<16x512xf32>
    %c0_5 = arith.constant 0 : index
    %c0_6 = arith.constant 0 : index
    %7 = vector.load %arg15[%c0_5, %c0_6] : memref<16x512xf32, #tpu.memory_space<vmem>>, vector<16x512xf32>
    tpu.vector_store %arg15[%c0_5, %c0_6], %6 {strides = array<i32>} : memref<16x512xf32, #tpu.memory_space<vmem>>, vector<16x512xf32>,
    %c0_7 = arith.constant 0 : index
    %c0_8 = arith.constant 0 : index
    %8 = vector.load %arg3[%c0_7, %c0_8] : memref<128x512xbf16, #tpu.memory_space<vmem>>, vector<128x512xbf16>
    %c0_9 = arith.constant 0 : index
    %c0_10 = arith.constant 0 : index
    %9 = vector.load %arg5[%c0_9, %c0_10] : memref<1x512xf32, #tpu.memory_space<vmem>>, vector<1x512xf32>
    %cst_11 = arith.constant 0.000000e+00 : f32
    %10 = vector.broadcast %cst_11 : f32 to vector<1x512xf32>
    %11 = arith.cmpf one, %9, %10 : vector<1x512xf32>
    %cst_12 = arith.constant 0.000000e+00 : f32
    %12 = vector.broadcast %cst_12 : f32 to vector<2x128xf32>
    %cst_13 = arith.constant 0.000000e+00 : f32
    %13 = vector.broadcast %cst_13 : f32 to vector<2x128xf32>
    %14 = arith.truncf %12 : vector<2x128xf32> to vector<2x128xbf16>
    %cst_14 = arith.constant dense<0.000000e+00> : vector<2x512xf32>
    %15 = tpu.matmul %14, %8, %cst_14 {dimension_numbers = #tpu.dot_dimension_numbers<[1], [0], [0], [1], [0, 0, 1, 1], [], []>} : vector<2x128xbf16>, vector<128x512xbf16>, vector<2x512xf32> -> vector<2x512xf32>
    %c0_15 = arith.constant 0 : index
    %c0_16 = arith.constant 0 : index
    %16 = vector.load %arg15[%c0_15, %c0_16] : memref<16x512xf32, #tpu.memory_space<vmem>>, vector<2x512xf32>
    %c14 = arith.constant 14 : index
    %c0_17 = arith.constant 0 : index
    %17 = vector.load %arg15[%c14, %c0_17] : memref<16x512xf32, #tpu.memory_space<vmem>>, vector<2x512xf32>
    %18 = vector.shape_cast %11 : vector<1x512xi1> to vector<1x512xi1>
    %19 = vector.broadcast %18 : vector<1x512xi1> to vector<2x512xi1>
    %20 = arith.select %19, %16, %17 : vector<2x512xi1>, vector<2x512xf32>
    %21 = arith.addf %15, %20 : vector<2x512xf32>
    %22 = vector.extract_strided_slice %21 {offsets = [0, 0], sizes = [2, 384], strides = [1, 1]} : vector<2x512xf32> to vector<2x384xf32>
    %cst_18 = arith.constant 0.000000e+00 : f32
    %23 = vector.broadcast %cst_18 : f32 to vector<2x384xf32>
    %24 = arith.subf %23, %22 : vector<2x384xf32>
    %25 = math.exp %24 : vector<2x384xf32>
    %cst_19 = arith.constant 1.000000e+00 : f32
    %26 = vector.broadcast %cst_19 : f32 to vector<2x384xf32>
    %27 = arith.addf %26, %25 : vector<2x384xf32>
    %cst_20 = arith.constant 1.000000e+00 : f32
    %28 = vector.broadcast %cst_20 : f32 to vector<2x384xf32>
    %29 = arith.divf %28, %27 : vector<2x384xf32>
    %30 = vector.extract_strided_slice %21 {offsets = [0, 384], sizes = [2, 128], strides = [1, 1]} : vector<2x512xf32> to vector<2x128xf32>
    %31 = math.tanh %30 : vector<2x128xf32>
    %32 = vector.extract_strided_slice %29 {offsets = [0, 0], sizes = [2, 128], strides = [1, 1]} : vector<2x384xf32> to vector<2x128xf32>
    %33 = vector.extract_strided_slice %29 {offsets = [0, 128], sizes = [2, 128], strides = [1, 1]} : vector<2x384xf32> to vector<2x128xf32>
    %34 = vector.extract_strided_slice %29 {offsets = [0, 256], sizes = [2, 128], strides = [1, 1]} : vector<2x384xf32> to vector<2x128xf32>
    %35 = arith.mulf %33, %13 : vector<2x128xf32>
    %36 = arith.mulf %32, %31 : vector<2x128xf32>
    %37 = arith.addf %35, %36 : vector<2x128xf32>
    %38 = math.tanh %37 : vector<2x128xf32>
    %39 = arith.mulf %34, %38 : vector<2x128xf32>
    %40 = vector.extract_strided_slice %39 {offsets = [0, 0], sizes = [2, 64], strides = [1, 1]} : vector<2x128xf32> to vector<2x64xf32>
    %c0_21 = arith.constant 0 : index
    %c0_22 = arith.constant 0 : index
    %41 = vector.load %arg16[%c0_21, %c0_22] : memref<16x128xf32, #tpu.memory_space<vmem>>, vector<2x64xf32>
    tpu.vector_store %arg16[%c0_21, %c0_22], %40 {strides = array<i32>} : memref<16x128xf32, #tpu.memory_space<vmem>>, vector<2x64xf32>,
    %42 = vector.extract_strided_slice %39 {offsets = [0, 64], sizes = [2, 64], strides = [1, 1]} : vector<2x128xf32> to vector<2x64xf32>
    %c14_23 = arith.constant 14 : index
    %c64 = arith.constant 64 : index
    %43 = vector.load %arg16[%c14_23, %c64] : memref<16x128xf32, #tpu.memory_space<vmem>>, vector<2x64xf32>
    tpu.vector_store %arg16[%c14_23, %c64], %42 {strides = array<i32>} : memref<16x128xf32, #tpu.memory_space<vmem>>, vector<2x64xf32>,
    %44 = arith.truncf %39 : vector<2x128xf32> to vector<2x128xbf16>
    %cst_24 = arith.constant dense<0.000000e+00> : vector<2x512xf32>
    %45 = tpu.matmul %44, %8, %cst_24 {dimension_numbers = #tpu.dot_dimension_numbers<[1], [0], [0], [1], [0, 0, 1, 1], [], []>} : vector<2x128xbf16>, vector<128x512xbf16>, vector<2x512xf32> -> vector<2x512xf32>
    %c2 = arith.constant 2 : index
    %c0_25 = arith.constant 0 : index
    %46 = vector.load %arg15[%c2, %c0_25] : memref<16x512xf32, #tpu.memory_space<vmem>>, vector<2x512xf32>
    %c12 = arith.constant 12 : index
    %c0_26 = arith.constant 0 : index
    %47 = vector.load %arg15[%c12, %c0_26] : memref<16x512xf32, #tpu.memory_space<vmem>>, vector<2x512xf32>
    %48 = vector.shape_cast %11 : vector<1x512xi1> to vector<1x512xi1>
    %49 = vector.broadcast %48 : vector<1x512xi1> to vector<2x512xi1>
    %50 = arith.select %49, %46, %47 : vector<2x512xi1>, vector<2x512xf32>
    %51 = arith.addf %45, %50 : vector<2x512xf32>
    %52 = vector.extract_strided_slice %51 {offsets = [0, 0], sizes = [2, 384], strides = [1, 1]} : vector<2x512xf32> to vector<2x384xf32>
    %cst_27 = arith.constant 0.000000e+00 : f32
    %53 = vector.broadcast %cst_27 : f32 to vector<2x384xf32>
    %54 = arith.subf %53, %52 : vector<2x384xf32>
    %55 = math.exp %54 : vector<2x384xf32>
    %cst_28 = arith.constant 1.000000e+00 : f32
    %56 = vector.broadcast %cst_28 : f32 to vector<2x384xf32>
    %57 = arith.addf %56, %55 : vector<2x384xf32>
    %cst_29 = arith.constant 1.000000e+00 : f32
    %58 = vector.broadcast %cst_29 : f32 to vector<2x384xf32>
    %59 = arith.divf %58, %57 : vector<2x384xf32>
    %60 = vector.extract_strided_slice %51 {offsets = [0, 384], sizes = [2, 128], strides = [1, 1]} : vector<2x512xf32> to vector<2x128xf32>
    %61 = math.tanh %60 : vector<2x128xf32>
    %62 = vector.extract_strided_slice %59 {offsets = [0, 0], sizes = [2, 128], strides = [1, 1]} : vector<2x384xf32> to vector<2x128xf32>
    %63 = vector.extract_strided_slice %59 {offsets = [0, 128], sizes = [2, 128], strides = [1, 1]} : vector<2x384xf32> to vector<2x128xf32>
    %64 = vector.extract_strided_slice %59 {offsets = [0, 256], sizes = [2, 128], strides = [1, 1]} : vector<2x384xf32> to vector<2x128xf32>
    %65 = arith.mulf %63, %37 : vector<2x128xf32>
    %66 = arith.mulf %62, %61 : vector<2x128xf32>
    %67 = arith.addf %65, %66 : vector<2x128xf32>
    %68 = math.tanh %67 : vector<2x128xf32>
    %69 = arith.mulf %64, %68 : vector<2x128xf32>
    %70 = vector.extract_strided_slice %69 {offsets = [0, 0], sizes = [2, 64], strides = [1, 1]} : vector<2x128xf32> to vector<2x64xf32>
    %c2_30 = arith.constant 2 : index
    %c0_31 = arith.constant 0 : index
    %71 = vector.load %arg16[%c2_30, %c0_31] : memref<16x128xf32, #tpu.memory_space<vmem>>, vector<2x64xf32>
    tpu.vector_store %arg16[%c2_30, %c0_31], %70 {strides = array<i32>} : memref<16x128xf32, #tpu.memory_space<vmem>>, vector<2x64xf32>,
    %72 = vector.extract_strided_slice %69 {offsets = [0, 64], sizes = [2, 64], strides = [1, 1]} : vector<2x128xf32> to vector<2x64xf32>
    %c12_32 = arith.constant 12 : index
    %c64_33 = arith.constant 64 : index
    %73 = vector.load %arg16[%c12_32, %c64_33] : memref<16x128xf32, #tpu.memory_space<vmem>>, vector<2x64xf32>
    tpu.vector_store %arg16[%c12_32, %c64_33], %72 {strides = array<i32>} : memref<16x128xf32, #tpu.memory_space<vmem>>, vector<2x64xf32>,
    %74 = arith.truncf %69 : vector<2x128xf32> to vector<2x128xbf16>
    %cst_34 = arith.constant dense<0.000000e+00> : vector<2x512xf32>
    %75 = tpu.matmul %74, %8, %cst_34 {dimension_numbers = #tpu.dot_dimension_numbers<[1], [0], [0], [1], [0, 0, 1, 1], [], []>} : vector<2x128xbf16>, vector<128x512xbf16>, vector<2x512xf32> -> vector<2x512xf32>
    %c4 = arith.constant 4 : index
    %c0_35 = arith.constant 0 : index
    %76 = vector.load %arg15[%c4, %c0_35] : memref<16x512xf32, #tpu.memory_space<vmem>>, vector<2x512xf32>
    %c10 = arith.constant 10 : index
    %c0_36 = arith.constant 0 : index
    %77 = vector.load %arg15[%c10, %c0_36] : memref<16x512xf32, #tpu.memory_space<vmem>>, vector<2x512xf32>
    %78 = vector.shape_cast %11 : vector<1x512xi1> to vector<1x512xi1>
    %79 = vector.broadcast %78 : vector<1x512xi1> to vector<2x512xi1>
    %80 = arith.select %79, %76, %77 : vector<2x512xi1>, vector<2x512xf32>
    %81 = arith.addf %75, %80 : vector<2x512xf32>
    %82 = vector.extract_strided_slice %81 {offsets = [0, 0], sizes = [2, 384], strides = [1, 1]} : vector<2x512xf32> to vector<2x384xf32>
    %cst_37 = arith.constant 0.000000e+00 : f32
    %83 = vector.broadcast %cst_37 : f32 to vector<2x384xf32>
    %84 = arith.subf %83, %82 : vector<2x384xf32>
    %85 = math.exp %84 : vector<2x384xf32>
    %cst_38 = arith.constant 1.000000e+00 : f32
    %86 = vector.broadcast %cst_38 : f32 to vector<2x384xf32>
    %87 = arith.addf %86, %85 : vector<2x384xf32>
    %cst_39 = arith.constant 1.000000e+00 : f32
    %88 = vector.broadcast %cst_39 : f32 to vector<2x384xf32>
    %89 = arith.divf %88, %87 : vector<2x384xf32>
    %90 = vector.extract_strided_slice %81 {offsets = [0, 384], sizes = [2, 128], strides = [1, 1]} : vector<2x512xf32> to vector<2x128xf32>
    %91 = math.tanh %90 : vector<2x128xf32>
    %92 = vector.extract_strided_slice %89 {offsets = [0, 0], sizes = [2, 128], strides = [1, 1]} : vector<2x384xf32> to vector<2x128xf32>
    %93 = vector.extract_strided_slice %89 {offsets = [0, 128], sizes = [2, 128], strides = [1, 1]} : vector<2x384xf32> to vector<2x128xf32>
    %94 = vector.extract_strided_slice %89 {offsets = [0, 256], sizes = [2, 128], strides = [1, 1]} : vector<2x384xf32> to vector<2x128xf32>
    %95 = arith.mulf %93, %67 : vector<2x128xf32>
    %96 = arith.mulf %92, %91 : vector<2x128xf32>
    %97 = arith.addf %95, %96 : vector<2x128xf32>
    %98 = math.tanh %97 : vector<2x128xf32>
    %99 = arith.mulf %94, %98 : vector<2x128xf32>
    %100 = vector.extract_strided_slice %99 {offsets = [0, 0], sizes = [2, 64], strides = [1, 1]} : vector<2x128xf32> to vector<2x64xf32>
    %c4_40 = arith.constant 4 : index
    %c0_41 = arith.constant 0 : index
    %101 = vector.load %arg16[%c4_40, %c0_41] : memref<16x128xf32, #tpu.memory_space<vmem>>, vector<2x64xf32>
    tpu.vector_store %arg16[%c4_40, %c0_41], %100 {strides = array<i32>} : memref<16x128xf32, #tpu.memory_space<vmem>>, vector<2x64xf32>,
    %102 = vector.extract_strided_slice %99 {offsets = [0, 64], sizes = [2, 64], strides = [1, 1]} : vector<2x128xf32> to vector<2x64xf32>
    %c10_42 = arith.constant 10 : index
    %c64_43 = arith.constant 64 : index
    %103 = vector.load %arg16[%c10_42, %c64_43] : memref<16x128xf32, #tpu.memory_space<vmem>>, vector<2x64xf32>
    tpu.vector_store %arg16[%c10_42, %c64_43], %102 {strides = array<i32>} : memref<16x128xf32, #tpu.memory_space<vmem>>, vector<2x64xf32>,
    %104 = arith.truncf %99 : vector<2x128xf32> to vector<2x128xbf16>
    %cst_44 = arith.constant dense<0.000000e+00> : vector<2x512xf32>
    %105 = tpu.matmul %104, %8, %cst_44 {dimension_numbers = #tpu.dot_dimension_numbers<[1], [0], [0], [1], [0, 0, 1, 1], [], []>} : vector<2x128xbf16>, vector<128x512xbf16>, vector<2x512xf32> -> vector<2x512xf32>
    %c6 = arith.constant 6 : index
    %c0_45 = arith.constant 0 : index
    %106 = vector.load %arg15[%c6, %c0_45] : memref<16x512xf32, #tpu.memory_space<vmem>>, vector<2x512xf32>
    %c8 = arith.constant 8 : index
    %c0_46 = arith.constant 0 : index
    %107 = vector.load %arg15[%c8, %c0_46] : memref<16x512xf32, #tpu.memory_space<vmem>>, vector<2x512xf32>
    %108 = vector.shape_cast %11 : vector<1x512xi1> to vector<1x512xi1>
    %109 = vector.broadcast %108 : vector<1x512xi1> to vector<2x512xi1>
    %110 = arith.select %109, %106, %107 : vector<2x512xi1>, vector<2x512xf32>
    %111 = arith.addf %105, %110 : vector<2x512xf32>
    %112 = vector.extract_strided_slice %111 {offsets = [0, 0], sizes = [2, 384], strides = [1, 1]} : vector<2x512xf32> to vector<2x384xf32>
    %cst_47 = arith.constant 0.000000e+00 : f32
    %113 = vector.broadcast %cst_47 : f32 to vector<2x384xf32>
    %114 = arith.subf %113, %112 : vector<2x384xf32>
    %115 = math.exp %114 : vector<2x384xf32>
    %cst_48 = arith.constant 1.000000e+00 : f32
    %116 = vector.broadcast %cst_48 : f32 to vector<2x384xf32>
    %117 = arith.addf %116, %115 : vector<2x384xf32>
    %cst_49 = arith.constant 1.000000e+00 : f32
    %118 = vector.broadcast %cst_49 : f32 to vector<2x384xf32>
    %119 = arith.divf %118, %117 : vector<2x384xf32>
    %120 = vector.extract_strided_slice %111 {offsets = [0, 384], sizes = [2, 128], strides = [1, 1]} : vector<2x512xf32> to vector<2x128xf32>
    %121 = math.tanh %120 : vector<2x128xf32>
    %122 = vector.extract_strided_slice %119 {offsets = [0, 0], sizes = [2, 128], strides = [1, 1]} : vector<2x384xf32> to vector<2x128xf32>
    %123 = vector.extract_strided_slice %119 {offsets = [0, 128], sizes = [2, 128], strides = [1, 1]} : vector<2x384xf32> to vector<2x128xf32>
    %124 = vector.extract_strided_slice %119 {offsets = [0, 256], sizes = [2, 128], strides = [1, 1]} : vector<2x384xf32> to vector<2x128xf32>
    %125 = arith.mulf %123, %97 : vector<2x128xf32>
    %126 = arith.mulf %122, %121 : vector<2x128xf32>
    %127 = arith.addf %125, %126 : vector<2x128xf32>
    %128 = math.tanh %127 : vector<2x128xf32>
    %129 = arith.mulf %124, %128 : vector<2x128xf32>
    %130 = vector.extract_strided_slice %129 {offsets = [0, 0], sizes = [2, 64], strides = [1, 1]} : vector<2x128xf32> to vector<2x64xf32>
    %c6_50 = arith.constant 6 : index
    %c0_51 = arith.constant 0 : index
    %131 = vector.load %arg16[%c6_50, %c0_51] : memref<16x128xf32, #tpu.memory_space<vmem>>, vector<2x64xf32>
    tpu.vector_store %arg16[%c6_50, %c0_51], %130 {strides = array<i32>} : memref<16x128xf32, #tpu.memory_space<vmem>>, vector<2x64xf32>,
    %132 = vector.extract_strided_slice %129 {offsets = [0, 64], sizes = [2, 64], strides = [1, 1]} : vector<2x128xf32> to vector<2x64xf32>
    %c8_52 = arith.constant 8 : index
    %c64_53 = arith.constant 64 : index
    %133 = vector.load %arg16[%c8_52, %c64_53] : memref<16x128xf32, #tpu.memory_space<vmem>>, vector<2x64xf32>
    tpu.vector_store %arg16[%c8_52, %c64_53], %132 {strides = array<i32>} : memref<16x128xf32, #tpu.memory_space<vmem>>, vector<2x64xf32>,
    %134 = arith.truncf %129 : vector<2x128xf32> to vector<2x128xbf16>
    %cst_54 = arith.constant dense<0.000000e+00> : vector<2x512xf32>
    %135 = tpu.matmul %134, %8, %cst_54 {dimension_numbers = #tpu.dot_dimension_numbers<[1], [0], [0], [1], [0, 0, 1, 1], [], []>} : vector<2x128xbf16>, vector<128x512xbf16>, vector<2x512xf32> -> vector<2x512xf32>
    %c8_55 = arith.constant 8 : index
    %c0_56 = arith.constant 0 : index
    %136 = vector.load %arg15[%c8_55, %c0_56] : memref<16x512xf32, #tpu.memory_space<vmem>>, vector<2x512xf32>
    %c6_57 = arith.constant 6 : index
    %c0_58 = arith.constant 0 : index
    %137 = vector.load %arg15[%c6_57, %c0_58] : memref<16x512xf32, #tpu.memory_space<vmem>>, vector<2x512xf32>
    %138 = vector.shape_cast %11 : vector<1x512xi1> to vector<1x512xi1>
    %139 = vector.broadcast %138 : vector<1x512xi1> to vector<2x512xi1>
    %140 = arith.select %139, %136, %137 : vector<2x512xi1>, vector<2x512xf32>
    %141 = arith.addf %135, %140 : vector<2x512xf32>
    %142 = vector.extract_strided_slice %141 {offsets = [0, 0], sizes = [2, 384], strides = [1, 1]} : vector<2x512xf32> to vector<2x384xf32>
    %cst_59 = arith.constant 0.000000e+00 : f32
    %143 = vector.broadcast %cst_59 : f32 to vector<2x384xf32>
    %144 = arith.subf %143, %142 : vector<2x384xf32>
    %145 = math.exp %144 : vector<2x384xf32>
    %cst_60 = arith.constant 1.000000e+00 : f32
    %146 = vector.broadcast %cst_60 : f32 to vector<2x384xf32>
    %147 = arith.addf %146, %145 : vector<2x384xf32>
    %cst_61 = arith.constant 1.000000e+00 : f32
    %148 = vector.broadcast %cst_61 : f32 to vector<2x384xf32>
    %149 = arith.divf %148, %147 : vector<2x384xf32>
    %150 = vector.extract_strided_slice %141 {offsets = [0, 384], sizes = [2, 128], strides = [1, 1]} : vector<2x512xf32> to vector<2x128xf32>
    %151 = math.tanh %150 : vector<2x128xf32>
    %152 = vector.extract_strided_slice %149 {offsets = [0, 0], sizes = [2, 128], strides = [1, 1]} : vector<2x384xf32> to vector<2x128xf32>
    %153 = vector.extract_strided_slice %149 {offsets = [0, 128], sizes = [2, 128], strides = [1, 1]} : vector<2x384xf32> to vector<2x128xf32>
    %154 = vector.extract_strided_slice %149 {offsets = [0, 256], sizes = [2, 128], strides = [1, 1]} : vector<2x384xf32> to vector<2x128xf32>
    %155 = arith.mulf %153, %127 : vector<2x128xf32>
    %156 = arith.mulf %152, %151 : vector<2x128xf32>
    %157 = arith.addf %155, %156 : vector<2x128xf32>
    %158 = math.tanh %157 : vector<2x128xf32>
    %159 = arith.mulf %154, %158 : vector<2x128xf32>
    %160 = vector.extract_strided_slice %159 {offsets = [0, 0], sizes = [2, 64], strides = [1, 1]} : vector<2x128xf32> to vector<2x64xf32>
    %c8_62 = arith.constant 8 : index
    %c0_63 = arith.constant 0 : index
    %161 = vector.load %arg16[%c8_62, %c0_63] : memref<16x128xf32, #tpu.memory_space<vmem>>, vector<2x64xf32>
    tpu.vector_store %arg16[%c8_62, %c0_63], %160 {strides = array<i32>} : memref<16x128xf32, #tpu.memory_space<vmem>>, vector<2x64xf32>,
    %162 = vector.extract_strided_slice %159 {offsets = [0, 64], sizes = [2, 64], strides = [1, 1]} : vector<2x128xf32> to vector<2x64xf32>
    %c6_64 = arith.constant 6 : index
    %c64_65 = arith.constant 64 : index
    %163 = vector.load %arg16[%c6_64, %c64_65] : memref<16x128xf32, #tpu.memory_space<vmem>>, vector<2x64xf32>
    tpu.vector_store %arg16[%c6_64, %c64_65], %162 {strides = array<i32>} : memref<16x128xf32, #tpu.memory_space<vmem>>, vector<2x64xf32>,
    %164 = arith.truncf %159 : vector<2x128xf32> to vector<2x128xbf16>
    %cst_66 = arith.constant dense<0.000000e+00> : vector<2x512xf32>
    %165 = tpu.matmul %164, %8, %cst_66 {dimension_numbers = #tpu.dot_dimension_numbers<[1], [0], [0], [1], [0, 0, 1, 1], [], []>} : vector<2x128xbf16>, vector<128x512xbf16>, vector<2x512xf32> -> vector<2x512xf32>
    %c10_67 = arith.constant 10 : index
    %c0_68 = arith.constant 0 : index
    %166 = vector.load %arg15[%c10_67, %c0_68] : memref<16x512xf32, #tpu.memory_space<vmem>>, vector<2x512xf32>
    %c4_69 = arith.constant 4 : index
    %c0_70 = arith.constant 0 : index
    %167 = vector.load %arg15[%c4_69, %c0_70] : memref<16x512xf32, #tpu.memory_space<vmem>>, vector<2x512xf32>
    %168 = vector.shape_cast %11 : vector<1x512xi1> to vector<1x512xi1>
    %169 = vector.broadcast %168 : vector<1x512xi1> to vector<2x512xi1>
    %170 = arith.select %169, %166, %167 : vector<2x512xi1>, vector<2x512xf32>
    %171 = arith.addf %165, %170 : vector<2x512xf32>
    %172 = vector.extract_strided_slice %171 {offsets = [0, 0], sizes = [2, 384], strides = [1, 1]} : vector<2x512xf32> to vector<2x384xf32>
    %cst_71 = arith.constant 0.000000e+00 : f32
    %173 = vector.broadcast %cst_71 : f32 to vector<2x384xf32>
    %174 = arith.subf %173, %172 : vector<2x384xf32>
    %175 = math.exp %174 : vector<2x384xf32>
    %cst_72 = arith.constant 1.000000e+00 : f32
    %176 = vector.broadcast %cst_72 : f32 to vector<2x384xf32>
    %177 = arith.addf %176, %175 : vector<2x384xf32>
    %cst_73 = arith.constant 1.000000e+00 : f32
    %178 = vector.broadcast %cst_73 : f32 to vector<2x384xf32>
    %179 = arith.divf %178, %177 : vector<2x384xf32>
    %180 = vector.extract_strided_slice %171 {offsets = [0, 384], sizes = [2, 128], strides = [1, 1]} : vector<2x512xf32> to vector<2x128xf32>
    %181 = math.tanh %180 : vector<2x128xf32>
    %182 = vector.extract_strided_slice %179 {offsets = [0, 0], sizes = [2, 128], strides = [1, 1]} : vector<2x384xf32> to vector<2x128xf32>
    %183 = vector.extract_strided_slice %179 {offsets = [0, 128], sizes = [2, 128], strides = [1, 1]} : vector<2x384xf32> to vector<2x128xf32>
    %184 = vector.extract_strided_slice %179 {offsets = [0, 256], sizes = [2, 128], strides = [1, 1]} : vector<2x384xf32> to vector<2x128xf32>
    %185 = arith.mulf %183, %157 : vector<2x128xf32>
    %186 = arith.mulf %182, %181 : vector<2x128xf32>
    %187 = arith.addf %185, %186 : vector<2x128xf32>
    %188 = math.tanh %187 : vector<2x128xf32>
    %189 = arith.mulf %184, %188 : vector<2x128xf32>
    %190 = vector.extract_strided_slice %189 {offsets = [0, 0], sizes = [2, 64], strides = [1, 1]} : vector<2x128xf32> to vector<2x64xf32>
    %c10_74 = arith.constant 10 : index
    %c0_75 = arith.constant 0 : index
    %191 = vector.load %arg16[%c10_74, %c0_75] : memref<16x128xf32, #tpu.memory_space<vmem>>, vector<2x64xf32>
    tpu.vector_store %arg16[%c10_74, %c0_75], %190 {strides = array<i32>} : memref<16x128xf32, #tpu.memory_space<vmem>>, vector<2x64xf32>,
    %192 = vector.extract_strided_slice %189 {offsets = [0, 64], sizes = [2, 64], strides = [1, 1]} : vector<2x128xf32> to vector<2x64xf32>
    %c4_76 = arith.constant 4 : index
    %c64_77 = arith.constant 64 : index
    %193 = vector.load %arg16[%c4_76, %c64_77] : memref<16x128xf32, #tpu.memory_space<vmem>>, vector<2x64xf32>
    tpu.vector_store %arg16[%c4_76, %c64_77], %192 {strides = array<i32>} : memref<16x128xf32, #tpu.memory_space<vmem>>, vector<2x64xf32>,
    %194 = arith.truncf %189 : vector<2x128xf32> to vector<2x128xbf16>
    %cst_78 = arith.constant dense<0.000000e+00> : vector<2x512xf32>
    %195 = tpu.matmul %194, %8, %cst_78 {dimension_numbers = #tpu.dot_dimension_numbers<[1], [0], [0], [1], [0, 0, 1, 1], [], []>} : vector<2x128xbf16>, vector<128x512xbf16>, vector<2x512xf32> -> vector<2x512xf32>
    %c12_79 = arith.constant 12 : index
    %c0_80 = arith.constant 0 : index
    %196 = vector.load %arg15[%c12_79, %c0_80] : memref<16x512xf32, #tpu.memory_space<vmem>>, vector<2x512xf32>
    %c2_81 = arith.constant 2 : index
    %c0_82 = arith.constant 0 : index
    %197 = vector.load %arg15[%c2_81, %c0_82] : memref<16x512xf32, #tpu.memory_space<vmem>>, vector<2x512xf32>
    %198 = vector.shape_cast %11 : vector<1x512xi1> to vector<1x512xi1>
    %199 = vector.broadcast %198 : vector<1x512xi1> to vector<2x512xi1>
    %200 = arith.select %199, %196, %197 : vector<2x512xi1>, vector<2x512xf32>
    %201 = arith.addf %195, %200 : vector<2x512xf32>
    %202 = vector.extract_strided_slice %201 {offsets = [0, 0], sizes = [2, 384], strides = [1, 1]} : vector<2x512xf32> to vector<2x384xf32>
    %cst_83 = arith.constant 0.000000e+00 : f32
    %203 = vector.broadcast %cst_83 : f32 to vector<2x384xf32>
    %204 = arith.subf %203, %202 : vector<2x384xf32>
    %205 = math.exp %204 : vector<2x384xf32>
    %cst_84 = arith.constant 1.000000e+00 : f32
    %206 = vector.broadcast %cst_84 : f32 to vector<2x384xf32>
    %207 = arith.addf %206, %205 : vector<2x384xf32>
    %cst_85 = arith.constant 1.000000e+00 : f32
    %208 = vector.broadcast %cst_85 : f32 to vector<2x384xf32>
    %209 = arith.divf %208, %207 : vector<2x384xf32>
    %210 = vector.extract_strided_slice %201 {offsets = [0, 384], sizes = [2, 128], strides = [1, 1]} : vector<2x512xf32> to vector<2x128xf32>
    %211 = math.tanh %210 : vector<2x128xf32>
    %212 = vector.extract_strided_slice %209 {offsets = [0, 0], sizes = [2, 128], strides = [1, 1]} : vector<2x384xf32> to vector<2x128xf32>
    %213 = vector.extract_strided_slice %209 {offsets = [0, 128], sizes = [2, 128], strides = [1, 1]} : vector<2x384xf32> to vector<2x128xf32>
    %214 = vector.extract_strided_slice %209 {offsets = [0, 256], sizes = [2, 128], strides = [1, 1]} : vector<2x384xf32> to vector<2x128xf32>
    %215 = arith.mulf %213, %187 : vector<2x128xf32>
    %216 = arith.mulf %212, %211 : vector<2x128xf32>
    %217 = arith.addf %215, %216 : vector<2x128xf32>
    %218 = math.tanh %217 : vector<2x128xf32>
    %219 = arith.mulf %214, %218 : vector<2x128xf32>
    %220 = vector.extract_strided_slice %219 {offsets = [0, 0], sizes = [2, 64], strides = [1, 1]} : vector<2x128xf32> to vector<2x64xf32>
    %c12_86 = arith.constant 12 : index
    %c0_87 = arith.constant 0 : index
    %221 = vector.load %arg16[%c12_86, %c0_87] : memref<16x128xf32, #tpu.memory_space<vmem>>, vector<2x64xf32>
    tpu.vector_store %arg16[%c12_86, %c0_87], %220 {strides = array<i32>} : memref<16x128xf32, #tpu.memory_space<vmem>>, vector<2x64xf32>,
    %222 = vector.extract_strided_slice %219 {offsets = [0, 64], sizes = [2, 64], strides = [1, 1]} : vector<2x128xf32> to vector<2x64xf32>
    %c2_88 = arith.constant 2 : index
    %c64_89 = arith.constant 64 : index
    %223 = vector.load %arg16[%c2_88, %c64_89] : memref<16x128xf32, #tpu.memory_space<vmem>>, vector<2x64xf32>
    tpu.vector_store %arg16[%c2_88, %c64_89], %222 {strides = array<i32>} : memref<16x128xf32, #tpu.memory_space<vmem>>, vector<2x64xf32>,
    %224 = arith.truncf %219 : vector<2x128xf32> to vector<2x128xbf16>
    %cst_90 = arith.constant dense<0.000000e+00> : vector<2x512xf32>
    %225 = tpu.matmul %224, %8, %cst_90 {dimension_numbers = #tpu.dot_dimension_numbers<[1], [0], [0], [1], [0, 0, 1, 1], [], []>} : vector<2x128xbf16>, vector<128x512xbf16>, vector<2x512xf32> -> vector<2x512xf32>
    %c14_91 = arith.constant 14 : index
    %c0_92 = arith.constant 0 : index
    %226 = vector.load %arg15[%c14_91, %c0_92] : memref<16x512xf32, #tpu.memory_space<vmem>>, vector<2x512xf32>
    %c0_93 = arith.constant 0 : index
    %c0_94 = arith.constant 0 : index
    %227 = vector.load %arg15[%c0_93, %c0_94] : memref<16x512xf32, #tpu.memory_space<vmem>>, vector<2x512xf32>
    %228 = vector.shape_cast %11 : vector<1x512xi1> to vector<1x512xi1>
    %229 = vector.broadcast %228 : vector<1x512xi1> to vector<2x512xi1>
    %230 = arith.select %229, %226, %227 : vector<2x512xi1>, vector<2x512xf32>
    %231 = arith.addf %225, %230 : vector<2x512xf32>
    %232 = vector.extract_strided_slice %231 {offsets = [0, 0], sizes = [2, 384], strides = [1, 1]} : vector<2x512xf32> to vector<2x384xf32>
    %cst_95 = arith.constant 0.000000e+00 : f32
    %233 = vector.broadcast %cst_95 : f32 to vector<2x384xf32>
    %234 = arith.subf %233, %232 : vector<2x384xf32>
    %235 = math.exp %234 : vector<2x384xf32>
    %cst_96 = arith.constant 1.000000e+00 : f32
    %236 = vector.broadcast %cst_96 : f32 to vector<2x384xf32>
    %237 = arith.addf %236, %235 : vector<2x384xf32>
    %cst_97 = arith.constant 1.000000e+00 : f32
    %238 = vector.broadcast %cst_97 : f32 to vector<2x384xf32>
    %239 = arith.divf %238, %237 : vector<2x384xf32>
    %240 = vector.extract_strided_slice %231 {offsets = [0, 384], sizes = [2, 128], strides = [1, 1]} : vector<2x512xf32> to vector<2x128xf32>
    %241 = math.tanh %240 : vector<2x128xf32>
    %242 = vector.extract_strided_slice %239 {offsets = [0, 0], sizes = [2, 128], strides = [1, 1]} : vector<2x384xf32> to vector<2x128xf32>
    %243 = vector.extract_strided_slice %239 {offsets = [0, 128], sizes = [2, 128], strides = [1, 1]} : vector<2x384xf32> to vector<2x128xf32>
    %244 = vector.extract_strided_slice %239 {offsets = [0, 256], sizes = [2, 128], strides = [1, 1]} : vector<2x384xf32> to vector<2x128xf32>
    %245 = arith.mulf %243, %217 : vector<2x128xf32>
    %246 = arith.mulf %242, %241 : vector<2x128xf32>
    %247 = arith.addf %245, %246 : vector<2x128xf32>
    %248 = math.tanh %247 : vector<2x128xf32>
    %249 = arith.mulf %244, %248 : vector<2x128xf32>
    %250 = vector.extract_strided_slice %249 {offsets = [0, 0], sizes = [2, 64], strides = [1, 1]} : vector<2x128xf32> to vector<2x64xf32>
    %c14_98 = arith.constant 14 : index
    %c0_99 = arith.constant 0 : index
    %251 = vector.load %arg16[%c14_98, %c0_99] : memref<16x128xf32, #tpu.memory_space<vmem>>, vector<2x64xf32>
    tpu.vector_store %arg16[%c14_98, %c0_99], %250 {strides = array<i32>} : memref<16x128xf32, #tpu.memory_space<vmem>>, vector<2x64xf32>,
    %252 = vector.extract_strided_slice %249 {offsets = [0, 64], sizes = [2, 64], strides = [1, 1]} : vector<2x128xf32> to vector<2x64xf32>
    %c0_100 = arith.constant 0 : index
    %c64_101 = arith.constant 64 : index
    %253 = vector.load %arg16[%c0_100, %c64_101] : memref<16x128xf32, #tpu.memory_space<vmem>>, vector<2x64xf32>
    tpu.vector_store %arg16[%c0_100, %c64_101], %252 {strides = array<i32>} : memref<16x128xf32, #tpu.memory_space<vmem>>, vector<2x64xf32>,
    %c0_102 = arith.constant 0 : index
    %c0_103 = arith.constant 0 : index
    %254 = vector.load %arg16[%c0_102, %c0_103] : memref<16x128xf32, #tpu.memory_space<vmem>>, vector<16x128xf32>
    %255 = arith.truncf %254 : vector<16x128xf32> to vector<16x128xbf16>
    %c0_104 = arith.constant 0 : index
    %c0_105 = arith.constant 0 : index
    %256 = vector.load %arg6[%c0_104, %c0_105] : memref<128x256xbf16, #tpu.memory_space<vmem>>, vector<128x256xbf16>
    %cst_106 = arith.constant dense<0.000000e+00> : vector<16x256xf32>
    %257 = tpu.matmul %255, %256, %cst_106 {dimension_numbers = #tpu.dot_dimension_numbers<[1], [0], [0], [1], [0, 0, 1, 1], [], []>} : vector<16x128xbf16>, vector<128x256xbf16>, vector<16x256xf32> -> vector<16x256xf32>
    %c0_107 = arith.constant 0 : index
    %c0_108 = arith.constant 0 : index
    %258 = vector.load %arg7[%c0_107, %c0_108] : memref<1x256xf32, #tpu.memory_space<vmem>>, vector<1x256xf32>
    %259 = vector.broadcast %258 : vector<1x256xf32> to vector<16x256xf32>
    %260 = arith.addf %257, %259 : vector<16x256xf32>
    %cst_109 = arith.constant 0.000000e+00 : f32
    %261 = vector.broadcast %cst_109 : f32 to vector<16x256xf32>
    %262 = arith.maximumf %260, %261 : vector<16x256xf32>
    %263 = arith.truncf %262 : vector<16x256xf32> to vector<16x256xbf16>
    %c0_110 = arith.constant 0 : index
    %c0_111 = arith.constant 0 : index
    %264 = vector.load %arg8[%c0_110, %c0_111] : memref<256x256xbf16, #tpu.memory_space<vmem>>, vector<256x256xbf16>
    %cst_112 = arith.constant dense<0.000000e+00> : vector<16x256xf32>
    %265 = tpu.matmul %263, %264, %cst_112 {dimension_numbers = #tpu.dot_dimension_numbers<[1], [0], [0], [1], [0, 0, 1, 1], [], []>} : vector<16x256xbf16>, vector<256x256xbf16>, vector<16x256xf32> -> vector<16x256xf32>
    %c0_113 = arith.constant 0 : index
    %c0_114 = arith.constant 0 : index
    %266 = vector.load %arg9[%c0_113, %c0_114] : memref<1x256xf32, #tpu.memory_space<vmem>>, vector<1x256xf32>
    %267 = vector.broadcast %266 : vector<1x256xf32> to vector<16x256xf32>
    %268 = arith.addf %265, %267 : vector<16x256xf32>
    %cst_115 = arith.constant 0.000000e+00 : f32
    %269 = vector.broadcast %cst_115 : f32 to vector<16x256xf32>
    %270 = arith.maximumf %268, %269 : vector<16x256xf32>
    %271 = arith.truncf %270 : vector<16x256xf32> to vector<16x256xbf16>
    %c0_116 = arith.constant 0 : index
    %c0_117 = arith.constant 0 : index
    %272 = vector.load %arg10[%c0_116, %c0_117] : memref<256x256xbf16, #tpu.memory_space<vmem>>, vector<256x256xbf16>
    %cst_118 = arith.constant dense<0.000000e+00> : vector<16x256xf32>
    %273 = tpu.matmul %271, %272, %cst_118 {dimension_numbers = #tpu.dot_dimension_numbers<[1], [0], [0], [1], [0, 0, 1, 1], [], []>} : vector<16x256xbf16>, vector<256x256xbf16>, vector<16x256xf32> -> vector<16x256xf32>
    %c0_119 = arith.constant 0 : index
    %c0_120 = arith.constant 0 : index
    %274 = vector.load %arg11[%c0_119, %c0_120] : memref<1x256xf32, #tpu.memory_space<vmem>>, vector<1x256xf32>
    %275 = vector.broadcast %274 : vector<1x256xf32> to vector<16x256xf32>
    %276 = arith.addf %273, %275 : vector<16x256xf32>
    %cst_121 = arith.constant 0.000000e+00 : f32
    %277 = vector.broadcast %cst_121 : f32 to vector<16x256xf32>
    %278 = arith.maximumf %276, %277 : vector<16x256xf32>
    %279 = arith.truncf %278 : vector<16x256xf32> to vector<16x256xbf16>
    %c0_122 = arith.constant 0 : index
    %c0_123 = arith.constant 0 : index
    %280 = vector.load %arg12[%c0_122, %c0_123] : memref<256x128xbf16, #tpu.memory_space<vmem>>, vector<256x128xbf16>
    %cst_124 = arith.constant dense<0.000000e+00> : vector<16x128xf32>
    %281 = tpu.matmul %279, %280, %cst_124 {dimension_numbers = #tpu.dot_dimension_numbers<[1], [0], [0], [1], [0, 0, 1, 1], [], []>} : vector<16x256xbf16>, vector<256x128xbf16>, vector<16x128xf32> -> vector<16x128xf32>
    %c0_125 = arith.constant 0 : index
    %c0_126 = arith.constant 0 : index
    %282 = vector.load %arg13[%c0_125, %c0_126] : memref<1x128xf32, #tpu.memory_space<vmem>>, vector<1x128xf32>
    %283 = vector.broadcast %282 : vector<1x128xf32> to vector<16x128xf32>
    %284 = arith.addf %281, %283 : vector<16x128xf32>
    %cst_127 = arith.constant dense<0xFF800000> : vector<16xf32>
    %285 = vector.multi_reduction <maximumf>, %284, %cst_127 [1] : vector<16x128xf32> to vector<16xf32>
    %286 = vector.shape_cast %285 : vector<16xf32> to vector<16x1xf32>
    %287 = vector.broadcast %286 : vector<16x1xf32> to vector<16x128xf32>
    %288 = arith.subf %284, %287 : vector<16x128xf32>
    %289 = math.exp %288 : vector<16x128xf32>
    %cst_128 = arith.constant dense<0.000000e+00> : vector<16xf32>
    %290 = vector.multi_reduction <add>, %289, %cst_128 [1] : vector<16x128xf32> to vector<16xf32>
    %291 = vector.shape_cast %290 : vector<16xf32> to vector<16x1xf32>
    %292 = vector.broadcast %291 : vector<16x1xf32> to vector<16x128xf32>
    %293 = arith.divf %289, %292 : vector<16x128xf32>
    %c0_129 = arith.constant 0 : index
    %c0_130 = arith.constant 0 : index
    %294 = vector.load %arg14[%c0_129, %c0_130] : memref<16x128xf32, #tpu.memory_space<vmem>>, vector<16x128xf32>
    tpu.vector_store %arg14[%c0_129, %c0_130], %293 {strides = array<i32>} : memref<16x128xf32, #tpu.memory_space<vmem>>, vector<16x128xf32>,
    return
  }
  func.func @transform_0(%arg0: i32) -> (i32, i32) {
    %c0_i32 = arith.constant 0 : i32
    %c0_i32_0 = arith.constant 0 : i32
    %c0_i32_1 = arith.constant 0 : i32
    return %c0_i32, %c0_i32_0 : i32, i32
  }
  func.func @transform_1(%arg0: i32) -> (i32, i32) {
    %c0_i32 = arith.constant 0 : i32
    %c0_i32_0 = arith.constant 0 : i32
    %c0_i32_1 = arith.constant 0 : i32
    return %c0_i32, %c0_i32_0 : i32, i32
  }
  func.func @transform_2(%arg0: i32) -> (i32, i32) {
    %c0_i32 = arith.constant 0 : i32
    %c0_i32_0 = arith.constant 0 : i32
    %c0_i32_1 = arith.constant 0 : i32
    return %c0_i32, %c0_i32_0 : i32, i32
  }
  func.func @transform_3(%arg0: i32) -> (i32, i32) {
    %c0_i32 = arith.constant 0 : i32
    %c0_i32_0 = arith.constant 0 : i32
    %c0_i32_1 = arith.constant 0 : i32
    return %c0_i32, %c0_i32_0 : i32, i32
  }
  func.func @transform_4(%arg0: i32) -> (i32, i32) {
    %c0_i32 = arith.constant 0 : i32
    %c0_i32_0 = arith.constant 0 : i32
    %c0_i32_1 = arith.constant 0 : i32
    return %c0_i32, %c0_i32_0 : i32, i32
  }
  func.func @transform_5(%arg0: i32) -> (i32, i32) {
    %c0_i32 = arith.constant 0 : i32
    %c0_i32_0 = arith.constant 0 : i32
    %c0_i32_1 = arith.constant 0 : i32
    return %c0_i32, %c0_i32_0 : i32, i32
  }
  func.func @transform_6(%arg0: i32) -> (i32, i32) {
    %c0_i32 = arith.constant 0 : i32
    %c0_i32_0 = arith.constant 0 : i32
    %c0_i32_1 = arith.constant 0 : i32
    return %c0_i32, %c0_i32_0 : i32, i32
  }
  func.func @transform_7(%arg0: i32) -> (i32, i32) {
    %c0_i32 = arith.constant 0 : i32
    %c0_i32_0 = arith.constant 0 : i32
    %c0_i32_1 = arith.constant 0 : i32
    return %c0_i32, %c0_i32_0 : i32, i32
  }
  func.func @transform_8(%arg0: i32) -> (i32, i32) {
    %c0_i32 = arith.constant 0 : i32
    %c0_i32_0 = arith.constant 0 : i32
    %c0_i32_1 = arith.constant 0 : i32
    return %c0_i32, %c0_i32_0 : i32, i32
  }
  func.func @transform_9(%arg0: i32) -> (i32, i32) {
    %c0_i32 = arith.constant 0 : i32
    %c0_i32_0 = arith.constant 0 : i32
    %c0_i32_1 = arith.constant 0 : i32
    return %c0_i32, %c0_i32_0 : i32, i32
  }
  func.func @transform_10(%arg0: i32) -> (i32, i32) {
    %c0_i32 = arith.constant 0 : i32
    %c0_i32_0 = arith.constant 0 : i32
    %c0_i32_1 = arith.constant 0 : i32
    return %c0_i32, %c0_i32_0 : i32, i32
  }
  func.func @transform_11(%arg0: i32) -> (i32, i32) {
    %c0_i32 = arith.constant 0 : i32
    %c0_i32_0 = arith.constant 0 : i32
    %c0_i32_1 = arith.constant 0 : i32
    return %c0_i32, %c0_i32_0 : i32, i32
  }
  func.func @transform_12(%arg0: i32) -> (i32, i32) {
    %c0_i32 = arith.constant 0 : i32
    %c0_i32_0 = arith.constant 0 : i32
    %c0_i32_1 = arith.constant 0 : i32
    return %c0_i32, %c0_i32_0 : i32, i32
  }
  func.func @transform_13(%arg0: i32) -> (i32, i32) {
    %c0_i32 = arith.constant 0 : i32
    %c0_i32_0 = arith.constant 0 : i32
    %c0_i32_1 = arith.constant 0 : i32
    return %c0_i32, %c0_i32_0 : i32, i32
  }
}

</mosaic_0001>

<llo_original>
// kernel: abstract_pu_forward.1
$region0: #{abstract_pu_forward.1}
  #allocation0 [shape = 'u32[]', space=smem, size = 0x4, offset = 0x4, fixed_abs, tag = 'smem constant byte address 0x4 - core index']
  #allocation1 [shape = 'u32[72,128]{1,0:T(1,128)}', space=vmem, size = 0x9000, scoped, tag = 'internal scratch']
  #allocation2 [shape = 'f32[16,512]{1,0:T(8,128)}', space=vmem, size = 0x8000, scoped, tag = 'scratch operand']
  #allocation3 [shape = 'f32[16,128]{1,0:T(8,128)}', space=vmem, size = 0x2000, scoped, tag = 'scratch operand']
  %s0 = inlined_call_operand.vmem [shape: f32[16,32], index: 0, kind: input, shape index: {}]
  %s1 = inlined_call_operand.hbm [shape: bf16[32,512], index: 1, kind: input, shape index: {}]
  %s2 = inlined_call_operand.hbm [shape: bf16[128,512], index: 2, kind: input, shape index: {}]
  %s3 = inlined_call_operand.vmem [shape: f32[1,512], index: 3, kind: input, shape index: {}]
  %s4 = inlined_call_operand.vmem [shape: f32[1,512], index: 4, kind: input, shape index: {}]
  %s5 = inlined_call_operand.hbm [shape: bf16[128,256], index: 5, kind: input, shape index: {}]
  %s6 = inlined_call_operand.vmem [shape: f32[1,256], index: 6, kind: input, shape index: {}]
  %s7 = inlined_call_operand.hbm [shape: bf16[256,256], index: 7, kind: input, shape index: {}]
  %s8 = inlined_call_operand.vmem [shape: f32[1,256], index: 8, kind: input, shape index: {}]
  %s9 = inlined_call_operand.hbm [shape: bf16[256,256], index: 9, kind: input, shape index: {}]
  %s10 = inlined_call_operand.vmem [shape: f32[1,256], index: 10, kind: input, shape index: {}]
  %s11 = inlined_call_operand.hbm [shape: bf16[256,128], index: 11, kind: input, shape index: {}]
  %s12 = inlined_call_operand.vmem [shape: f32[1,128], index: 12, kind: input, shape index: {}]
  %s13 = inlined_call_operand.vmem [shape: f32[16,128], index: 13, kind: output, shape index: {}]
  %s14 = sld [smem:[#allocation0]]
  $region86: #{abstract_pu_forward.1} parent=0
    _
  %s16 = ssub.s32 1, %s14
  %s17 = scalar_select 0, %s16, %s14
  $region1: #{abstract_pu_forward.1} parent=0
    #allocation4 [shape = 'u8[32768]{0}', space=vmem, size = 0x8000, scoped, tag = 'input window, operand 1, single buffered']
    #allocation5 [shape = 's32[1]{0}', space=sflag, size = 0x4, scoped, tag = 'scoped memory for abstract_pu_forward.1']
    #allocation6 [shape = 'u8[131072]{0}', space=vmem, size = 0x20000, scoped, tag = 'input window, operand 2, single buffered']
    #allocation7 [shape = 's32[1]{0}', space=sflag, size = 0x4, scoped, tag = 'scoped memory for abstract_pu_forward.1']
    #allocation8 [shape = 'u8[65536]{0}', space=vmem, size = 0x10000, scoped, tag = 'input window, operand 5, single buffered']
    #allocation9 [shape = 'u8[131072]{0}', space=vmem, size = 0x20000, scoped, tag = 'input window, operand 7, single buffered']
    #allocation10 [shape = 's32[1]{0}', space=sflag, size = 0x4, scoped, tag = 'scoped memory for abstract_pu_forward.1']
    #allocation11 [shape = 'u8[131072]{0}', space=vmem, size = 0x20000, scoped, tag = 'input window, operand 9, single buffered']
    #allocation12 [shape = 'u8[65536]{0}', space=vmem, size = 0x10000, scoped, tag = 'input window, operand 11, single buffered']
    #allocation13 [shape = 's32[1]{0}', space=sflag, size = 0x4, scoped, tag = 'scoped memory for abstract_pu_forward.1']
    %18 = vsyncpa [#allocation5], 0
    %19 = vsyncpa [#allocation7], 0
    %20 = vsyncpa [#allocation10], 0
    %21 = vsyncpa [#allocation13], 0
    // Predicated region
    $region2: #{abstract_pu_forward.1} parent=1 // pred_check
      _
    $region3: #{abstract_pu_forward.1} parent=1 // pred_check_branch
      %23 = sbr.rel (0) target = $region5
    $region4: #{abstract_pu_forward.1} parent=1 // pred_region
      _
    $region5: #{abstract_pu_forward.1} parent=1 // pred_fallthru
      _
    // Predicated region
    $region6: #{abstract_pu_forward.1} parent=1 // pred_check
      _
    $region7: #{abstract_pu_forward.1} parent=1 // pred_check_branch
      %25 = sbr.rel (0) target = $region9
    $region8: #{abstract_pu_forward.1} parent=1 // pred_region
      %27 = vsyncadd [#allocation5], 0
      %s28 = sshll.u32 %s1, 4
      %s29 = int_to_ptr.hbm [resolvable:$true] %s28
      %s30 = sshll.u32 [#allocation4], 4
      %s31 = int_to_ptr.vmem [resolvable:$true] %s30
      %36 = dma.hbm_to_vmem [thread:$0]  %s29, 1024, %s31, [#allocation5], 256, 256, 16
    $region9: #{abstract_pu_forward.1} parent=1 // pred_fallthru
      _
    // Predicated region
    $region10: #{abstract_pu_forward.1} parent=1 // pred_check
      _
    $region11: #{abstract_pu_forward.1} parent=1 // pred_check_branch
      %38 = sbr.rel (0) target = $region13
    $region12: #{abstract_pu_forward.1} parent=1 // pred_region
      %40 = vsyncadd [#allocation7], 0
      %s41 = sshll.u32 %s2, 4
      %s42 = int_to_ptr.hbm [resolvable:$true] %s41
      %s43 = sshll.u32 [#allocation6], 4
      %s44 = int_to_ptr.vmem [resolvable:$true] %s43
      %49 = dma.hbm_to_vmem [thread:$0]  %s42, 4096, %s44, [#allocation7], 256, 256, 16
    $region13: #{abstract_pu_forward.1} parent=1 // pred_fallthru
      _
    // Predicated region
    $region14: #{abstract_pu_forward.1} parent=1 // pred_check
      _
    $region15: #{abstract_pu_forward.1} parent=1 // pred_check_branch
      %51 = sbr.rel (0) target = $region17
    $region16: #{abstract_pu_forward.1} parent=1 // pred_region
      _
    $region17: #{abstract_pu_forward.1} parent=1 // pred_fallthru
      _
    // Predicated region
    $region18: #{abstract_pu_forward.1} parent=1 // pred_check
      _
    $region19: #{abstract_pu_forward.1} parent=1 // pred_check_branch
      %53 = sbr.rel (0) target = $region21
    $region20: #{abstract_pu_forward.1} parent=1 // pred_region
      _
    $region21: #{abstract_pu_forward.1} parent=1 // pred_fallthru
      _
    // Predicated region
    $region22: #{abstract_pu_forward.1} parent=1 // pred_check
      _
    $region23: #{abstract_pu_forward.1} parent=1 // pred_check_branch
      %55 = sbr.rel (0) target = $region25
    $region24: #{abstract_pu_forward.1} parent=1 // pred_region
      %57 = vsyncadd [#allocation7], 0
      %s58 = sshll.u32 %s5, 4
      %s59 = int_to_ptr.hbm [resolvable:$true] %s58
      %s60 = sshll.u32 [#allocation8], 4
      %s61 = int_to_ptr.vmem [resolvable:$true] %s60
      %66 = dma.hbm_to_vmem [thread:$0]  %s59, 2048, %s61, [#allocation7], 128, 128, 8
    $region25: #{abstract_pu_forward.1} parent=1 // pred_fallthru
      _
    // Predicated region
    $region26: #{abstract_pu_forward.1} parent=1 // pred_check
      _
    $region27: #{abstract_pu_forward.1} parent=1 // pred_check_branch
      %68 = sbr.rel (0) target = $region29
    $region28: #{abstract_pu_forward.1} parent=1 // pred_region
      _
    $region29: #{abstract_pu_forward.1} parent=1 // pred_fallthru
      _
    // Predicated region
    $region30: #{abstract_pu_forward.1} parent=1 // pred_check
      _
    $region31: #{abstract_pu_forward.1} parent=1 // pred_check_branch
      %70 = sbr.rel (0) target = $region33
    $region32: #{abstract_pu_forward.1} parent=1 // pred_region
      %72 = vsyncadd [#allocation10], 0
      %s73 = sshll.u32 %s7, 4
      %s74 = int_to_ptr.hbm [resolvable:$true] %s73
      %s75 = sshll.u32 [#allocation9], 4
      %s76 = int_to_ptr.vmem [resolvable:$true] %s75
      %81 = dma.hbm_to_vmem [thread:$0]  %s74, 4096, %s76, [#allocation10], 128, 128, 8
    $region33: #{abstract_pu_forward.1} parent=1 // pred_fallthru
      _
    // Predicated region
    $region34: #{abstract_pu_forward.1} parent=1 // pred_check
      _
    $region35: #{abstract_pu_forward.1} parent=1 // pred_check_branch
      %83 = sbr.rel (0) target = $region37
    $region36: #{abstract_pu_forward.1} parent=1 // pred_region
      _
    $region37: #{abstract_pu_forward.1} parent=1 // pred_fallthru
      _
    // Predicated region
    $region38: #{abstract_pu_forward.1} parent=1 // pred_check
      _
    $region39: #{abstract_pu_forward.1} parent=1 // pred_check_branch
      %85 = sbr.rel (0) target = $region41
    $region40: #{abstract_pu_forward.1} parent=1 // pred_region
      %87 = vsyncadd [#allocation10], 0
      %s88 = sshll.u32 %s9, 4
      %s89 = int_to_ptr.hbm [resolvable:$true] %s88
      %s90 = sshll.u32 [#allocation11], 4
      %s91 = int_to_ptr.vmem [resolvable:$true] %s90
      %96 = dma.hbm_to_vmem [thread:$0]  %s89, 4096, %s91, [#allocation10], 128, 128, 8
    $region41: #{abstract_pu_forward.1} parent=1 // pred_fallthru
      _
    // Predicated region
    $region42: #{abstract_pu_forward.1} parent=1 // pred_check
      _
    $region43: #{abstract_pu_forward.1} parent=1 // pred_check_branch
      %98 = sbr.rel (0) target = $region45
    $region44: #{abstract_pu_forward.1} parent=1 // pred_region
      _
    $region45: #{abstract_pu_forward.1} parent=1 // pred_fallthru
      _
    // Predicated region
    $region46: #{abstract_pu_forward.1} parent=1 // pred_check
      _
    $region47: #{abstract_pu_forward.1} parent=1 // pred_check_branch
      %100 = sbr.rel (0) target = $region49
    $region48: #{abstract_pu_forward.1} parent=1 // pred_region
      %102 = vsyncadd [#allocation13], 0
      %s103 = sshll.u32 %s11, 4
      %s104 = int_to_ptr.hbm [resolvable:$true] %s103
      %s105 = sshll.u32 [#allocation12], 4
      %s106 = int_to_ptr.vmem [resolvable:$true] %s105
      %111 = dma.hbm_to_vmem [thread:$0]  %s104, 2048, %s106, [#allocation13], 64, 64, 4
    $region49: #{abstract_pu_forward.1} parent=1 // pred_fallthru
      _
    // Predicated region
    $region50: #{abstract_pu_forward.1} parent=1 // pred_check
      _
    $region51: #{abstract_pu_forward.1} parent=1 // pred_check_branch
      %113 = sbr.rel (0) target = $region53
    $region52: #{abstract_pu_forward.1} parent=1 // pred_region
      _
    $region53: #{abstract_pu_forward.1} parent=1 // pred_fallthru
      _
    // Predicated region
    $region54: #{abstract_pu_forward.1} parent=1 // pred_check
      _
    $region55: #{abstract_pu_forward.1} parent=1 // pred_check_branch
      %115 = sbr.rel (0) target = $region57
    $region56: #{abstract_pu_forward.1} parent=1 // pred_region
      %117 = dma.done [#allocation5], 1024
    $region57: #{abstract_pu_forward.1} parent=1 // pred_fallthru
      _
    // Predicated region
    $region58: #{abstract_pu_forward.1} parent=1 // pred_check
      _
    $region59: #{abstract_pu_forward.1} parent=1 // pred_check_branch
      %119 = sbr.rel (0) target = $region61
    $region60: #{abstract_pu_forward.1} parent=1 // pred_region
      %121 = dma.done [#allocation7], 4096
    $region61: #{abstract_pu_forward.1} parent=1 // pred_fallthru
      _
    // Predicated region
    $region62: #{abstract_pu_forward.1} parent=1 // pred_check
      _
    $region63: #{abstract_pu_forward.1} parent=1 // pred_check_branch
      %123 = sbr.rel (0) target = $region65
    $region64: #{abstract_pu_forward.1} parent=1 // pred_region
      %125 = dma.done [#allocation7], 2048
    $region65: #{abstract_pu_forward.1} parent=1 // pred_fallthru
      _
    // Predicated region
    $region66: #{abstract_pu_forward.1} parent=1 // pred_check
      _
    $region67: #{abstract_pu_forward.1} parent=1 // pred_check_branch
      %127 = sbr.rel (0) target = $region69
    $region68: #{abstract_pu_forward.1} parent=1 // pred_region
      %129 = dma.done [#allocation10], 4096
    $region69: #{abstract_pu_forward.1} parent=1 // pred_fallthru
      _
    // Predicated region
    $region70: #{abstract_pu_forward.1} parent=1 // pred_check
      _
    $region71: #{abstract_pu_forward.1} parent=1 // pred_check_branch
      %131 = sbr.rel (0) target = $region73
    $region72: #{abstract_pu_forward.1} parent=1 // pred_region
      %133 = dma.done [#allocation10], 4096
    $region73: #{abstract_pu_forward.1} parent=1 // pred_fallthru
      _
    // Predicated region
    $region74: #{abstract_pu_forward.1} parent=1 // pred_check
      _
    $region75: #{abstract_pu_forward.1} parent=1 // pred_check_branch
      %135 = sbr.rel (0) target = $region77
    $region76: #{abstract_pu_forward.1} parent=1 // pred_region
      %137 = dma.done [#allocation13], 2048
    $region77: #{abstract_pu_forward.1} parent=1 // pred_fallthru
      _
    %v139 = vld [vmem:[%s0] sm:$0xff]
    %v140 = vld [vmem:[%s0 + $0x8] sm:$0xff]
    %v141 = vpack.c.bf16 %v140, %v139
    %v142 = vld [vmem:[#allocation4] sm:$0xff]
    %v143 = vld [vmem:[#allocation4 + $0x8] sm:$0xff]
    %v144 = vld [vmem:[#allocation4 + $0x10] sm:$0xff]
    %v145 = vld [vmem:[#allocation4 + $0x18] sm:$0xff]
    %v146 = vld [vmem:[#allocation4 + $0x20] sm:$0xff]
    %v147 = vld [vmem:[#allocation4 + $0x28] sm:$0xff]
    %v148 = vld [vmem:[#allocation4 + $0x30] sm:$0xff]
    %v149 = vld [vmem:[#allocation4 + $0x38] sm:$0xff]
    %v150 = vld [vmem:[%s3] sm:$0xf]
    %v152 = vperm.slane %v150, 0
    %v153 = vperm.slane %v150, 1
    %v154 = vperm.slane %v150, 2
    %v155 = vperm.slane %v150, 3
    %v168 = vunpack.c.l.b16 %v142
    %v169 = vunpack.c.h.b16 %v142
    %v170 = vunpack.c.l.b16 %v143
    %v171 = vunpack.c.h.b16 %v143
    %v172 = vunpack.c.l.b16 %v144
    %v173 = vunpack.c.h.b16 %v144
    %v174 = vunpack.c.l.b16 %v145
    %v175 = vunpack.c.h.b16 %v145
    %v176 = vunpack.c.l.b16 %v146
    %v177 = vunpack.c.h.b16 %v146
    %v178 = vunpack.c.l.b16 %v147
    %v179 = vunpack.c.h.b16 %v147
    %v180 = vunpack.c.l.b16 %v148
    %v181 = vunpack.c.h.b16 %v148
    %v182 = vunpack.c.l.b16 %v149
    %v183 = vunpack.c.h.b16 %v149
    %v184 = vpack.c.b16 %v172, %v168
    %v185 = vpack.c.b16 %v173, %v169
    %v186 = vpack.c.b16 %v174, %v170
    %v187 = vpack.c.b16 %v175, %v171
    %v188 = vpack.c.b16 %v180, %v176
    %v189 = vpack.c.b16 %v181, %v177
    %v190 = vpack.c.b16 %v182, %v178
    %v191 = vpack.c.b16 %v183, %v179
    %vm200 = vcmask 261120
    %v202 = vsel %vm200, %v141, 0
    %204 = vmatpush.bf16.msra.mxu0 0
    %205 = vmatpush.bf16.msra.mxu0 0
    %206 = vmatpush.bf16.msra.mxu0 0
    %207 = vmatpush.bf16.msra.mxu0 0
    %208 = vmatpush.bf16.msra.mxu0 0
    %209 = vmatpush.bf16.msra.mxu0 0
    %210 = vmatpush.bf16.msra.mxu0 %v188
    %211 = vmatpush.bf16.msra.mxu0 %v184
    %212 = vmatmul.bf16.gmra.mxu0 %v202
    %v213 = vpop.f32.mrf.mxu0
    %v214 = vadd.f32 %v152, %v213
    %v215 = vpop.f32.mrf.mxu0
    %v216 = vadd.f32 %v152, %v215
    %217 = vdwg.mxu0
    %218 = vmatpush.bf16.msra.mxu0 0
    %219 = vmatpush.bf16.msra.mxu0 0
    %220 = vmatpush.bf16.msra.mxu0 0
    %221 = vmatpush.bf16.msra.mxu0 0
    %222 = vmatpush.bf16.msra.mxu0 0
    %223 = vmatpush.bf16.msra.mxu0 0
    %224 = vmatpush.bf16.msra.mxu0 %v189
    %225 = vmatpush.bf16.msra.mxu0 %v185
    %226 = vmatmul.bf16.gmra.mxu0 %v202
    %v227 = vpop.f32.mrf.mxu0
    %v228 = vadd.f32 %v153, %v227
    %v229 = vpop.f32.mrf.mxu0
    %v230 = vadd.f32 %v153, %v229
    %231 = vdwg.mxu0
    %232 = vmatpush.bf16.msra.mxu0 0
    %233 = vmatpush.bf16.msra.mxu0 0
    %234 = vmatpush.bf16.msra.mxu0 0
    %235 = vmatpush.bf16.msra.mxu0 0
    %236 = vmatpush.bf16.msra.mxu0 0
    %237 = vmatpush.bf16.msra.mxu0 0
    %238 = vmatpush.bf16.msra.mxu0 %v190
    %239 = vmatpush.bf16.msra.mxu0 %v186
    %240 = vmatmul.bf16.gmra.mxu0 %v202
    %v241 = vpop.f32.mrf.mxu0
    %v242 = vadd.f32 %v154, %v241
    %v243 = vpop.f32.mrf.mxu0
    %v244 = vadd.f32 %v154, %v243
    %245 = vdwg.mxu0
    %246 = vmatpush.bf16.msra.mxu0 0
    %247 = vmatpush.bf16.msra.mxu0 0
    %248 = vmatpush.bf16.msra.mxu0 0
    %249 = vmatpush.bf16.msra.mxu0 0
    %250 = vmatpush.bf16.msra.mxu0 0
    %251 = vmatpush.bf16.msra.mxu0 0
    %252 = vmatpush.bf16.msra.mxu0 %v191
    %253 = vmatpush.bf16.msra.mxu0 %v187
    %254 = vmatmul.bf16.gmra.mxu0 %v202
    %v255 = vpop.f32.mrf.mxu0
    %v256 = vadd.f32 %v155, %v255
    %v257 = vpop.f32.mrf.mxu0
    %v258 = vadd.f32 %v155, %v257
    %259 = vdwg.mxu0
    %260 = vst [vmem:[#allocation2] sm:$0xff] %v214
    %261 = vst [vmem:[#allocation2 + $0x8] sm:$0xff] %v228
    %262 = vst [vmem:[#allocation2 + $0x10] sm:$0xff] %v242
    %263 = vst [vmem:[#allocation2 + $0x18] sm:$0xff] %v256
    %264 = vst [vmem:[#allocation2 + $0x20] sm:$0xff] %v216
    %265 = vst [vmem:[#allocation2 + $0x28] sm:$0xff] %v230
    %266 = vst [vmem:[#allocation2 + $0x30] sm:$0xff] %v244
    %267 = vst [vmem:[#allocation2 + $0x38] sm:$0xff] %v258
    %v268 = vld [vmem:[#allocation6] sm:$0xff]
    %v269 = vld [vmem:[#allocation6 + $0x8] sm:$0xff]
    %v270 = vld [vmem:[#allocation6 + $0x10] sm:$0xff]
    %v271 = vld [vmem:[#allocation6 + $0x18] sm:$0xff]
    %v272 = vld [vmem:[#allocation6 + $0x20] sm:$0xff]
    %v273 = vld [vmem:[#allocation6 + $0x28] sm:$0xff]
    %v274 = vld [vmem:[#allocation6 + $0x30] sm:$0xff]
    %v275 = vld [vmem:[#allocation6 + $0x38] sm:$0xff]
    %v276 = vld [vmem:[#allocation6 + $0x40] sm:$0xff]
    %v277 = vld [vmem:[#allocation6 + $0x48] sm:$0xff]
    %v278 = vld [vmem:[#allocation6 + $0x50] sm:$0xff]
    %v279 = vld [vmem:[#allocation6 + $0x58] sm:$0xff]
    %v280 = vld [vmem:[#allocation6 + $0x60] sm:$0xff]
    %v281 = vld [vmem:[#allocation6 + $0x68] sm:$0xff]
    %v282 = vld [vmem:[#allocation6 + $0x70] sm:$0xff]
    %v283 = vld [vmem:[#allocation6 + $0x78] sm:$0xff]
    %v284 = vld [vmem:[#allocation6 + $0x80] sm:$0xff]
    %v285 = vld [vmem:[#allocation6 + $0x88] sm:$0xff]
    %v286 = vld [vmem:[#allocation6 + $0x90] sm:$0xff]
    %v287 = vld [vmem:[#allocation6 + $0x98] sm:$0xff]
    %v288 = vld [vmem:[#allocation6 + $0xa0] sm:$0xff]
    %v289 = vld [vmem:[#allocation6 + $0xa8] sm:$0xff]
    %v290 = vld [vmem:[#allocation6 + $0xb0] sm:$0xff]
    %v291 = vld [vmem:[#allocation6 + $0xb8] sm:$0xff]
    %v292 = vld [vmem:[#allocation6 + $0xc0] sm:$0xff]
    %v293 = vld [vmem:[#allocation6 + $0xc8] sm:$0xff]
    %v294 = vld [vmem:[#allocation6 + $0xd0] sm:$0xff]
    %v295 = vld [vmem:[#allocation6 + $0xd8] sm:$0xff]
    %v296 = vld [vmem:[#allocation6 + $0xe0] sm:$0xff]
    %v297 = vld [vmem:[#allocation6 + $0xe8] sm:$0xff]
    %v298 = vld [vmem:[#allocation6 + $0xf0] sm:$0xff]
    %v299 = vld [vmem:[#allocation6 + $0xf8] sm:$0xff]
    %v300 = vld [vmem:[%s4] sm:$0xf]
    %vm301 = vcmp.ne.f32.partialorder %v300, 0.0
    %v302 = vld [vmem:[#allocation2] sm:$0x3]
    %v303 = vld [vmem:[#allocation2 + $0x8] sm:$0x3]
    %v304 = vld [vmem:[#allocation2 + $0x10] sm:$0x3]
    %v305 = vld [vmem:[#allocation2 + $0x18] sm:$0x3]
    %v306 = vld [vmem:[#allocation2 + $0x20] sm:$0xc0]
    %v307 = vld [vmem:[#allocation2 + $0x28] sm:$0xc0]
    %v308 = vld [vmem:[#allocation2 + $0x30] sm:$0xc0]
    %v309 = vld [vmem:[#allocation2 + $0x38] sm:$0xc0]
    %v310 = vsel %vm301, 1, 0
    %v311 = vperm.slane %v310, 0
    %v312 = vperm.slane %v310, 1
    %v313 = vperm.slane %v310, 2
    %v314 = vperm.slane %v310, 3
    %vm315 = vcmp.eq.s32.totalorder %v311, 1
    %vm316 = vcmp.eq.s32.totalorder %v312, 1
    %vm317 = vcmp.eq.s32.totalorder %v313, 1
    %vm318 = vcmp.eq.s32.totalorder %v314, 1
    %v323 = vrot.slane %v306, 6
    %v324 = vrot.slane %v307, 6
    %v325 = vrot.slane %v308, 6
    %v326 = vrot.slane %v309, 6
    %v331 = vsel %vm315, %v302, %v323
    %v332 = vsel %vm316, %v303, %v324
    %v333 = vsel %vm317, %v304, %v325
    %v334 = vsel %vm318, %v305, %v326
    %v367 = vunpack.c.l.b16 %v268
    %v368 = vunpack.c.h.b16 %v268
    %v369 = vunpack.c.l.b16 %v269
    %v370 = vunpack.c.h.b16 %v269
    %v371 = vunpack.c.l.b16 %v270
    %v372 = vunpack.c.h.b16 %v270
    %v373 = vunpack.c.l.b16 %v271
    %v374 = vunpack.c.h.b16 %v271
    %v375 = vunpack.c.l.b16 %v272
    %v376 = vunpack.c.h.b16 %v272
    %v377 = vunpack.c.l.b16 %v273
    %v378 = vunpack.c.h.b16 %v273
    %v379 = vunpack.c.l.b16 %v274
    %v380 = vunpack.c.h.b16 %v274
    %v381 = vunpack.c.l.b16 %v275
    %v382 = vunpack.c.h.b16 %v275
    %v383 = vunpack.c.l.b16 %v276
    %v384 = vunpack.c.h.b16 %v276
    %v385 = vunpack.c.l.b16 %v277
    %v386 = vunpack.c.h.b16 %v277
    %v387 = vunpack.c.l.b16 %v278
    %v388 = vunpack.c.h.b16 %v278
    %v389 = vunpack.c.l.b16 %v279
    %v390 = vunpack.c.h.b16 %v279
    %v391 = vunpack.c.l.b16 %v280
    %v392 = vunpack.c.h.b16 %v280
    %v393 = vunpack.c.l.b16 %v281
    %v394 = vunpack.c.h.b16 %v281
    %v395 = vunpack.c.l.b16 %v282
    %v396 = vunpack.c.h.b16 %v282
    %v397 = vunpack.c.l.b16 %v283
    %v398 = vunpack.c.h.b16 %v283
    %v399 = vunpack.c.l.b16 %v284
    %v400 = vunpack.c.h.b16 %v284
    %v401 = vunpack.c.l.b16 %v285
    %v402 = vunpack.c.h.b16 %v285
    %v403 = vunpack.c.l.b16 %v286
    %v404 = vunpack.c.h.b16 %v286
    %v405 = vunpack.c.l.b16 %v287
    %v406 = vunpack.c.h.b16 %v287
    %v407 = vunpack.c.l.b16 %v288
    %v408 = vunpack.c.h.b16 %v288
    %v409 = vunpack.c.l.b16 %v289
    %v410 = vunpack.c.h.b16 %v289
    %v411 = vunpack.c.l.b16 %v290
    %v412 = vunpack.c.h.b16 %v290
    %v413 = vunpack.c.l.b16 %v291
    %v414 = vunpack.c.h.b16 %v291
    %v415 = vunpack.c.l.b16 %v292
    %v416 = vunpack.c.h.b16 %v292
    %v417 = vunpack.c.l.b16 %v293
    %v418 = vunpack.c.h.b16 %v293
    %v419 = vunpack.c.l.b16 %v294
    %v420 = vunpack.c.h.b16 %v294
    %v421 = vunpack.c.l.b16 %v295
    %v422 = vunpack.c.h.b16 %v295
    %v423 = vunpack.c.l.b16 %v296
    %v424 = vunpack.c.h.b16 %v296
    %v425 = vunpack.c.l.b16 %v297
    %v426 = vunpack.c.h.b16 %v297
    %v427 = vunpack.c.l.b16 %v298
    %v428 = vunpack.c.h.b16 %v298
    %v429 = vunpack.c.l.b16 %v299
    %v430 = vunpack.c.h.b16 %v299
    %v431 = vpack.c.b16 %v371, %v367
    %v432 = vpack.c.b16 %v372, %v368
    %v433 = vpack.c.b16 %v373, %v369
    %v434 = vpack.c.b16 %v374, %v370
    %v435 = vpack.c.b16 %v379, %v375
    %v436 = vpack.c.b16 %v380, %v376
    %v437 = vpack.c.b16 %v381, %v377
    %v438 = vpack.c.b16 %v382, %v378
    %v439 = vpack.c.b16 %v387, %v383
    %v440 = vpack.c.b16 %v388, %v384
    %v441 = vpack.c.b16 %v389, %v385
    %v442 = vpack.c.b16 %v390, %v386
    %v443 = vpack.c.b16 %v395, %v391
    %v444 = vpack.c.b16 %v396, %v392
    %v445 = vpack.c.b16 %v397, %v393
    %v446 = vpack.c.b16 %v398, %v394
    %v447 = vpack.c.b16 %v403, %v399
    %v448 = vpack.c.b16 %v404, %v400
    %v449 = vpack.c.b16 %v405, %v401
    %v450 = vpack.c.b16 %v406, %v402
    %v451 = vpack.c.b16 %v411, %v407
    %v452 = vpack.c.b16 %v412, %v408
    %v453 = vpack.c.b16 %v413, %v409
    %v454 = vpack.c.b16 %v414, %v410
    %v455 = vpack.c.b16 %v419, %v415
    %v456 = vpack.c.b16 %v420, %v416
    %v457 = vpack.c.b16 %v421, %v417
    %v458 = vpack.c.b16 %v422, %v418
    %v459 = vpack.c.b16 %v427, %v423
    %v460 = vpack.c.b16 %v428, %v424
    %v461 = vpack.c.b16 %v429, %v425
    %v462 = vpack.c.b16 %v430, %v426
    %495 = vmatpush.bf16.msra.mxu0 %v459
    %496 = vmatpush.bf16.msra.mxu0 %v455
    %497 = vmatpush.bf16.msra.mxu0 %v451
    %498 = vmatpush.bf16.msra.mxu0 %v447
    %499 = vmatpush.bf16.msra.mxu0 %v443
    %500 = vmatpush.bf16.msra.mxu0 %v439
    %501 = vmatpush.bf16.msra.mxu0 %v435
    %502 = vmatpush.bf16.msra.mxu0 %v431
    %503 = vmatmul.bf16.gmra.mxu0 0
    %v504 = vpop.f32.mrf.mxu0
    %v505 = vadd.f32 %v331, %v504
    %v506 = vpop.f32.mrf.mxu0
    %507 = vdwg.mxu0
    %508 = vmatpush.bf16.msra.mxu0 %v460
    %509 = vmatpush.bf16.msra.mxu0 %v456
    %510 = vmatpush.bf16.msra.mxu0 %v452
    %511 = vmatpush.bf16.msra.mxu0 %v448
    %512 = vmatpush.bf16.msra.mxu0 %v444
    %513 = vmatpush.bf16.msra.mxu0 %v440
    %514 = vmatpush.bf16.msra.mxu0 %v436
    %515 = vmatpush.bf16.msra.mxu0 %v432
    %516 = vmatmul.bf16.gmra.mxu0 0
    %v517 = vpop.f32.mrf.mxu0
    %v518 = vadd.f32 %v332, %v517
    %v519 = vpop.f32.mrf.mxu0
    %520 = vdwg.mxu0
    %521 = vmatpush.bf16.msra.mxu0 %v461
    %522 = vmatpush.bf16.msra.mxu0 %v457
    %523 = vmatpush.bf16.msra.mxu0 %v453
    %524 = vmatpush.bf16.msra.mxu0 %v449
    %525 = vmatpush.bf16.msra.mxu0 %v445
    %526 = vmatpush.bf16.msra.mxu0 %v441
    %527 = vmatpush.bf16.msra.mxu0 %v437
    %528 = vmatpush.bf16.msra.mxu0 %v433
    %529 = vmatmul.bf16.gmra.mxu0 0
    %v530 = vpop.f32.mrf.mxu0
    %v531 = vadd.f32 %v333, %v530
    %v532 = vpop.f32.mrf.mxu0
    %533 = vdwg.mxu0
    %534 = vmatpush.bf16.msra.mxu0 %v462
    %535 = vmatpush.bf16.msra.mxu0 %v458
    %536 = vmatpush.bf16.msra.mxu0 %v454
    %537 = vmatpush.bf16.msra.mxu0 %v450
    %538 = vmatpush.bf16.msra.mxu0 %v446
    %539 = vmatpush.bf16.msra.mxu0 %v442
    %540 = vmatpush.bf16.msra.mxu0 %v438
    %541 = vmatpush.bf16.msra.mxu0 %v434
    %542 = vmatmul.bf16.gmra.mxu0 0
    %v543 = vpop.f32.mrf.mxu0
    %v544 = vadd.f32 %v334, %v543
    %v545 = vpop.f32.mrf.mxu0
    %546 = vdwg.mxu0
    %v547 = vsub.f32 0.0, %v505
    %v548 = vsub.f32 0.0, %v518
    %v549 = vsub.f32 0.0, %v531
    %v550 = vmul.f32 %v547, 1.442695
    %v551 = vpow.pop %v550
    %v552 = vmul.f32 %v548, 1.442695
    %v553 = vpow.pop %v552
    %v554 = vmul.f32 %v549, 1.442695
    %v555 = vpow.pop %v554
    %v556 = vadd.f32 %v551, 1.0
    %v557 = vadd.f32 %v553, 1.0
    %v558 = vadd.f32 %v555, 1.0
    %v559 = vrcp.pop %v556
    %v560 = vmul.f32 %v556, %v559
    %v561 = vsub.f32 1.0, %v560
    %v562 = vmul.f32 %v559, %v561
    %v563 = vadd.f32 %v559, %v562
    %vm564 = vweird.f32 %v556
    %vm565 = vweird.f32 %v559
    %vm566 = vmor %vm564, %vm565
    %v567 = vsel %vm566, %v559, %v563
    %v568 = vand.u32 2147483647, %v556
    %vm569 = vcmp.eq.f32.partialorder %v568, 8.507059e+37
    %v570 = vand.u32 %v556, 2147483648
    %v571 = vor.u32 1.1754944e-38, %v570
    %v572 = vsel %vm569, %v571, %v567
    %v573 = vmul.f32 1.0, %v572
    %v574 = vrcp.pop %v557
    %v575 = vmul.f32 %v557, %v574
    %v576 = vsub.f32 1.0, %v575
    %v577 = vmul.f32 %v574, %v576
    %v578 = vadd.f32 %v574, %v577
    %vm579 = vweird.f32 %v557
    %vm580 = vweird.f32 %v574
    %vm581 = vmor %vm579, %vm580
    %v582 = vsel %vm581, %v574, %v578
    %v583 = vand.u32 2147483647, %v557
    %vm584 = vcmp.eq.f32.partialorder %v583, 8.507059e+37
    %v585 = vand.u32 %v557, 2147483648
    %v586 = vor.u32 1.1754944e-38, %v585
    %v587 = vsel %vm584, %v586, %v582
    %v588 = vmul.f32 1.0, %v587
    %v589 = vrcp.pop %v558
    %v590 = vmul.f32 %v558, %v589
    %v591 = vsub.f32 1.0, %v590
    %v592 = vmul.f32 %v589, %v591
    %v593 = vadd.f32 %v589, %v592
    %vm594 = vweird.f32 %v558
    %vm595 = vweird.f32 %v589
    %vm596 = vmor %vm594, %vm595
    %v597 = vsel %vm596, %v589, %v593
    %v598 = vand.u32 2147483647, %v558
    %vm599 = vcmp.eq.f32.partialorder %v598, 8.507059e+37
    %v600 = vand.u32 %v558, 2147483648
    %v601 = vor.u32 1.1754944e-38, %v600
    %v602 = vsel %vm599, %v601, %v597
    %v603 = vmul.f32 1.0, %v602
    %v604 = vtanh.pop %v544
    %v605 = vmul.f32 %v588, 0.0
    %v606 = vmul.f32 %v573, %v604
    %v607 = vadd.f32 %v605, %v606
    %v608 = vtanh.pop %v607
    %v609 = vmul.f32 %v603, %v608
    %vm610 = vcmask 517120
    %611 = vst.msk [vmem:[#allocation3] sm:$0x3] %vm610, %v609
    %vm612 = vcmask 1041920
    %613 = vst.msk [vmem:[#allocation3 + $0xe] sm:$0x3] %vm612, %v609
    %v614 = vpack.c.bf16 %v609, %v609
    %v615 = vld [vmem:[#allocation2] sm:$0xc]
    %v616 = vld [vmem:[#allocation2 + $0x8] sm:$0xc]
    %v617 = vld [vmem:[#allocation2 + $0x10] sm:$0xc]
    %v618 = vld [vmem:[#allocation2 + $0x18] sm:$0xc]
    %v619 = vld [vmem:[#allocation2 + $0x20] sm:$0x30]
    %v620 = vld [vmem:[#allocation2 + $0x28] sm:$0x30]
    %v621 = vld [vmem:[#allocation2 + $0x30] sm:$0x30]
    %v622 = vld [vmem:[#allocation2 + $0x38] sm:$0x30]
    %v627 = vrot.slane %v619, 2
    %v628 = vrot.slane %v620, 2
    %v629 = vrot.slane %v621, 2
    %v630 = vrot.slane %v622, 2
    %v635 = vsel %vm315, %v615, %v627
    %v636 = vsel %vm316, %v616, %v628
    %v637 = vsel %vm317, %v617, %v629
    %v638 = vsel %vm318, %v618, %v630
    %v643 = vrot.slane %v635, 2
    %v644 = vrot.slane %v636, 2
    %v645 = vrot.slane %v637, 2
    %v646 = vrot.slane %v638, 2
    %651 = vmatpush.bf16.msra.mxu0 %v459
    %652 = vmatpush.bf16.msra.mxu0 %v455
    %653 = vmatpush.bf16.msra.mxu0 %v451
    %654 = vmatpush.bf16.msra.mxu0 %v447
    %655 = vmatpush.bf16.msra.mxu0 %v443
    %656 = vmatpush.bf16.msra.mxu0 %v439
    %657 = vmatpush.bf16.msra.mxu0 %v435
    %658 = vmatpush.bf16.msra.mxu0 %v431
    %659 = vmatmul.bf16.gmra.mxu0 %v614
    %v660 = vpop.f32.mrf.mxu0
    %v661 = vadd.f32 %v643, %v660
    %v662 = vpop.f32.mrf.mxu0
    %663 = vdwg.mxu0
    %664 = vmatpush.bf16.msra.mxu0 %v460
    %665 = vmatpush.bf16.msra.mxu0 %v456
    %666 = vmatpush.bf16.msra.mxu0 %v452
    %667 = vmatpush.bf16.msra.mxu0 %v448
    %668 = vmatpush.bf16.msra.mxu0 %v444
    %669 = vmatpush.bf16.msra.mxu0 %v440
    %670 = vmatpush.bf16.msra.mxu0 %v436
    %671 = vmatpush.bf16.msra.mxu0 %v432
    %672 = vmatmul.bf16.gmra.mxu0 %v614
    %v673 = vpop.f32.mrf.mxu0
    %v674 = vadd.f32 %v644, %v673
    %v675 = vpop.f32.mrf.mxu0
    %676 = vdwg.mxu0
    %677 = vmatpush.bf16.msra.mxu0 %v461
    %678 = vmatpush.bf16.msra.mxu0 %v457
    %679 = vmatpush.bf16.msra.mxu0 %v453
    %680 = vmatpush.bf16.msra.mxu0 %v449
    %681 = vmatpush.bf16.msra.mxu0 %v445
    %682 = vmatpush.bf16.msra.mxu0 %v441
    %683 = vmatpush.bf16.msra.mxu0 %v437
    %684 = vmatpush.bf16.msra.mxu0 %v433
    %685 = vmatmul.bf16.gmra.mxu0 %v614
    %v686 = vpop.f32.mrf.mxu0
    %v687 = vadd.f32 %v645, %v686
    %v688 = vpop.f32.mrf.mxu0
    %689 = vdwg.mxu0
    %690 = vmatpush.bf16.msra.mxu0 %v462
    %691 = vmatpush.bf16.msra.mxu0 %v458
    %692 = vmatpush.bf16.msra.mxu0 %v454
    %693 = vmatpush.bf16.msra.mxu0 %v450
    %694 = vmatpush.bf16.msra.mxu0 %v446
    %695 = vmatpush.bf16.msra.mxu0 %v442
    %696 = vmatpush.bf16.msra.mxu0 %v438
    %697 = vmatpush.bf16.msra.mxu0 %v434
    %698 = vmatmul.bf16.gmra.mxu0 %v614
    %v699 = vpop.f32.mrf.mxu0
    %v700 = vadd.f32 %v646, %v699
    %v701 = vpop.f32.mrf.mxu0
    %702 = vdwg.mxu0
    %v703 = vsub.f32 0.0, %v661
    %v704 = vsub.f32 0.0, %v674
    %v705 = vsub.f32 0.0, %v687
    %v706 = vmul.f32 %v703, 1.442695
    %v707 = vpow.pop %v706
    %v708 = vmul.f32 %v704, 1.442695
    %v709 = vpow.pop %v708
    %v710 = vmul.f32 %v705, 1.442695
    %v711 = vpow.pop %v710
    %v712 = vadd.f32 %v707, 1.0
    %v713 = vadd.f32 %v709, 1.0
    %v714 = vadd.f32 %v711, 1.0
    %v715 = vrcp.pop %v712
    %v716 = vmul.f32 %v712, %v715
    %v717 = vsub.f32 1.0, %v716
    %v718 = vmul.f32 %v715, %v717
    %v719 = vadd.f32 %v715, %v718
    %vm720 = vweird.f32 %v712
    %vm721 = vweird.f32 %v715
    %vm722 = vmor %vm720, %vm721
    %v723 = vsel %vm722, %v715, %v719
    %v724 = vand.u32 2147483647, %v712
    %vm725 = vcmp.eq.f32.partialorder %v724, 8.507059e+37
    %v726 = vand.u32 %v712, 2147483648
    %v727 = vor.u32 1.1754944e-38, %v726
    %v728 = vsel %vm725, %v727, %v723
    %v729 = vmul.f32 1.0, %v728
    %v730 = vrcp.pop %v713
    %v731 = vmul.f32 %v713, %v730
    %v732 = vsub.f32 1.0, %v731
    %v733 = vmul.f32 %v730, %v732
    %v734 = vadd.f32 %v730, %v733
    %vm735 = vweird.f32 %v713
    %vm736 = vweird.f32 %v730
    %vm737 = vmor %vm735, %vm736
    %v738 = vsel %vm737, %v730, %v734
    %v739 = vand.u32 2147483647, %v713
    %vm740 = vcmp.eq.f32.partialorder %v739, 8.507059e+37
    %v741 = vand.u32 %v713, 2147483648
    %v742 = vor.u32 1.1754944e-38, %v741
    %v743 = vsel %vm740, %v742, %v738
    %v744 = vmul.f32 1.0, %v743
    %v745 = vrcp.pop %v714
    %v746 = vmul.f32 %v714, %v745
    %v747 = vsub.f32 1.0, %v746
    %v748 = vmul.f32 %v745, %v747
    %v749 = vadd.f32 %v745, %v748
    %vm750 = vweird.f32 %v714
    %vm751 = vweird.f32 %v745
    %vm752 = vmor %vm750, %vm751
    %v753 = vsel %vm752, %v745, %v749
    %v754 = vand.u32 2147483647, %v714
    %vm755 = vcmp.eq.f32.partialorder %v754, 8.507059e+37
    %v756 = vand.u32 %v714, 2147483648
    %v757 = vor.u32 1.1754944e-38, %v756
    %v758 = vsel %vm755, %v757, %v753
    %v759 = vmul.f32 1.0, %v758
    %v760 = vtanh.pop %v700
    %v761 = vmul.f32 %v744, %v607
    %v762 = vmul.f32 %v729, %v760
    %v763 = vadd.f32 %v761, %v762
    %v764 = vtanh.pop %v763
    %v765 = vmul.f32 %v759, %v764
    %766 = vst.msk [vmem:[#allocation3 + $0x2] sm:$0x3] %vm610, %v765
    %767 = vst.msk [vmem:[#allocation3 + $0xc] sm:$0x3] %vm612, %v765
    %v768 = vpack.c.bf16 %v765, %v765
    %v769 = vld [vmem:[#allocation2] sm:$0x30]
    %v770 = vld [vmem:[#allocation2 + $0x8] sm:$0x30]
    %v771 = vld [vmem:[#allocation2 + $0x10] sm:$0x30]
    %v772 = vld [vmem:[#allocation2 + $0x18] sm:$0x30]
    %v773 = vld [vmem:[#allocation2 + $0x20] sm:$0xc]
    %v774 = vld [vmem:[#allocation2 + $0x28] sm:$0xc]
    %v775 = vld [vmem:[#allocation2 + $0x30] sm:$0xc]
    %v776 = vld [vmem:[#allocation2 + $0x38] sm:$0xc]
    %v781 = vrot.slane %v773, 6
    %v782 = vrot.slane %v774, 6
    %v783 = vrot.slane %v775, 6
    %v784 = vrot.slane %v776, 6
    %v789 = vsel %vm315, %v769, %v781
    %v790 = vsel %vm316, %v770, %v782
    %v791 = vsel %vm317, %v771, %v783
    %v792 = vsel %vm318, %v772, %v784
    %v797 = vrot.slane %v789, 4
    %v798 = vrot.slane %v790, 4
    %v799 = vrot.slane %v791, 4
    %v800 = vrot.slane %v792, 4
    %805 = vmatpush.bf16.msra.mxu0 %v459
    %806 = vmatpush.bf16.msra.mxu0 %v455
    %807 = vmatpush.bf16.msra.mxu0 %v451
    %808 = vmatpush.bf16.msra.mxu0 %v447
    %809 = vmatpush.bf16.msra.mxu0 %v443
    %810 = vmatpush.bf16.msra.mxu0 %v439
    %811 = vmatpush.bf16.msra.mxu0 %v435
    %812 = vmatpush.bf16.msra.mxu0 %v431
    %813 = vmatmul.bf16.gmra.mxu0 %v768
    %v814 = vpop.f32.mrf.mxu0
    %v815 = vadd.f32 %v797, %v814
    %v816 = vpop.f32.mrf.mxu0
    %817 = vdwg.mxu0
    %818 = vmatpush.bf16.msra.mxu0 %v460
    %819 = vmatpush.bf16.msra.mxu0 %v456
    %820 = vmatpush.bf16.msra.mxu0 %v452
    %821 = vmatpush.bf16.msra.mxu0 %v448
    %822 = vmatpush.bf16.msra.mxu0 %v444
    %823 = vmatpush.bf16.msra.mxu0 %v440
    %824 = vmatpush.bf16.msra.mxu0 %v436
    %825 = vmatpush.bf16.msra.mxu0 %v432
    %826 = vmatmul.bf16.gmra.mxu0 %v768
    %v827 = vpop.f32.mrf.mxu0
    %v828 = vadd.f32 %v798, %v827
    %v829 = vpop.f32.mrf.mxu0
    %830 = vdwg.mxu0
    %831 = vmatpush.bf16.msra.mxu0 %v461
    %832 = vmatpush.bf16.msra.mxu0 %v457
    %833 = vmatpush.bf16.msra.mxu0 %v453
    %834 = vmatpush.bf16.msra.mxu0 %v449
    %835 = vmatpush.bf16.msra.mxu0 %v445
    %836 = vmatpush.bf16.msra.mxu0 %v441
    %837 = vmatpush.bf16.msra.mxu0 %v437
    %838 = vmatpush.bf16.msra.mxu0 %v433
    %839 = vmatmul.bf16.gmra.mxu0 %v768
    %v840 = vpop.f32.mrf.mxu0
    %v841 = vadd.f32 %v799, %v840
    %v842 = vpop.f32.mrf.mxu0
    %843 = vdwg.mxu0
    %844 = vmatpush.bf16.msra.mxu0 %v462
    %845 = vmatpush.bf16.msra.mxu0 %v458
    %846 = vmatpush.bf16.msra.mxu0 %v454
    %847 = vmatpush.bf16.msra.mxu0 %v450
    %848 = vmatpush.bf16.msra.mxu0 %v446
    %849 = vmatpush.bf16.msra.mxu0 %v442
    %850 = vmatpush.bf16.msra.mxu0 %v438
    %851 = vmatpush.bf16.msra.mxu0 %v434
    %852 = vmatmul.bf16.gmra.mxu0 %v768
    %v853 = vpop.f32.mrf.mxu0
    %v854 = vadd.f32 %v800, %v853
    %v855 = vpop.f32.mrf.mxu0
    %856 = vdwg.mxu0
    %v857 = vsub.f32 0.0, %v815
    %v858 = vsub.f32 0.0, %v828
    %v859 = vsub.f32 0.0, %v841
    %v860 = vmul.f32 %v857, 1.442695
    %v861 = vpow.pop %v860
    %v862 = vmul.f32 %v858, 1.442695
    %v863 = vpow.pop %v862
    %v864 = vmul.f32 %v859, 1.442695
    %v865 = vpow.pop %v864
    %v866 = vadd.f32 %v861, 1.0
    %v867 = vadd.f32 %v863, 1.0
    %v868 = vadd.f32 %v865, 1.0
    %v869 = vrcp.pop %v866
    %v870 = vmul.f32 %v866, %v869
    %v871 = vsub.f32 1.0, %v870
    %v872 = vmul.f32 %v869, %v871
    %v873 = vadd.f32 %v869, %v872
    %vm874 = vweird.f32 %v866
    %vm875 = vweird.f32 %v869
    %vm876 = vmor %vm874, %vm875
    %v877 = vsel %vm876, %v869, %v873
    %v878 = vand.u32 2147483647, %v866
    %vm879 = vcmp.eq.f32.partialorder %v878, 8.507059e+37
    %v880 = vand.u32 %v866, 2147483648
    %v881 = vor.u32 1.1754944e-38, %v880
    %v882 = vsel %vm879, %v881, %v877
    %v883 = vmul.f32 1.0, %v882
    %v884 = vrcp.pop %v867
    %v885 = vmul.f32 %v867, %v884
    %v886 = vsub.f32 1.0, %v885
    %v887 = vmul.f32 %v884, %v886
    %v888 = vadd.f32 %v884, %v887
    %vm889 = vweird.f32 %v867
    %vm890 = vweird.f32 %v884
    %vm891 = vmor %vm889, %vm890
    %v892 = vsel %vm891, %v884, %v888
    %v893 = vand.u32 2147483647, %v867
    %vm894 = vcmp.eq.f32.partialorder %v893, 8.507059e+37
    %v895 = vand.u32 %v867, 2147483648
    %v896 = vor.u32 1.1754944e-38, %v895
    %v897 = vsel %vm894, %v896, %v892
    %v898 = vmul.f32 1.0, %v897
    %v899 = vrcp.pop %v868
    %v900 = vmul.f32 %v868, %v899
    %v901 = vsub.f32 1.0, %v900
    %v902 = vmul.f32 %v899, %v901
    %v903 = vadd.f32 %v899, %v902
    %vm904 = vweird.f32 %v868
    %vm905 = vweird.f32 %v899
    %vm906 = vmor %vm904, %vm905
    %v907 = vsel %vm906, %v899, %v903
    %v908 = vand.u32 2147483647, %v868
    %vm909 = vcmp.eq.f32.partialorder %v908, 8.507059e+37
    %v910 = vand.u32 %v868, 2147483648
    %v911 = vor.u32 1.1754944e-38, %v910
    %v912 = vsel %vm909, %v911, %v907
    %v913 = vmul.f32 1.0, %v912
    %v914 = vtanh.pop %v854
    %v915 = vmul.f32 %v898, %v763
    %v916 = vmul.f32 %v883, %v914
    %v917 = vadd.f32 %v915, %v916
    %v918 = vtanh.pop %v917
    %v919 = vmul.f32 %v913, %v918
    %920 = vst.msk [vmem:[#allocation3 + $0x4] sm:$0x3] %vm610, %v919
    %921 = vst.msk [vmem:[#allocation3 + $0xa] sm:$0x3] %vm612, %v919
    %v922 = vpack.c.bf16 %v919, %v919
    %v923 = vld [vmem:[#allocation2] sm:$0xc0]
    %v924 = vld [vmem:[#allocation2 + $0x8] sm:$0xc0]
    %v925 = vld [vmem:[#allocation2 + $0x10] sm:$0xc0]
    %v926 = vld [vmem:[#allocation2 + $0x18] sm:$0xc0]
    %v927 = vld [vmem:[#allocation2 + $0x20] sm:$0x3]
    %v928 = vld [vmem:[#allocation2 + $0x28] sm:$0x3]
    %v929 = vld [vmem:[#allocation2 + $0x30] sm:$0x3]
    %v930 = vld [vmem:[#allocation2 + $0x38] sm:$0x3]
    %v935 = vrot.slane %v927, 2
    %v936 = vrot.slane %v928, 2
    %v937 = vrot.slane %v929, 2
    %v938 = vrot.slane %v930, 2
    %v943 = vsel %vm315, %v923, %v935
    %v944 = vsel %vm316, %v924, %v936
    %v945 = vsel %vm317, %v925, %v937
    %v946 = vsel %vm318, %v926, %v938
    %v951 = vrot.slane %v943, 6
    %v952 = vrot.slane %v944, 6
    %v953 = vrot.slane %v945, 6
    %v954 = vrot.slane %v946, 6
    %959 = vmatpush.bf16.msra.mxu0 %v459
    %960 = vmatpush.bf16.msra.mxu0 %v455
    %961 = vmatpush.bf16.msra.mxu0 %v451
    %962 = vmatpush.bf16.msra.mxu0 %v447
    %963 = vmatpush.bf16.msra.mxu0 %v443
    %964 = vmatpush.bf16.msra.mxu0 %v439
    %965 = vmatpush.bf16.msra.mxu0 %v435
    %966 = vmatpush.bf16.msra.mxu0 %v431
    %967 = vmatmul.bf16.gmra.mxu0 %v922
    %v968 = vpop.f32.mrf.mxu0
    %v969 = vadd.f32 %v951, %v968
    %v970 = vpop.f32.mrf.mxu0
    %971 = vdwg.mxu0
    %972 = vmatpush.bf16.msra.mxu0 %v460
    %973 = vmatpush.bf16.msra.mxu0 %v456
    %974 = vmatpush.bf16.msra.mxu0 %v452
    %975 = vmatpush.bf16.msra.mxu0 %v448
    %976 = vmatpush.bf16.msra.mxu0 %v444
    %977 = vmatpush.bf16.msra.mxu0 %v440
    %978 = vmatpush.bf16.msra.mxu0 %v436
    %979 = vmatpush.bf16.msra.mxu0 %v432
    %980 = vmatmul.bf16.gmra.mxu0 %v922
    %v981 = vpop.f32.mrf.mxu0
    %v982 = vadd.f32 %v952, %v981
    %v983 = vpop.f32.mrf.mxu0
    %984 = vdwg.mxu0
    %985 = vmatpush.bf16.msra.mxu0 %v461
    %986 = vmatpush.bf16.msra.mxu0 %v457
    %987 = vmatpush.bf16.msra.mxu0 %v453
    %988 = vmatpush.bf16.msra.mxu0 %v449
    %989 = vmatpush.bf16.msra.mxu0 %v445
    %990 = vmatpush.bf16.msra.mxu0 %v441
    %991 = vmatpush.bf16.msra.mxu0 %v437
    %992 = vmatpush.bf16.msra.mxu0 %v433
    %993 = vmatmul.bf16.gmra.mxu0 %v922
    %v994 = vpop.f32.mrf.mxu0
    %v995 = vadd.f32 %v953, %v994
    %v996 = vpop.f32.mrf.mxu0
    %997 = vdwg.mxu0
    %998 = vmatpush.bf16.msra.mxu0 %v462
    %999 = vmatpush.bf16.msra.mxu0 %v458
    %1000 = vmatpush.bf16.msra.mxu0 %v454
    %1001 = vmatpush.bf16.msra.mxu0 %v450
    %1002 = vmatpush.bf16.msra.mxu0 %v446
    %1003 = vmatpush.bf16.msra.mxu0 %v442
    %1004 = vmatpush.bf16.msra.mxu0 %v438
    %1005 = vmatpush.bf16.msra.mxu0 %v434
    %1006 = vmatmul.bf16.gmra.mxu0 %v922
    %v1007 = vpop.f32.mrf.mxu0
    %v1008 = vadd.f32 %v954, %v1007
    %v1009 = vpop.f32.mrf.mxu0
    %1010 = vdwg.mxu0
    %v1011 = vsub.f32 0.0, %v969
    %v1012 = vsub.f32 0.0, %v982
    %v1013 = vsub.f32 0.0, %v995
    %v1014 = vmul.f32 %v1011, 1.442695
    %v1015 = vpow.pop %v1014
    %v1016 = vmul.f32 %v1012, 1.442695
    %v1017 = vpow.pop %v1016
    %v1018 = vmul.f32 %v1013, 1.442695
    %v1019 = vpow.pop %v1018
    %v1020 = vadd.f32 %v1015, 1.0
    %v1021 = vadd.f32 %v1017, 1.0
    %v1022 = vadd.f32 %v1019, 1.0
    %v1023 = vrcp.pop %v1020
    %v1024 = vmul.f32 %v1020, %v1023
    %v1025 = vsub.f32 1.0, %v1024
    %v1026 = vmul.f32 %v1023, %v1025
    %v1027 = vadd.f32 %v1023, %v1026
    %vm1028 = vweird.f32 %v1020
    %vm1029 = vweird.f32 %v1023
    %vm1030 = vmor %vm1028, %vm1029
    %v1031 = vsel %vm1030, %v1023, %v1027
    %v1032 = vand.u32 2147483647, %v1020
    %vm1033 = vcmp.eq.f32.partialorder %v1032, 8.507059e+37
    %v1034 = vand.u32 %v1020, 2147483648
    %v1035 = vor.u32 1.1754944e-38, %v1034
    %v1036 = vsel %vm1033, %v1035, %v1031
    %v1037 = vmul.f32 1.0, %v1036
    %v1038 = vrcp.pop %v1021
    %v1039 = vmul.f32 %v1021, %v1038
    %v1040 = vsub.f32 1.0, %v1039
    %v1041 = vmul.f32 %v1038, %v1040
    %v1042 = vadd.f32 %v1038, %v1041
    %vm1043 = vweird.f32 %v1021
    %vm1044 = vweird.f32 %v1038
    %vm1045 = vmor %vm1043, %vm1044
    %v1046 = vsel %vm1045, %v1038, %v1042
    %v1047 = vand.u32 2147483647, %v1021
    %vm1048 = vcmp.eq.f32.partialorder %v1047, 8.507059e+37
    %v1049 = vand.u32 %v1021, 2147483648
    %v1050 = vor.u32 1.1754944e-38, %v1049
    %v1051 = vsel %vm1048, %v1050, %v1046
    %v1052 = vmul.f32 1.0, %v1051
    %v1053 = vrcp.pop %v1022
    %v1054 = vmul.f32 %v1022, %v1053
    %v1055 = vsub.f32 1.0, %v1054
    %v1056 = vmul.f32 %v1053, %v1055
    %v1057 = vadd.f32 %v1053, %v1056
    %vm1058 = vweird.f32 %v1022
    %vm1059 = vweird.f32 %v1053
    %vm1060 = vmor %vm1058, %vm1059
    %v1061 = vsel %vm1060, %v1053, %v1057
    %v1062 = vand.u32 2147483647, %v1022
    %vm1063 = vcmp.eq.f32.partialorder %v1062, 8.507059e+37
    %v1064 = vand.u32 %v1022, 2147483648
    %v1065 = vor.u32 1.1754944e-38, %v1064
    %v1066 = vsel %vm1063, %v1065, %v1061
    %v1067 = vmul.f32 1.0, %v1066
    %v1068 = vtanh.pop %v1008
    %v1069 = vmul.f32 %v1052, %v917
    %v1070 = vmul.f32 %v1037, %v1068
    %v1071 = vadd.f32 %v1069, %v1070
    %v1072 = vtanh.pop %v1071
    %v1073 = vmul.f32 %v1067, %v1072
    %1074 = vst.msk [vmem:[#allocation3 + $0x6] sm:$0x3] %vm610, %v1073
    %1075 = vst.msk [vmem:[#allocation3 + $0x8] sm:$0x3] %vm612, %v1073
    %v1076 = vpack.c.bf16 %v1073, %v1073
    %v1077 = vld [vmem:[#allocation2 + $0x20] sm:$0x3]
    %v1078 = vld [vmem:[#allocation2 + $0x28] sm:$0x3]
    %v1079 = vld [vmem:[#allocation2 + $0x30] sm:$0x3]
    %v1080 = vld [vmem:[#allocation2 + $0x38] sm:$0x3]
    %v1081 = vld [vmem:[#allocation2] sm:$0xc0]
    %v1082 = vld [vmem:[#allocation2 + $0x8] sm:$0xc0]
    %v1083 = vld [vmem:[#allocation2 + $0x10] sm:$0xc0]
    %v1084 = vld [vmem:[#allocation2 + $0x18] sm:$0xc0]
    %v1089 = vrot.slane %v1081, 6
    %v1090 = vrot.slane %v1082, 6
    %v1091 = vrot.slane %v1083, 6
    %v1092 = vrot.slane %v1084, 6
    %v1097 = vsel %vm315, %v1077, %v1089
    %v1098 = vsel %vm316, %v1078, %v1090
    %v1099 = vsel %vm317, %v1079, %v1091
    %v1100 = vsel %vm318, %v1080, %v1092
    %1101 = vmatpush.bf16.msra.mxu0 %v459
    %1102 = vmatpush.bf16.msra.mxu0 %v455
    %1103 = vmatpush.bf16.msra.mxu0 %v451
    %1104 = vmatpush.bf16.msra.mxu0 %v447
    %1105 = vmatpush.bf16.msra.mxu0 %v443
    %1106 = vmatpush.bf16.msra.mxu0 %v439
    %1107 = vmatpush.bf16.msra.mxu0 %v435
    %1108 = vmatpush.bf16.msra.mxu0 %v431
    %1109 = vmatmul.bf16.gmra.mxu0 %v1076
    %v1110 = vpop.f32.mrf.mxu0
    %v1111 = vadd.f32 %v1097, %v1110
    %v1112 = vpop.f32.mrf.mxu0
    %1113 = vdwg.mxu0
    %1114 = vmatpush.bf16.msra.mxu0 %v460
    %1115 = vmatpush.bf16.msra.mxu0 %v456
    %1116 = vmatpush.bf16.msra.mxu0 %v452
    %1117 = vmatpush.bf16.msra.mxu0 %v448
    %1118 = vmatpush.bf16.msra.mxu0 %v444
    %1119 = vmatpush.bf16.msra.mxu0 %v440
    %1120 = vmatpush.bf16.msra.mxu0 %v436
    %1121 = vmatpush.bf16.msra.mxu0 %v432
    %1122 = vmatmul.bf16.gmra.mxu0 %v1076
    %v1123 = vpop.f32.mrf.mxu0
    %v1124 = vadd.f32 %v1098, %v1123
    %v1125 = vpop.f32.mrf.mxu0
    %1126 = vdwg.mxu0
    %1127 = vmatpush.bf16.msra.mxu0 %v461
    %1128 = vmatpush.bf16.msra.mxu0 %v457
    %1129 = vmatpush.bf16.msra.mxu0 %v453
    %1130 = vmatpush.bf16.msra.mxu0 %v449
    %1131 = vmatpush.bf16.msra.mxu0 %v445
    %1132 = vmatpush.bf16.msra.mxu0 %v441
    %1133 = vmatpush.bf16.msra.mxu0 %v437
    %1134 = vmatpush.bf16.msra.mxu0 %v433
    %1135 = vmatmul.bf16.gmra.mxu0 %v1076
    %v1136 = vpop.f32.mrf.mxu0
    %v1137 = vadd.f32 %v1099, %v1136
    %v1138 = vpop.f32.mrf.mxu0
    %1139 = vdwg.mxu0
    %1140 = vmatpush.bf16.msra.mxu0 %v462
    %1141 = vmatpush.bf16.msra.mxu0 %v458
    %1142 = vmatpush.bf16.msra.mxu0 %v454
    %1143 = vmatpush.bf16.msra.mxu0 %v450
    %1144 = vmatpush.bf16.msra.mxu0 %v446
    %1145 = vmatpush.bf16.msra.mxu0 %v442
    %1146 = vmatpush.bf16.msra.mxu0 %v438
    %1147 = vmatpush.bf16.msra.mxu0 %v434
    %1148 = vmatmul.bf16.gmra.mxu0 %v1076
    %v1149 = vpop.f32.mrf.mxu0
    %v1150 = vadd.f32 %v1100, %v1149
    %v1151 = vpop.f32.mrf.mxu0
    %1152 = vdwg.mxu0
    %v1153 = vsub.f32 0.0, %v1111
    %v1154 = vsub.f32 0.0, %v1124
    %v1155 = vsub.f32 0.0, %v1137
    %v1156 = vmul.f32 %v1153, 1.442695
    %v1157 = vpow.pop %v1156
    %v1158 = vmul.f32 %v1154, 1.442695
    %v1159 = vpow.pop %v1158
    %v1160 = vmul.f32 %v1155, 1.442695
    %v1161 = vpow.pop %v1160
    %v1162 = vadd.f32 %v1157, 1.0
    %v1163 = vadd.f32 %v1159, 1.0
    %v1164 = vadd.f32 %v1161, 1.0
    %v1165 = vrcp.pop %v1162
    %v1166 = vmul.f32 %v1162, %v1165
    %v1167 = vsub.f32 1.0, %v1166
    %v1168 = vmul.f32 %v1165, %v1167
    %v1169 = vadd.f32 %v1165, %v1168
    %vm1170 = vweird.f32 %v1162
    %vm1171 = vweird.f32 %v1165
    %vm1172 = vmor %vm1170, %vm1171
    %v1173 = vsel %vm1172, %v1165, %v1169
    %v1174 = vand.u32 2147483647, %v1162
    %vm1175 = vcmp.eq.f32.partialorder %v1174, 8.507059e+37
    %v1176 = vand.u32 %v1162, 2147483648
    %v1177 = vor.u32 1.1754944e-38, %v1176
    %v1178 = vsel %vm1175, %v1177, %v1173
    %v1179 = vmul.f32 1.0, %v1178
    %v1180 = vrcp.pop %v1163
    %v1181 = vmul.f32 %v1163, %v1180
    %v1182 = vsub.f32 1.0, %v1181
    %v1183 = vmul.f32 %v1180, %v1182
    %v1184 = vadd.f32 %v1180, %v1183
    %vm1185 = vweird.f32 %v1163
    %vm1186 = vweird.f32 %v1180
    %vm1187 = vmor %vm1185, %vm1186
    %v1188 = vsel %vm1187, %v1180, %v1184
    %v1189 = vand.u32 2147483647, %v1163
    %vm1190 = vcmp.eq.f32.partialorder %v1189, 8.507059e+37
    %v1191 = vand.u32 %v1163, 2147483648
    %v1192 = vor.u32 1.1754944e-38, %v1191
    %v1193 = vsel %vm1190, %v1192, %v1188
    %v1194 = vmul.f32 1.0, %v1193
    %v1195 = vrcp.pop %v1164
    %v1196 = vmul.f32 %v1164, %v1195
    %v1197 = vsub.f32 1.0, %v1196
    %v1198 = vmul.f32 %v1195, %v1197
    %v1199 = vadd.f32 %v1195, %v1198
    %vm1200 = vweird.f32 %v1164
    %vm1201 = vweird.f32 %v1195
    %vm1202 = vmor %vm1200, %vm1201
    %v1203 = vsel %vm1202, %v1195, %v1199
    %v1204 = vand.u32 2147483647, %v1164
    %vm1205 = vcmp.eq.f32.partialorder %v1204, 8.507059e+37
    %v1206 = vand.u32 %v1164, 2147483648
    %v1207 = vor.u32 1.1754944e-38, %v1206
    %v1208 = vsel %vm1205, %v1207, %v1203
    %v1209 = vmul.f32 1.0, %v1208
    %v1210 = vtanh.pop %v1150
    %v1211 = vmul.f32 %v1194, %v1071
    %v1212 = vmul.f32 %v1179, %v1210
    %v1213 = vadd.f32 %v1211, %v1212
    %v1214 = vtanh.pop %v1213
    %v1215 = vmul.f32 %v1209, %v1214
    %1216 = vst.msk [vmem:[#allocation3 + $0x8] sm:$0x3] %vm610, %v1215
    %1217 = vst.msk [vmem:[#allocation3 + $0x6] sm:$0x3] %vm612, %v1215
    %v1218 = vpack.c.bf16 %v1215, %v1215
    %v1219 = vld [vmem:[#allocation2 + $0x20] sm:$0xc]
    %v1220 = vld [vmem:[#allocation2 + $0x28] sm:$0xc]
    %v1221 = vld [vmem:[#allocation2 + $0x30] sm:$0xc]
    %v1222 = vld [vmem:[#allocation2 + $0x38] sm:$0xc]
    %v1223 = vld [vmem:[#allocation2] sm:$0x30]
    %v1224 = vld [vmem:[#allocation2 + $0x8] sm:$0x30]
    %v1225 = vld [vmem:[#allocation2 + $0x10] sm:$0x30]
    %v1226 = vld [vmem:[#allocation2 + $0x18] sm:$0x30]
    %v1231 = vrot.slane %v1223, 2
    %v1232 = vrot.slane %v1224, 2
    %v1233 = vrot.slane %v1225, 2
    %v1234 = vrot.slane %v1226, 2
    %v1239 = vsel %vm315, %v1219, %v1231
    %v1240 = vsel %vm316, %v1220, %v1232
    %v1241 = vsel %vm317, %v1221, %v1233
    %v1242 = vsel %vm318, %v1222, %v1234
    %v1247 = vrot.slane %v1239, 2
    %v1248 = vrot.slane %v1240, 2
    %v1249 = vrot.slane %v1241, 2
    %v1250 = vrot.slane %v1242, 2
    %1255 = vmatpush.bf16.msra.mxu0 %v459
    %1256 = vmatpush.bf16.msra.mxu0 %v455
    %1257 = vmatpush.bf16.msra.mxu0 %v451
    %1258 = vmatpush.bf16.msra.mxu0 %v447
    %1259 = vmatpush.bf16.msra.mxu0 %v443
    %1260 = vmatpush.bf16.msra.mxu0 %v439
    %1261 = vmatpush.bf16.msra.mxu0 %v435
    %1262 = vmatpush.bf16.msra.mxu0 %v431
    %1263 = vmatmul.bf16.gmra.mxu0 %v1218
    %v1264 = vpop.f32.mrf.mxu0
    %v1265 = vadd.f32 %v1247, %v1264
    %v1266 = vpop.f32.mrf.mxu0
    %1267 = vdwg.mxu0
    %1268 = vmatpush.bf16.msra.mxu0 %v460
    %1269 = vmatpush.bf16.msra.mxu0 %v456
    %1270 = vmatpush.bf16.msra.mxu0 %v452
    %1271 = vmatpush.bf16.msra.mxu0 %v448
    %1272 = vmatpush.bf16.msra.mxu0 %v444
    %1273 = vmatpush.bf16.msra.mxu0 %v440
    %1274 = vmatpush.bf16.msra.mxu0 %v436
    %1275 = vmatpush.bf16.msra.mxu0 %v432
    %1276 = vmatmul.bf16.gmra.mxu0 %v1218
    %v1277 = vpop.f32.mrf.mxu0
    %v1278 = vadd.f32 %v1248, %v1277
    %v1279 = vpop.f32.mrf.mxu0
    %1280 = vdwg.mxu0
    %1281 = vmatpush.bf16.msra.mxu0 %v461
    %1282 = vmatpush.bf16.msra.mxu0 %v457
    %1283 = vmatpush.bf16.msra.mxu0 %v453
    %1284 = vmatpush.bf16.msra.mxu0 %v449
    %1285 = vmatpush.bf16.msra.mxu0 %v445
    %1286 = vmatpush.bf16.msra.mxu0 %v441
    %1287 = vmatpush.bf16.msra.mxu0 %v437
    %1288 = vmatpush.bf16.msra.mxu0 %v433
    %1289 = vmatmul.bf16.gmra.mxu0 %v1218
    %v1290 = vpop.f32.mrf.mxu0
    %v1291 = vadd.f32 %v1249, %v1290
    %v1292 = vpop.f32.mrf.mxu0
    %1293 = vdwg.mxu0
    %1294 = vmatpush.bf16.msra.mxu0 %v462
    %1295 = vmatpush.bf16.msra.mxu0 %v458
    %1296 = vmatpush.bf16.msra.mxu0 %v454
    %1297 = vmatpush.bf16.msra.mxu0 %v450
    %1298 = vmatpush.bf16.msra.mxu0 %v446
    %1299 = vmatpush.bf16.msra.mxu0 %v442
    %1300 = vmatpush.bf16.msra.mxu0 %v438
    %1301 = vmatpush.bf16.msra.mxu0 %v434
    %1302 = vmatmul.bf16.gmra.mxu0 %v1218
    %v1303 = vpop.f32.mrf.mxu0
    %v1304 = vadd.f32 %v1250, %v1303
    %v1305 = vpop.f32.mrf.mxu0
    %1306 = vdwg.mxu0
    %v1307 = vsub.f32 0.0, %v1265
    %v1308 = vsub.f32 0.0, %v1278
    %v1309 = vsub.f32 0.0, %v1291
    %v1310 = vmul.f32 %v1307, 1.442695
    %v1311 = vpow.pop %v1310
    %v1312 = vmul.f32 %v1308, 1.442695
    %v1313 = vpow.pop %v1312
    %v1314 = vmul.f32 %v1309, 1.442695
    %v1315 = vpow.pop %v1314
    %v1316 = vadd.f32 %v1311, 1.0
    %v1317 = vadd.f32 %v1313, 1.0
    %v1318 = vadd.f32 %v1315, 1.0
    %v1319 = vrcp.pop %v1316
    %v1320 = vmul.f32 %v1316, %v1319
    %v1321 = vsub.f32 1.0, %v1320
    %v1322 = vmul.f32 %v1319, %v1321
    %v1323 = vadd.f32 %v1319, %v1322
    %vm1324 = vweird.f32 %v1316
    %vm1325 = vweird.f32 %v1319
    %vm1326 = vmor %vm1324, %vm1325
    %v1327 = vsel %vm1326, %v1319, %v1323
    %v1328 = vand.u32 2147483647, %v1316
    %vm1329 = vcmp.eq.f32.partialorder %v1328, 8.507059e+37
    %v1330 = vand.u32 %v1316, 2147483648
    %v1331 = vor.u32 1.1754944e-38, %v1330
    %v1332 = vsel %vm1329, %v1331, %v1327
    %v1333 = vmul.f32 1.0, %v1332
    %v1334 = vrcp.pop %v1317
    %v1335 = vmul.f32 %v1317, %v1334
    %v1336 = vsub.f32 1.0, %v1335
    %v1337 = vmul.f32 %v1334, %v1336
    %v1338 = vadd.f32 %v1334, %v1337
    %vm1339 = vweird.f32 %v1317
    %vm1340 = vweird.f32 %v1334
    %vm1341 = vmor %vm1339, %vm1340
    %v1342 = vsel %vm1341, %v1334, %v1338
    %v1343 = vand.u32 2147483647, %v1317
    %vm1344 = vcmp.eq.f32.partialorder %v1343, 8.507059e+37
    %v1345 = vand.u32 %v1317, 2147483648
    %v1346 = vor.u32 1.1754944e-38, %v1345
    %v1347 = vsel %vm1344, %v1346, %v1342
    %v1348 = vmul.f32 1.0, %v1347
    %v1349 = vrcp.pop %v1318
    %v1350 = vmul.f32 %v1318, %v1349
    %v1351 = vsub.f32 1.0, %v1350
    %v1352 = vmul.f32 %v1349, %v1351
    %v1353 = vadd.f32 %v1349, %v1352
    %vm1354 = vweird.f32 %v1318
    %vm1355 = vweird.f32 %v1349
    %vm1356 = vmor %vm1354, %vm1355
    %v1357 = vsel %vm1356, %v1349, %v1353
    %v1358 = vand.u32 2147483647, %v1318
    %vm1359 = vcmp.eq.f32.partialorder %v1358, 8.507059e+37
    %v1360 = vand.u32 %v1318, 2147483648
    %v1361 = vor.u32 1.1754944e-38, %v1360
    %v1362 = vsel %vm1359, %v1361, %v1357
    %v1363 = vmul.f32 1.0, %v1362
    %v1364 = vtanh.pop %v1304
    %v1365 = vmul.f32 %v1348, %v1213
    %v1366 = vmul.f32 %v1333, %v1364
    %v1367 = vadd.f32 %v1365, %v1366
    %v1368 = vtanh.pop %v1367
    %v1369 = vmul.f32 %v1363, %v1368
    %1370 = vst.msk [vmem:[#allocation3 + $0xa] sm:$0x3] %vm610, %v1369
    %1371 = vst.msk [vmem:[#allocation3 + $0x4] sm:$0x3] %vm612, %v1369
    %v1372 = vpack.c.bf16 %v1369, %v1369
    %v1373 = vld [vmem:[#allocation2 + $0x20] sm:$0x30]
    %v1374 = vld [vmem:[#allocation2 + $0x28] sm:$0x30]
    %v1375 = vld [vmem:[#allocation2 + $0x30] sm:$0x30]
    %v1376 = vld [vmem:[#allocation2 + $0x38] sm:$0x30]
    %v1377 = vld [vmem:[#allocation2] sm:$0xc]
    %v1378 = vld [vmem:[#allocation2 + $0x8] sm:$0xc]
    %v1379 = vld [vmem:[#allocation2 + $0x10] sm:$0xc]
    %v1380 = vld [vmem:[#allocation2 + $0x18] sm:$0xc]
    %v1385 = vrot.slane %v1377, 6
    %v1386 = vrot.slane %v1378, 6
    %v1387 = vrot.slane %v1379, 6
    %v1388 = vrot.slane %v1380, 6
    %v1393 = vsel %vm315, %v1373, %v1385
    %v1394 = vsel %vm316, %v1374, %v1386
    %v1395 = vsel %vm317, %v1375, %v1387
    %v1396 = vsel %vm318, %v1376, %v1388
    %v1401 = vrot.slane %v1393, 4
    %v1402 = vrot.slane %v1394, 4
    %v1403 = vrot.slane %v1395, 4
    %v1404 = vrot.slane %v1396, 4
    %1409 = vmatpush.bf16.msra.mxu0 %v459
    %1410 = vmatpush.bf16.msra.mxu0 %v455
    %1411 = vmatpush.bf16.msra.mxu0 %v451
    %1412 = vmatpush.bf16.msra.mxu0 %v447
    %1413 = vmatpush.bf16.msra.mxu0 %v443
    %1414 = vmatpush.bf16.msra.mxu0 %v439
    %1415 = vmatpush.bf16.msra.mxu0 %v435
    %1416 = vmatpush.bf16.msra.mxu0 %v431
    %1417 = vmatmul.bf16.gmra.mxu0 %v1372
    %v1418 = vpop.f32.mrf.mxu0
    %v1419 = vadd.f32 %v1401, %v1418
    %v1420 = vpop.f32.mrf.mxu0
    %1421 = vdwg.mxu0
    %1422 = vmatpush.bf16.msra.mxu0 %v460
    %1423 = vmatpush.bf16.msra.mxu0 %v456
    %1424 = vmatpush.bf16.msra.mxu0 %v452
    %1425 = vmatpush.bf16.msra.mxu0 %v448
    %1426 = vmatpush.bf16.msra.mxu0 %v444
    %1427 = vmatpush.bf16.msra.mxu0 %v440
    %1428 = vmatpush.bf16.msra.mxu0 %v436
    %1429 = vmatpush.bf16.msra.mxu0 %v432
    %1430 = vmatmul.bf16.gmra.mxu0 %v1372
    %v1431 = vpop.f32.mrf.mxu0
    %v1432 = vadd.f32 %v1402, %v1431
    %v1433 = vpop.f32.mrf.mxu0
    %1434 = vdwg.mxu0
    %1435 = vmatpush.bf16.msra.mxu0 %v461
    %1436 = vmatpush.bf16.msra.mxu0 %v457
    %1437 = vmatpush.bf16.msra.mxu0 %v453
    %1438 = vmatpush.bf16.msra.mxu0 %v449
    %1439 = vmatpush.bf16.msra.mxu0 %v445
    %1440 = vmatpush.bf16.msra.mxu0 %v441
    %1441 = vmatpush.bf16.msra.mxu0 %v437
    %1442 = vmatpush.bf16.msra.mxu0 %v433
    %1443 = vmatmul.bf16.gmra.mxu0 %v1372
    %v1444 = vpop.f32.mrf.mxu0
    %v1445 = vadd.f32 %v1403, %v1444
    %v1446 = vpop.f32.mrf.mxu0
    %1447 = vdwg.mxu0
    %1448 = vmatpush.bf16.msra.mxu0 %v462
    %1449 = vmatpush.bf16.msra.mxu0 %v458
    %1450 = vmatpush.bf16.msra.mxu0 %v454
    %1451 = vmatpush.bf16.msra.mxu0 %v450
    %1452 = vmatpush.bf16.msra.mxu0 %v446
    %1453 = vmatpush.bf16.msra.mxu0 %v442
    %1454 = vmatpush.bf16.msra.mxu0 %v438
    %1455 = vmatpush.bf16.msra.mxu0 %v434
    %1456 = vmatmul.bf16.gmra.mxu0 %v1372
    %v1457 = vpop.f32.mrf.mxu0
    %v1458 = vadd.f32 %v1404, %v1457
    %v1459 = vpop.f32.mrf.mxu0
    %1460 = vdwg.mxu0
    %v1461 = vsub.f32 0.0, %v1419
    %v1462 = vsub.f32 0.0, %v1432
    %v1463 = vsub.f32 0.0, %v1445
    %v1464 = vmul.f32 %v1461, 1.442695
    %v1465 = vpow.pop %v1464
    %v1466 = vmul.f32 %v1462, 1.442695
    %v1467 = vpow.pop %v1466
    %v1468 = vmul.f32 %v1463, 1.442695
    %v1469 = vpow.pop %v1468
    %v1470 = vadd.f32 %v1465, 1.0
    %v1471 = vadd.f32 %v1467, 1.0
    %v1472 = vadd.f32 %v1469, 1.0
    %v1473 = vrcp.pop %v1470
    %v1474 = vmul.f32 %v1470, %v1473
    %v1475 = vsub.f32 1.0, %v1474
    %v1476 = vmul.f32 %v1473, %v1475
    %v1477 = vadd.f32 %v1473, %v1476
    %vm1478 = vweird.f32 %v1470
    %vm1479 = vweird.f32 %v1473
    %vm1480 = vmor %vm1478, %vm1479
    %v1481 = vsel %vm1480, %v1473, %v1477
    %v1482 = vand.u32 2147483647, %v1470
    %vm1483 = vcmp.eq.f32.partialorder %v1482, 8.507059e+37
    %v1484 = vand.u32 %v1470, 2147483648
    %v1485 = vor.u32 1.1754944e-38, %v1484
    %v1486 = vsel %vm1483, %v1485, %v1481
    %v1487 = vmul.f32 1.0, %v1486
    %v1488 = vrcp.pop %v1471
    %v1489 = vmul.f32 %v1471, %v1488
    %v1490 = vsub.f32 1.0, %v1489
    %v1491 = vmul.f32 %v1488, %v1490
    %v1492 = vadd.f32 %v1488, %v1491
    %vm1493 = vweird.f32 %v1471
    %vm1494 = vweird.f32 %v1488
    %vm1495 = vmor %vm1493, %vm1494
    %v1496 = vsel %vm1495, %v1488, %v1492
    %v1497 = vand.u32 2147483647, %v1471
    %vm1498 = vcmp.eq.f32.partialorder %v1497, 8.507059e+37
    %v1499 = vand.u32 %v1471, 2147483648
    %v1500 = vor.u32 1.1754944e-38, %v1499
    %v1501 = vsel %vm1498, %v1500, %v1496
    %v1502 = vmul.f32 1.0, %v1501
    %v1503 = vrcp.pop %v1472
    %v1504 = vmul.f32 %v1472, %v1503
    %v1505 = vsub.f32 1.0, %v1504
    %v1506 = vmul.f32 %v1503, %v1505
    %v1507 = vadd.f32 %v1503, %v1506
    %vm1508 = vweird.f32 %v1472
    %vm1509 = vweird.f32 %v1503
    %vm1510 = vmor %vm1508, %vm1509
    %v1511 = vsel %vm1510, %v1503, %v1507
    %v1512 = vand.u32 2147483647, %v1472
    %vm1513 = vcmp.eq.f32.partialorder %v1512, 8.507059e+37
    %v1514 = vand.u32 %v1472, 2147483648
    %v1515 = vor.u32 1.1754944e-38, %v1514
    %v1516 = vsel %vm1513, %v1515, %v1511
    %v1517 = vmul.f32 1.0, %v1516
    %v1518 = vtanh.pop %v1458
    %v1519 = vmul.f32 %v1502, %v1367
    %v1520 = vmul.f32 %v1487, %v1518
    %v1521 = vadd.f32 %v1519, %v1520
    %v1522 = vtanh.pop %v1521
    %v1523 = vmul.f32 %v1517, %v1522
    %1524 = vst.msk [vmem:[#allocation3 + $0xc] sm:$0x3] %vm610, %v1523
    %1525 = vst.msk [vmem:[#allocation3 + $0x2] sm:$0x3] %vm612, %v1523
    %v1526 = vpack.c.bf16 %v1523, %v1523
    %v1527 = vld [vmem:[#allocation2 + $0x20] sm:$0xc0]
    %v1528 = vld [vmem:[#allocation2 + $0x28] sm:$0xc0]
    %v1529 = vld [vmem:[#allocation2 + $0x30] sm:$0xc0]
    %v1530 = vld [vmem:[#allocation2 + $0x38] sm:$0xc0]
    %v1531 = vld [vmem:[#allocation2] sm:$0x3]
    %v1532 = vld [vmem:[#allocation2 + $0x8] sm:$0x3]
    %v1533 = vld [vmem:[#allocation2 + $0x10] sm:$0x3]
    %v1534 = vld [vmem:[#allocation2 + $0x18] sm:$0x3]
    %v1539 = vrot.slane %v1531, 2
    %v1540 = vrot.slane %v1532, 2
    %v1541 = vrot.slane %v1533, 2
    %v1542 = vrot.slane %v1534, 2
    %v1547 = vsel %vm315, %v1527, %v1539
    %v1548 = vsel %vm316, %v1528, %v1540
    %v1549 = vsel %vm317, %v1529, %v1541
    %v1550 = vsel %vm318, %v1530, %v1542
    %v1555 = vrot.slane %v1547, 6
    %v1556 = vrot.slane %v1548, 6
    %v1557 = vrot.slane %v1549, 6
    %v1558 = vrot.slane %v1550, 6
    %1563 = vmatpush.bf16.msra.mxu0 %v459
    %1564 = vmatpush.bf16.msra.mxu0 %v455
    %1565 = vmatpush.bf16.msra.mxu0 %v451
    %1566 = vmatpush.bf16.msra.mxu0 %v447
    %1567 = vmatpush.bf16.msra.mxu0 %v443
    %1568 = vmatpush.bf16.msra.mxu0 %v439
    %1569 = vmatpush.bf16.msra.mxu0 %v435
    %1570 = vmatpush.bf16.msra.mxu0 %v431
    %1571 = vmatmul.bf16.gmra.mxu0 %v1526
    %v1572 = vpop.f32.mrf.mxu0
    %v1573 = vadd.f32 %v1555, %v1572
    %v1574 = vpop.f32.mrf.mxu0
    %1575 = vdwg.mxu0
    %1576 = vmatpush.bf16.msra.mxu0 %v460
    %1577 = vmatpush.bf16.msra.mxu0 %v456
    %1578 = vmatpush.bf16.msra.mxu0 %v452
    %1579 = vmatpush.bf16.msra.mxu0 %v448
    %1580 = vmatpush.bf16.msra.mxu0 %v444
    %1581 = vmatpush.bf16.msra.mxu0 %v440
    %1582 = vmatpush.bf16.msra.mxu0 %v436
    %1583 = vmatpush.bf16.msra.mxu0 %v432
    %1584 = vmatmul.bf16.gmra.mxu0 %v1526
    %v1585 = vpop.f32.mrf.mxu0
    %v1586 = vadd.f32 %v1556, %v1585
    %v1587 = vpop.f32.mrf.mxu0
    %1588 = vdwg.mxu0
    %1589 = vmatpush.bf16.msra.mxu0 %v461
    %1590 = vmatpush.bf16.msra.mxu0 %v457
    %1591 = vmatpush.bf16.msra.mxu0 %v453
    %1592 = vmatpush.bf16.msra.mxu0 %v449
    %1593 = vmatpush.bf16.msra.mxu0 %v445
    %1594 = vmatpush.bf16.msra.mxu0 %v441
    %1595 = vmatpush.bf16.msra.mxu0 %v437
    %1596 = vmatpush.bf16.msra.mxu0 %v433
    %1597 = vmatmul.bf16.gmra.mxu0 %v1526
    %v1598 = vpop.f32.mrf.mxu0
    %v1599 = vadd.f32 %v1557, %v1598
    %v1600 = vpop.f32.mrf.mxu0
    %1601 = vdwg.mxu0
    %1602 = vmatpush.bf16.msra.mxu0 %v462
    %1603 = vmatpush.bf16.msra.mxu0 %v458
    %1604 = vmatpush.bf16.msra.mxu0 %v454
    %1605 = vmatpush.bf16.msra.mxu0 %v450
    %1606 = vmatpush.bf16.msra.mxu0 %v446
    %1607 = vmatpush.bf16.msra.mxu0 %v442
    %1608 = vmatpush.bf16.msra.mxu0 %v438
    %1609 = vmatpush.bf16.msra.mxu0 %v434
    %1610 = vmatmul.bf16.gmra.mxu0 %v1526
    %v1611 = vpop.f32.mrf.mxu0
    %v1612 = vadd.f32 %v1558, %v1611
    %v1613 = vpop.f32.mrf.mxu0
    %1614 = vdwg.mxu0
    %v1615 = vsub.f32 0.0, %v1573
    %v1616 = vsub.f32 0.0, %v1586
    %v1617 = vsub.f32 0.0, %v1599
    %v1618 = vmul.f32 %v1615, 1.442695
    %v1619 = vpow.pop %v1618
    %v1620 = vmul.f32 %v1616, 1.442695
    %v1621 = vpow.pop %v1620
    %v1622 = vmul.f32 %v1617, 1.442695
    %v1623 = vpow.pop %v1622
    %v1624 = vadd.f32 %v1619, 1.0
    %v1625 = vadd.f32 %v1621, 1.0
    %v1626 = vadd.f32 %v1623, 1.0
    %v1627 = vrcp.pop %v1624
    %v1628 = vmul.f32 %v1624, %v1627
    %v1629 = vsub.f32 1.0, %v1628
    %v1630 = vmul.f32 %v1627, %v1629
    %v1631 = vadd.f32 %v1627, %v1630
    %vm1632 = vweird.f32 %v1624
    %vm1633 = vweird.f32 %v1627
    %vm1634 = vmor %vm1632, %vm1633
    %v1635 = vsel %vm1634, %v1627, %v1631
    %v1636 = vand.u32 2147483647, %v1624
    %vm1637 = vcmp.eq.f32.partialorder %v1636, 8.507059e+37
    %v1638 = vand.u32 %v1624, 2147483648
    %v1639 = vor.u32 1.1754944e-38, %v1638
    %v1640 = vsel %vm1637, %v1639, %v1635
    %v1641 = vmul.f32 1.0, %v1640
    %v1642 = vrcp.pop %v1625
    %v1643 = vmul.f32 %v1625, %v1642
    %v1644 = vsub.f32 1.0, %v1643
    %v1645 = vmul.f32 %v1642, %v1644
    %v1646 = vadd.f32 %v1642, %v1645
    %vm1647 = vweird.f32 %v1625
    %vm1648 = vweird.f32 %v1642
    %vm1649 = vmor %vm1647, %vm1648
    %v1650 = vsel %vm1649, %v1642, %v1646
    %v1651 = vand.u32 2147483647, %v1625
    %vm1652 = vcmp.eq.f32.partialorder %v1651, 8.507059e+37
    %v1653 = vand.u32 %v1625, 2147483648
    %v1654 = vor.u32 1.1754944e-38, %v1653
    %v1655 = vsel %vm1652, %v1654, %v1650
    %v1656 = vmul.f32 1.0, %v1655
    %v1657 = vrcp.pop %v1626
    %v1658 = vmul.f32 %v1626, %v1657
    %v1659 = vsub.f32 1.0, %v1658
    %v1660 = vmul.f32 %v1657, %v1659
    %v1661 = vadd.f32 %v1657, %v1660
    %vm1662 = vweird.f32 %v1626
    %vm1663 = vweird.f32 %v1657
    %vm1664 = vmor %vm1662, %vm1663
    %v1665 = vsel %vm1664, %v1657, %v1661
    %v1666 = vand.u32 2147483647, %v1626
    %vm1667 = vcmp.eq.f32.partialorder %v1666, 8.507059e+37
    %v1668 = vand.u32 %v1626, 2147483648
    %v1669 = vor.u32 1.1754944e-38, %v1668
    %v1670 = vsel %vm1667, %v1669, %v1665
    %v1671 = vmul.f32 1.0, %v1670
    %v1672 = vtanh.pop %v1612
    %v1673 = vmul.f32 %v1656, %v1521
    %v1674 = vmul.f32 %v1641, %v1672
    %v1675 = vadd.f32 %v1673, %v1674
    %v1676 = vtanh.pop %v1675
    %v1677 = vmul.f32 %v1671, %v1676
    %1678 = vst.msk [vmem:[#allocation3 + $0xe] sm:$0x3] %vm610, %v1677
    %1679 = vst.msk [vmem:[#allocation3] sm:$0x3] %vm612, %v1677
    %v1680 = vld [vmem:[#allocation3] sm:$0xff]
    %v1681 = vld [vmem:[#allocation3 + $0x8] sm:$0xff]
    %v1682 = vpack.c.bf16 %v1681, %v1680
    %v1683 = vld [vmem:[#allocation8] sm:$0xff]
    %v1684 = vld [vmem:[#allocation8 + $0x8] sm:$0xff]
    %v1685 = vld [vmem:[#allocation8 + $0x10] sm:$0xff]
    %v1686 = vld [vmem:[#allocation8 + $0x18] sm:$0xff]
    %v1687 = vld [vmem:[#allocation8 + $0x20] sm:$0xff]
    %v1688 = vld [vmem:[#allocation8 + $0x28] sm:$0xff]
    %v1689 = vld [vmem:[#allocation8 + $0x30] sm:$0xff]
    %v1690 = vld [vmem:[#allocation8 + $0x38] sm:$0xff]
    %v1691 = vld [vmem:[#allocation8 + $0x40] sm:$0xff]
    %v1692 = vld [vmem:[#allocation8 + $0x48] sm:$0xff]
    %v1693 = vld [vmem:[#allocation8 + $0x50] sm:$0xff]
    %v1694 = vld [vmem:[#allocation8 + $0x58] sm:$0xff]
    %v1695 = vld [vmem:[#allocation8 + $0x60] sm:$0xff]
    %v1696 = vld [vmem:[#allocation8 + $0x68] sm:$0xff]
    %v1697 = vld [vmem:[#allocation8 + $0x70] sm:$0xff]
    %v1698 = vld [vmem:[#allocation8 + $0x78] sm:$0xff]
    %v1699 = vld [vmem:[%s6] sm:$0x3]
    %v1701 = vperm.slane %v1699, 0
    %v1702 = vperm.slane %v1699, 1
    %v1721 = vunpack.c.l.b16 %v1683
    %v1722 = vunpack.c.h.b16 %v1683
    %v1723 = vunpack.c.l.b16 %v1684
    %v1724 = vunpack.c.h.b16 %v1684
    %v1725 = vunpack.c.l.b16 %v1685
    %v1726 = vunpack.c.h.b16 %v1685
    %v1727 = vunpack.c.l.b16 %v1686
    %v1728 = vunpack.c.h.b16 %v1686
    %v1729 = vunpack.c.l.b16 %v1687
    %v1730 = vunpack.c.h.b16 %v1687
    %v1731 = vunpack.c.l.b16 %v1688
    %v1732 = vunpack.c.h.b16 %v1688
    %v1733 = vunpack.c.l.b16 %v1689
    %v1734 = vunpack.c.h.b16 %v1689
    %v1735 = vunpack.c.l.b16 %v1690
    %v1736 = vunpack.c.h.b16 %v1690
    %v1737 = vunpack.c.l.b16 %v1691
    %v1738 = vunpack.c.h.b16 %v1691
    %v1739 = vunpack.c.l.b16 %v1692
    %v1740 = vunpack.c.h.b16 %v1692
    %v1741 = vunpack.c.l.b16 %v1693
    %v1742 = vunpack.c.h.b16 %v1693
    %v1743 = vunpack.c.l.b16 %v1694
    %v1744 = vunpack.c.h.b16 %v1694
    %v1745 = vunpack.c.l.b16 %v1695
    %v1746 = vunpack.c.h.b16 %v1695
    %v1747 = vunpack.c.l.b16 %v1696
    %v1748 = vunpack.c.h.b16 %v1696
    %v1749 = vunpack.c.l.b16 %v1697
    %v1750 = vunpack.c.h.b16 %v1697
    %v1751 = vunpack.c.l.b16 %v1698
    %v1752 = vunpack.c.h.b16 %v1698
    %v1753 = vpack.c.b16 %v1723, %v1721
    %v1754 = vpack.c.b16 %v1724, %v1722
    %v1755 = vpack.c.b16 %v1727, %v1725
    %v1756 = vpack.c.b16 %v1728, %v1726
    %v1757 = vpack.c.b16 %v1731, %v1729
    %v1758 = vpack.c.b16 %v1732, %v1730
    %v1759 = vpack.c.b16 %v1735, %v1733
    %v1760 = vpack.c.b16 %v1736, %v1734
    %v1761 = vpack.c.b16 %v1739, %v1737
    %v1762 = vpack.c.b16 %v1740, %v1738
    %v1763 = vpack.c.b16 %v1743, %v1741
    %v1764 = vpack.c.b16 %v1744, %v1742
    %v1765 = vpack.c.b16 %v1747, %v1745
    %v1766 = vpack.c.b16 %v1748, %v1746
    %v1767 = vpack.c.b16 %v1751, %v1749
    %v1768 = vpack.c.b16 %v1752, %v1750
    %1785 = vmatpush.bf16.msra.mxu0 %v1767
    %1786 = vmatpush.bf16.msra.mxu0 %v1765
    %1787 = vmatpush.bf16.msra.mxu0 %v1763
    %1788 = vmatpush.bf16.msra.mxu0 %v1761
    %1789 = vmatpush.bf16.msra.mxu0 %v1759
    %1790 = vmatpush.bf16.msra.mxu0 %v1757
    %1791 = vmatpush.bf16.msra.mxu0 %v1755
    %1792 = vmatpush.bf16.msra.mxu0 %v1753
    %1793 = vmatmul.bf16.gmra.mxu0 %v1682
    %v1794 = vpop.f32.mrf.mxu0
    %v1795 = vadd.f32 %v1701, %v1794
    %v1796 = vpop.f32.mrf.mxu0
    %v1797 = vadd.f32 %v1701, %v1796
    %1798 = vdwg.mxu0
    %1799 = vmatpush.bf16.msra.mxu0 %v1768
    %1800 = vmatpush.bf16.msra.mxu0 %v1766
    %1801 = vmatpush.bf16.msra.mxu0 %v1764
    %1802 = vmatpush.bf16.msra.mxu0 %v1762
    %1803 = vmatpush.bf16.msra.mxu0 %v1760
    %1804 = vmatpush.bf16.msra.mxu0 %v1758
    %1805 = vmatpush.bf16.msra.mxu0 %v1756
    %1806 = vmatpush.bf16.msra.mxu0 %v1754
    %1807 = vmatmul.bf16.gmra.mxu0 %v1682
    %v1808 = vpop.f32.mrf.mxu0
    %v1809 = vadd.f32 %v1702, %v1808
    %v1810 = vpop.f32.mrf.mxu0
    %v1811 = vadd.f32 %v1702, %v1810
    %1812 = vdwg.mxu0
    %v1813 = vmax.f32 %v1795, 0.0
    %v1814 = vmax.f32 %v1809, 0.0
    %v1815 = vmax.f32 %v1797, 0.0
    %v1816 = vmax.f32 %v1811, 0.0
    %v1817 = vpack.c.bf16 %v1815, %v1813
    %v1818 = vpack.c.bf16 %v1816, %v1814
    %v1819 = vld [vmem:[#allocation9] sm:$0xff]
    %v1820 = vld [vmem:[#allocation9 + $0x8] sm:$0xff]
    %v1821 = vld [vmem:[#allocation9 + $0x10] sm:$0xff]
    %v1822 = vld [vmem:[#allocation9 + $0x18] sm:$0xff]
    %v1823 = vld [vmem:[#allocation9 + $0x20] sm:$0xff]
    %v1824 = vld [vmem:[#allocation9 + $0x28] sm:$0xff]
    %v1825 = vld [vmem:[#allocation9 + $0x30] sm:$0xff]
    %v1826 = vld [vmem:[#allocation9 + $0x38] sm:$0xff]
    %v1827 = vld [vmem:[#allocation9 + $0x40] sm:$0xff]
    %v1828 = vld [vmem:[#allocation9 + $0x48] sm:$0xff]
    %v1829 = vld [vmem:[#allocation9 + $0x50] sm:$0xff]
    %v1830 = vld [vmem:[#allocation9 + $0x58] sm:$0xff]
    %v1831 = vld [vmem:[#allocation9 + $0x60] sm:$0xff]
    %v1832 = vld [vmem:[#allocation9 + $0x68] sm:$0xff]
    %v1833 = vld [vmem:[#allocation9 + $0x70] sm:$0xff]
    %v1834 = vld [vmem:[#allocation9 + $0x78] sm:$0xff]
    %v1835 = vld [vmem:[#allocation9 + $0x80] sm:$0xff]
    %v1836 = vld [vmem:[#allocation9 + $0x88] sm:$0xff]
    %v1837 = vld [vmem:[#allocation9 + $0x90] sm:$0xff]
    %v1838 = vld [vmem:[#allocation9 + $0x98] sm:$0xff]
    %v1839 = vld [vmem:[#allocation9 + $0xa0] sm:$0xff]
    %v1840 = vld [vmem:[#allocation9 + $0xa8] sm:$0xff]
    %v1841 = vld [vmem:[#allocation9 + $0xb0] sm:$0xff]
    %v1842 = vld [vmem:[#allocation9 + $0xb8] sm:$0xff]
    %v1843 = vld [vmem:[#allocation9 + $0xc0] sm:$0xff]
    %v1844 = vld [vmem:[#allocation9 + $0xc8] sm:$0xff]
    %v1845 = vld [vmem:[#allocation9 + $0xd0] sm:$0xff]
    %v1846 = vld [vmem:[#allocation9 + $0xd8] sm:$0xff]
    %v1847 = vld [vmem:[#allocation9 + $0xe0] sm:$0xff]
    %v1848 = vld [vmem:[#allocation9 + $0xe8] sm:$0xff]
    %v1849 = vld [vmem:[#allocation9 + $0xf0] sm:$0xff]
    %v1850 = vld [vmem:[#allocation9 + $0xf8] sm:$0xff]
    %v1851 = vld [vmem:[%s8] sm:$0x3]
    %v1853 = vperm.slane %v1851, 0
    %v1854 = vperm.slane %v1851, 1
    %v1889 = vunpack.c.l.b16 %v1819
    %v1890 = vunpack.c.h.b16 %v1819
    %v1891 = vunpack.c.l.b16 %v1820
    %v1892 = vunpack.c.h.b16 %v1820
    %v1893 = vunpack.c.l.b16 %v1821
    %v1894 = vunpack.c.h.b16 %v1821
    %v1895 = vunpack.c.l.b16 %v1822
    %v1896 = vunpack.c.h.b16 %v1822
    %v1897 = vunpack.c.l.b16 %v1823
    %v1898 = vunpack.c.h.b16 %v1823
    %v1899 = vunpack.c.l.b16 %v1824
    %v1900 = vunpack.c.h.b16 %v1824
    %v1901 = vunpack.c.l.b16 %v1825
    %v1902 = vunpack.c.h.b16 %v1825
    %v1903 = vunpack.c.l.b16 %v1826
    %v1904 = vunpack.c.h.b16 %v1826
    %v1905 = vunpack.c.l.b16 %v1827
    %v1906 = vunpack.c.h.b16 %v1827
    %v1907 = vunpack.c.l.b16 %v1828
    %v1908 = vunpack.c.h.b16 %v1828
    %v1909 = vunpack.c.l.b16 %v1829
    %v1910 = vunpack.c.h.b16 %v1829
    %v1911 = vunpack.c.l.b16 %v1830
    %v1912 = vunpack.c.h.b16 %v1830
    %v1913 = vunpack.c.l.b16 %v1831
    %v1914 = vunpack.c.h.b16 %v1831
    %v1915 = vunpack.c.l.b16 %v1832
    %v1916 = vunpack.c.h.b16 %v1832
    %v1917 = vunpack.c.l.b16 %v1833
    %v1918 = vunpack.c.h.b16 %v1833
    %v1919 = vunpack.c.l.b16 %v1834
    %v1920 = vunpack.c.h.b16 %v1834
    %v1921 = vunpack.c.l.b16 %v1835
    %v1922 = vunpack.c.h.b16 %v1835
    %v1923 = vunpack.c.l.b16 %v1836
    %v1924 = vunpack.c.h.b16 %v1836
    %v1925 = vunpack.c.l.b16 %v1837
    %v1926 = vunpack.c.h.b16 %v1837
    %v1927 = vunpack.c.l.b16 %v1838
    %v1928 = vunpack.c.h.b16 %v1838
    %v1929 = vunpack.c.l.b16 %v1839
    %v1930 = vunpack.c.h.b16 %v1839
    %v1931 = vunpack.c.l.b16 %v1840
    %v1932 = vunpack.c.h.b16 %v1840
    %v1933 = vunpack.c.l.b16 %v1841
    %v1934 = vunpack.c.h.b16 %v1841
    %v1935 = vunpack.c.l.b16 %v1842
    %v1936 = vunpack.c.h.b16 %v1842
    %v1937 = vunpack.c.l.b16 %v1843
    %v1938 = vunpack.c.h.b16 %v1843
    %v1939 = vunpack.c.l.b16 %v1844
    %v1940 = vunpack.c.h.b16 %v1844
    %v1941 = vunpack.c.l.b16 %v1845
    %v1942 = vunpack.c.h.b16 %v1845
    %v1943 = vunpack.c.l.b16 %v1846
    %v1944 = vunpack.c.h.b16 %v1846
    %v1945 = vunpack.c.l.b16 %v1847
    %v1946 = vunpack.c.h.b16 %v1847
    %v1947 = vunpack.c.l.b16 %v1848
    %v1948 = vunpack.c.h.b16 %v1848
    %v1949 = vunpack.c.l.b16 %v1849
    %v1950 = vunpack.c.h.b16 %v1849
    %v1951 = vunpack.c.l.b16 %v1850
    %v1952 = vunpack.c.h.b16 %v1850
    %v1953 = vpack.c.b16 %v1891, %v1889
    %v1954 = vpack.c.b16 %v1892, %v1890
    %v1955 = vpack.c.b16 %v1895, %v1893
    %v1956 = vpack.c.b16 %v1896, %v1894
    %v1957 = vpack.c.b16 %v1899, %v1897
    %v1958 = vpack.c.b16 %v1900, %v1898
    %v1959 = vpack.c.b16 %v1903, %v1901
    %v1960 = vpack.c.b16 %v1904, %v1902
    %v1961 = vpack.c.b16 %v1907, %v1905
    %v1962 = vpack.c.b16 %v1908, %v1906
    %v1963 = vpack.c.b16 %v1911, %v1909
    %v1964 = vpack.c.b16 %v1912, %v1910
    %v1965 = vpack.c.b16 %v1915, %v1913
    %v1966 = vpack.c.b16 %v1916, %v1914
    %v1967 = vpack.c.b16 %v1919, %v1917
    %v1968 = vpack.c.b16 %v1920, %v1918
    %v1969 = vpack.c.b16 %v1923, %v1921
    %v1970 = vpack.c.b16 %v1924, %v1922
    %v1971 = vpack.c.b16 %v1927, %v1925
    %v1972 = vpack.c.b16 %v1928, %v1926
    %v1973 = vpack.c.b16 %v1931, %v1929
    %v1974 = vpack.c.b16 %v1932, %v1930
    %v1975 = vpack.c.b16 %v1935, %v1933
    %v1976 = vpack.c.b16 %v1936, %v1934
    %v1977 = vpack.c.b16 %v1939, %v1937
    %v1978 = vpack.c.b16 %v1940, %v1938
    %v1979 = vpack.c.b16 %v1943, %v1941
    %v1980 = vpack.c.b16 %v1944, %v1942
    %v1981 = vpack.c.b16 %v1947, %v1945
    %v1982 = vpack.c.b16 %v1948, %v1946
    %v1983 = vpack.c.b16 %v1951, %v1949
    %v1984 = vpack.c.b16 %v1952, %v1950
    %2017 = vmatpush.bf16.msra.mxu0 %v1967
    %2018 = vmatpush.bf16.msra.mxu0 %v1965
    %2019 = vmatpush.bf16.msra.mxu0 %v1963
    %2020 = vmatpush.bf16.msra.mxu0 %v1961
    %2021 = vmatpush.bf16.msra.mxu0 %v1959
    %2022 = vmatpush.bf16.msra.mxu0 %v1957
    %2023 = vmatpush.bf16.msra.mxu0 %v1955
    %2024 = vmatpush.bf16.msra.mxu0 %v1953
    %2025 = vmatmul.bf16.gmra.mxu0 %v1817
    %v2026 = vpop.f32.mrf.mxu0
    %v2027 = vadd.f32 %v1853, %v2026
    %v2028 = vpop.f32.mrf.mxu0
    %v2029 = vadd.f32 %v1853, %v2028
    %2030 = vdwg.mxu0
    %2031 = vmatpush.bf16.msra.mxu0 %v1983
    %2032 = vmatpush.bf16.msra.mxu0 %v1981
    %2033 = vmatpush.bf16.msra.mxu0 %v1979
    %2034 = vmatpush.bf16.msra.mxu0 %v1977
    %2035 = vmatpush.bf16.msra.mxu0 %v1975
    %2036 = vmatpush.bf16.msra.mxu0 %v1973
    %2037 = vmatpush.bf16.msra.mxu0 %v1971
    %2038 = vmatpush.bf16.msra.mxu0 %v1969
    %2039 = vmatmul.bf16.gmra.mxu0 %v1818
    %v2040 = vpop.f32.mrf.mxu0
    %v2041 = vadd.f32 %v2027, %v2040
    %v2042 = vpop.f32.mrf.mxu0
    %v2043 = vadd.f32 %v2029, %v2042
    %2044 = vdwg.mxu0
    %2045 = vmatpush.bf16.msra.mxu0 %v1968
    %2046 = vmatpush.bf16.msra.mxu0 %v1966
    %2047 = vmatpush.bf16.msra.mxu0 %v1964
    %2048 = vmatpush.bf16.msra.mxu0 %v1962
    %2049 = vmatpush.bf16.msra.mxu0 %v1960
    %2050 = vmatpush.bf16.msra.mxu0 %v1958
    %2051 = vmatpush.bf16.msra.mxu0 %v1956
    %2052 = vmatpush.bf16.msra.mxu0 %v1954
    %2053 = vmatmul.bf16.gmra.mxu0 %v1817
    %v2054 = vpop.f32.mrf.mxu0
    %v2055 = vadd.f32 %v1854, %v2054
    %v2056 = vpop.f32.mrf.mxu0
    %v2057 = vadd.f32 %v1854, %v2056
    %2058 = vdwg.mxu0
    %2059 = vmatpush.bf16.msra.mxu0 %v1984
    %2060 = vmatpush.bf16.msra.mxu0 %v1982
    %2061 = vmatpush.bf16.msra.mxu0 %v1980
    %2062 = vmatpush.bf16.msra.mxu0 %v1978
    %2063 = vmatpush.bf16.msra.mxu0 %v1976
    %2064 = vmatpush.bf16.msra.mxu0 %v1974
    %2065 = vmatpush.bf16.msra.mxu0 %v1972
    %2066 = vmatpush.bf16.msra.mxu0 %v1970
    %2067 = vmatmul.bf16.gmra.mxu0 %v1818
    %v2068 = vpop.f32.mrf.mxu0
    %v2069 = vadd.f32 %v2055, %v2068
    %v2070 = vpop.f32.mrf.mxu0
    %v2071 = vadd.f32 %v2057, %v2070
    %2072 = vdwg.mxu0
    %v2073 = vmax.f32 %v2041, 0.0
    %v2074 = vmax.f32 %v2069, 0.0
    %v2075 = vmax.f32 %v2043, 0.0
    %v2076 = vmax.f32 %v2071, 0.0
    %v2077 = vpack.c.bf16 %v2075, %v2073
    %v2078 = vpack.c.bf16 %v2076, %v2074
    %v2079 = vld [vmem:[#allocation11] sm:$0xff]
    %v2080 = vld [vmem:[#allocation11 + $0x8] sm:$0xff]
    %v2081 = vld [vmem:[#allocation11 + $0x10] sm:$0xff]
    %v2082 = vld [vmem:[#allocation11 + $0x18] sm:$0xff]
    %v2083 = vld [vmem:[#allocation11 + $0x20] sm:$0xff]
    %v2084 = vld [vmem:[#allocation11 + $0x28] sm:$0xff]
    %v2085 = vld [vmem:[#allocation11 + $0x30] sm:$0xff]
    %v2086 = vld [vmem:[#allocation11 + $0x38] sm:$0xff]
    %v2087 = vld [vmem:[#allocation11 + $0x40] sm:$0xff]
    %v2088 = vld [vmem:[#allocation11 + $0x48] sm:$0xff]
    %v2089 = vld [vmem:[#allocation11 + $0x50] sm:$0xff]
    %v2090 = vld [vmem:[#allocation11 + $0x58] sm:$0xff]
    %v2091 = vld [vmem:[#allocation11 + $0x60] sm:$0xff]
    %v2092 = vld [vmem:[#allocation11 + $0x68] sm:$0xff]
    %v2093 = vld [vmem:[#allocation11 + $0x70] sm:$0xff]
    %v2094 = vld [vmem:[#allocation11 + $0x78] sm:$0xff]
    %v2095 = vld [vmem:[#allocation11 + $0x80] sm:$0xff]
    %v2096 = vld [vmem:[#allocation11 + $0x88] sm:$0xff]
    %v2097 = vld [vmem:[#allocation11 + $0x90] sm:$0xff]
    %v2098 = vld [vmem:[#allocation11 + $0x98] sm:$0xff]
    %v2099 = vld [vmem:[#allocation11 + $0xa0] sm:$0xff]
    %v2100 = vld [vmem:[#allocation11 + $0xa8] sm:$0xff]
    %v2101 = vld [vmem:[#allocation11 + $0xb0] sm:$0xff]
    %v2102 = vld [vmem:[#allocation11 + $0xb8] sm:$0xff]
    %v2103 = vld [vmem:[#allocation11 + $0xc0] sm:$0xff]
    %v2104 = vld [vmem:[#allocation11 + $0xc8] sm:$0xff]
    %v2105 = vld [vmem:[#allocation11 + $0xd0] sm:$0xff]
    %v2106 = vld [vmem:[#allocation11 + $0xd8] sm:$0xff]
    %v2107 = vld [vmem:[#allocation11 + $0xe0] sm:$0xff]
    %v2108 = vld [vmem:[#allocation11 + $0xe8] sm:$0xff]
    %v2109 = vld [vmem:[#allocation11 + $0xf0] sm:$0xff]
    %v2110 = vld [vmem:[#allocation11 + $0xf8] sm:$0xff]
    %v2111 = vld [vmem:[%s10] sm:$0x3]
    %v2113 = vperm.slane %v2111, 0
    %v2114 = vperm.slane %v2111, 1
    %v2149 = vunpack.c.l.b16 %v2079
    %v2150 = vunpack.c.h.b16 %v2079
    %v2151 = vunpack.c.l.b16 %v2080
    %v2152 = vunpack.c.h.b16 %v2080
    %v2153 = vunpack.c.l.b16 %v2081
    %v2154 = vunpack.c.h.b16 %v2081
    %v2155 = vunpack.c.l.b16 %v2082
    %v2156 = vunpack.c.h.b16 %v2082
    %v2157 = vunpack.c.l.b16 %v2083
    %v2158 = vunpack.c.h.b16 %v2083
    %v2159 = vunpack.c.l.b16 %v2084
    %v2160 = vunpack.c.h.b16 %v2084
    %v2161 = vunpack.c.l.b16 %v2085
    %v2162 = vunpack.c.h.b16 %v2085
    %v2163 = vunpack.c.l.b16 %v2086
    %v2164 = vunpack.c.h.b16 %v2086
    %v2165 = vunpack.c.l.b16 %v2087
    %v2166 = vunpack.c.h.b16 %v2087
    %v2167 = vunpack.c.l.b16 %v2088
    %v2168 = vunpack.c.h.b16 %v2088
    %v2169 = vunpack.c.l.b16 %v2089
    %v2170 = vunpack.c.h.b16 %v2089
    %v2171 = vunpack.c.l.b16 %v2090
    %v2172 = vunpack.c.h.b16 %v2090
    %v2173 = vunpack.c.l.b16 %v2091
    %v2174 = vunpack.c.h.b16 %v2091
    %v2175 = vunpack.c.l.b16 %v2092
    %v2176 = vunpack.c.h.b16 %v2092
    %v2177 = vunpack.c.l.b16 %v2093
    %v2178 = vunpack.c.h.b16 %v2093
    %v2179 = vunpack.c.l.b16 %v2094
    %v2180 = vunpack.c.h.b16 %v2094
    %v2181 = vunpack.c.l.b16 %v2095
    %v2182 = vunpack.c.h.b16 %v2095
    %v2183 = vunpack.c.l.b16 %v2096
    %v2184 = vunpack.c.h.b16 %v2096
    %v2185 = vunpack.c.l.b16 %v2097
    %v2186 = vunpack.c.h.b16 %v2097
    %v2187 = vunpack.c.l.b16 %v2098
    %v2188 = vunpack.c.h.b16 %v2098
    %v2189 = vunpack.c.l.b16 %v2099
    %v2190 = vunpack.c.h.b16 %v2099
    %v2191 = vunpack.c.l.b16 %v2100
    %v2192 = vunpack.c.h.b16 %v2100
    %v2193 = vunpack.c.l.b16 %v2101
    %v2194 = vunpack.c.h.b16 %v2101
    %v2195 = vunpack.c.l.b16 %v2102
    %v2196 = vunpack.c.h.b16 %v2102
    %v2197 = vunpack.c.l.b16 %v2103
    %v2198 = vunpack.c.h.b16 %v2103
    %v2199 = vunpack.c.l.b16 %v2104
    %v2200 = vunpack.c.h.b16 %v2104
    %v2201 = vunpack.c.l.b16 %v2105
    %v2202 = vunpack.c.h.b16 %v2105
    %v2203 = vunpack.c.l.b16 %v2106
    %v2204 = vunpack.c.h.b16 %v2106
    %v2205 = vunpack.c.l.b16 %v2107
    %v2206 = vunpack.c.h.b16 %v2107
    %v2207 = vunpack.c.l.b16 %v2108
    %v2208 = vunpack.c.h.b16 %v2108
    %v2209 = vunpack.c.l.b16 %v2109
    %v2210 = vunpack.c.h.b16 %v2109
    %v2211 = vunpack.c.l.b16 %v2110
    %v2212 = vunpack.c.h.b16 %v2110
    %v2213 = vpack.c.b16 %v2151, %v2149
    %v2214 = vpack.c.b16 %v2152, %v2150
    %v2215 = vpack.c.b16 %v2155, %v2153
    %v2216 = vpack.c.b16 %v2156, %v2154
    %v2217 = vpack.c.b16 %v2159, %v2157
    %v2218 = vpack.c.b16 %v2160, %v2158
    %v2219 = vpack.c.b16 %v2163, %v2161
    %v2220 = vpack.c.b16 %v2164, %v2162
    %v2221 = vpack.c.b16 %v2167, %v2165
    %v2222 = vpack.c.b16 %v2168, %v2166
    %v2223 = vpack.c.b16 %v2171, %v2169
    %v2224 = vpack.c.b16 %v2172, %v2170
    %v2225 = vpack.c.b16 %v2175, %v2173
    %v2226 = vpack.c.b16 %v2176, %v2174
    %v2227 = vpack.c.b16 %v2179, %v2177
    %v2228 = vpack.c.b16 %v2180, %v2178
    %v2229 = vpack.c.b16 %v2183, %v2181
    %v2230 = vpack.c.b16 %v2184, %v2182
    %v2231 = vpack.c.b16 %v2187, %v2185
    %v2232 = vpack.c.b16 %v2188, %v2186
    %v2233 = vpack.c.b16 %v2191, %v2189
    %v2234 = vpack.c.b16 %v2192, %v2190
    %v2235 = vpack.c.b16 %v2195, %v2193
    %v2236 = vpack.c.b16 %v2196, %v2194
    %v2237 = vpack.c.b16 %v2199, %v2197
    %v2238 = vpack.c.b16 %v2200, %v2198
    %v2239 = vpack.c.b16 %v2203, %v2201
    %v2240 = vpack.c.b16 %v2204, %v2202
    %v2241 = vpack.c.b16 %v2207, %v2205
    %v2242 = vpack.c.b16 %v2208, %v2206
    %v2243 = vpack.c.b16 %v2211, %v2209
    %v2244 = vpack.c.b16 %v2212, %v2210
    %2277 = vmatpush.bf16.msra.mxu0 %v2227
    %2278 = vmatpush.bf16.msra.mxu0 %v2225
    %2279 = vmatpush.bf16.msra.mxu0 %v2223
    %2280 = vmatpush.bf16.msra.mxu0 %v2221
    %2281 = vmatpush.bf16.msra.mxu0 %v2219
    %2282 = vmatpush.bf16.msra.mxu0 %v2217
    %2283 = vmatpush.bf16.msra.mxu0 %v2215
    %2284 = vmatpush.bf16.msra.mxu0 %v2213
    %2285 = vmatmul.bf16.gmra.mxu0 %v2077
    %v2286 = vpop.f32.mrf.mxu0
    %v2287 = vadd.f32 %v2113, %v2286
    %v2288 = vpop.f32.mrf.mxu0
    %v2289 = vadd.f32 %v2113, %v2288
    %2290 = vdwg.mxu0
    %2291 = vmatpush.bf16.msra.mxu0 %v2243
    %2292 = vmatpush.bf16.msra.mxu0 %v2241
    %2293 = vmatpush.bf16.msra.mxu0 %v2239
    %2294 = vmatpush.bf16.msra.mxu0 %v2237
    %2295 = vmatpush.bf16.msra.mxu0 %v2235
    %2296 = vmatpush.bf16.msra.mxu0 %v2233
    %2297 = vmatpush.bf16.msra.mxu0 %v2231
    %2298 = vmatpush.bf16.msra.mxu0 %v2229
    %2299 = vmatmul.bf16.gmra.mxu0 %v2078
    %v2300 = vpop.f32.mrf.mxu0
    %v2301 = vadd.f32 %v2287, %v2300
    %v2302 = vpop.f32.mrf.mxu0
    %v2303 = vadd.f32 %v2289, %v2302
    %2304 = vdwg.mxu0
    %2305 = vmatpush.bf16.msra.mxu0 %v2228
    %2306 = vmatpush.bf16.msra.mxu0 %v2226
    %2307 = vmatpush.bf16.msra.mxu0 %v2224
    %2308 = vmatpush.bf16.msra.mxu0 %v2222
    %2309 = vmatpush.bf16.msra.mxu0 %v2220
    %2310 = vmatpush.bf16.msra.mxu0 %v2218
    %2311 = vmatpush.bf16.msra.mxu0 %v2216
    %2312 = vmatpush.bf16.msra.mxu0 %v2214
    %2313 = vmatmul.bf16.gmra.mxu0 %v2077
    %v2314 = vpop.f32.mrf.mxu0
    %v2315 = vadd.f32 %v2114, %v2314
    %v2316 = vpop.f32.mrf.mxu0
    %v2317 = vadd.f32 %v2114, %v2316
    %2318 = vdwg.mxu0
    %2319 = vmatpush.bf16.msra.mxu0 %v2244
    %2320 = vmatpush.bf16.msra.mxu0 %v2242
    %2321 = vmatpush.bf16.msra.mxu0 %v2240
    %2322 = vmatpush.bf16.msra.mxu0 %v2238
    %2323 = vmatpush.bf16.msra.mxu0 %v2236
    %2324 = vmatpush.bf16.msra.mxu0 %v2234
    %2325 = vmatpush.bf16.msra.mxu0 %v2232
    %2326 = vmatpush.bf16.msra.mxu0 %v2230
    %2327 = vmatmul.bf16.gmra.mxu0 %v2078
    %v2328 = vpop.f32.mrf.mxu0
    %v2329 = vadd.f32 %v2315, %v2328
    %v2330 = vpop.f32.mrf.mxu0
    %v2331 = vadd.f32 %v2317, %v2330
    %2332 = vdwg.mxu0
    %v2333 = vmax.f32 %v2301, 0.0
    %v2334 = vmax.f32 %v2329, 0.0
    %v2335 = vmax.f32 %v2303, 0.0
    %v2336 = vmax.f32 %v2331, 0.0
    %v2337 = vpack.c.bf16 %v2335, %v2333
    %v2338 = vpack.c.bf16 %v2336, %v2334
    %v2339 = vld [vmem:[#allocation12] sm:$0xf]
    %v2340 = vld [vmem:[#allocation12 + $0x4] sm:$0xf]
    %v2341 = vld [vmem:[#allocation12 + $0x8] sm:$0xf]
    %v2342 = vld [vmem:[#allocation12 + $0xc] sm:$0xf]
    %v2343 = vld [vmem:[#allocation12 + $0x10] sm:$0xf]
    %v2344 = vld [vmem:[#allocation12 + $0x14] sm:$0xf]
    %v2345 = vld [vmem:[#allocation12 + $0x18] sm:$0xf]
    %v2346 = vld [vmem:[#allocation12 + $0x1c] sm:$0xf]
    %v2347 = vld [vmem:[#allocation12 + $0x20] sm:$0xf]
    %v2348 = vld [vmem:[#allocation12 + $0x24] sm:$0xf]
    %v2349 = vld [vmem:[#allocation12 + $0x28] sm:$0xf]
    %v2350 = vld [vmem:[#allocation12 + $0x2c] sm:$0xf]
    %v2351 = vld [vmem:[#allocation12 + $0x30] sm:$0xf]
    %v2352 = vld [vmem:[#allocation12 + $0x34] sm:$0xf]
    %v2353 = vld [vmem:[#allocation12 + $0x38] sm:$0xf]
    %v2354 = vld [vmem:[#allocation12 + $0x3c] sm:$0xf]
    %v2355 = vld [vmem:[#allocation12 + $0x40] sm:$0xf]
    %v2356 = vld [vmem:[#allocation12 + $0x44] sm:$0xf]
    %v2357 = vld [vmem:[#allocation12 + $0x48] sm:$0xf]
    %v2358 = vld [vmem:[#allocation12 + $0x4c] sm:$0xf]
    %v2359 = vld [vmem:[#allocation12 + $0x50] sm:$0xf]
    %v2360 = vld [vmem:[#allocation12 + $0x54] sm:$0xf]
    %v2361 = vld [vmem:[#allocation12 + $0x58] sm:$0xf]
    %v2362 = vld [vmem:[#allocation12 + $0x5c] sm:$0xf]
    %v2363 = vld [vmem:[#allocation12 + $0x60] sm:$0xf]
    %v2364 = vld [vmem:[#allocation12 + $0x64] sm:$0xf]
    %v2365 = vld [vmem:[#allocation12 + $0x68] sm:$0xf]
    %v2366 = vld [vmem:[#allocation12 + $0x6c] sm:$0xf]
    %v2367 = vld [vmem:[#allocation12 + $0x70] sm:$0xf]
    %v2368 = vld [vmem:[#allocation12 + $0x74] sm:$0xf]
    %v2369 = vld [vmem:[#allocation12 + $0x78] sm:$0xf]
    %v2370 = vld [vmem:[#allocation12 + $0x7c] sm:$0xf]
    %v2371 = vld [vmem:[%s12] sm:$0x1]
    %v2373 = vperm.slane %v2371, 0
    %v2407 = vunpack.c.l.b16 %v2339
    %v2408 = vunpack.c.l.b16 %v2340
    %v2409 = vunpack.c.l.b16 %v2341
    %v2410 = vunpack.c.l.b16 %v2342
    %v2411 = vunpack.c.l.b16 %v2343
    %v2412 = vunpack.c.l.b16 %v2344
    %v2413 = vunpack.c.l.b16 %v2345
    %v2414 = vunpack.c.l.b16 %v2346
    %v2415 = vunpack.c.l.b16 %v2347
    %v2416 = vunpack.c.l.b16 %v2348
    %v2417 = vunpack.c.l.b16 %v2349
    %v2418 = vunpack.c.l.b16 %v2350
    %v2419 = vunpack.c.l.b16 %v2351
    %v2420 = vunpack.c.l.b16 %v2352
    %v2421 = vunpack.c.l.b16 %v2353
    %v2422 = vunpack.c.l.b16 %v2354
    %v2423 = vunpack.c.l.b16 %v2355
    %v2424 = vunpack.c.l.b16 %v2356
    %v2425 = vunpack.c.l.b16 %v2357
    %v2426 = vunpack.c.l.b16 %v2358
    %v2427 = vunpack.c.l.b16 %v2359
    %v2428 = vunpack.c.l.b16 %v2360
    %v2429 = vunpack.c.l.b16 %v2361
    %v2430 = vunpack.c.l.b16 %v2362
    %v2431 = vunpack.c.l.b16 %v2363
    %v2432 = vunpack.c.l.b16 %v2364
    %v2433 = vunpack.c.l.b16 %v2365
    %v2434 = vunpack.c.l.b16 %v2366
    %v2435 = vunpack.c.l.b16 %v2367
    %v2436 = vunpack.c.l.b16 %v2368
    %v2437 = vunpack.c.l.b16 %v2369
    %v2438 = vunpack.c.l.b16 %v2370
    %v2439 = vpack.c.b16 %v2408, %v2407
    %v2440 = vpack.c.b16 %v2410, %v2409
    %v2441 = vpack.c.b16 %v2412, %v2411
    %v2442 = vpack.c.b16 %v2414, %v2413
    %v2443 = vpack.c.b16 %v2416, %v2415
    %v2444 = vpack.c.b16 %v2418, %v2417
    %v2445 = vpack.c.b16 %v2420, %v2419
    %v2446 = vpack.c.b16 %v2422, %v2421
    %v2447 = vpack.c.b16 %v2424, %v2423
    %v2448 = vpack.c.b16 %v2426, %v2425
    %v2449 = vpack.c.b16 %v2428, %v2427
    %v2450 = vpack.c.b16 %v2430, %v2429
    %v2451 = vpack.c.b16 %v2432, %v2431
    %v2452 = vpack.c.b16 %v2434, %v2433
    %v2453 = vpack.c.b16 %v2436, %v2435
    %v2454 = vpack.c.b16 %v2438, %v2437
    %2471 = vmatpush.bf16.msra.mxu0 %v2446
    %2472 = vmatpush.bf16.msra.mxu0 %v2445
    %2473 = vmatpush.bf16.msra.mxu0 %v2444
    %2474 = vmatpush.bf16.msra.mxu0 %v2443
    %2475 = vmatpush.bf16.msra.mxu0 %v2442
    %2476 = vmatpush.bf16.msra.mxu0 %v2441
    %2477 = vmatpush.bf16.msra.mxu0 %v2440
    %2478 = vmatpush.bf16.msra.mxu0 %v2439
    %2479 = vmatmul.bf16.gmra.mxu0 %v2337
    %v2480 = vpop.f32.mrf.mxu0
    %v2481 = vadd.f32 %v2373, %v2480
    %v2482 = vpop.f32.mrf.mxu0
    %v2483 = vadd.f32 %v2373, %v2482
    %2484 = vdwg.mxu0
    %2485 = vmatpush.bf16.msra.mxu0 %v2454
    %2486 = vmatpush.bf16.msra.mxu0 %v2453
    %2487 = vmatpush.bf16.msra.mxu0 %v2452
    %2488 = vmatpush.bf16.msra.mxu0 %v2451
    %2489 = vmatpush.bf16.msra.mxu0 %v2450
    %2490 = vmatpush.bf16.msra.mxu0 %v2449
    %2491 = vmatpush.bf16.msra.mxu0 %v2448
    %2492 = vmatpush.bf16.msra.mxu0 %v2447
    %2493 = vmatmul.bf16.gmra.mxu0 %v2338
    %v2494 = vpop.f32.mrf.mxu0
    %v2495 = vadd.f32 %v2481, %v2494
    %v2496 = vpop.f32.mrf.mxu0
    %v2497 = vadd.f32 %v2483, %v2496
    %2498 = vdwg.mxu0
    %2499 = vmax.xlane.f32.xlu0 %v2495
    %v2500 = vpop.xlane.xlu0 %2499
    %2501 = vmax.xlane.f32.xlu0 %v2497
    %v2502 = vpop.xlane.xlu0 %2501
    %v2503 = vsub.f32 %v2495, %v2500
    %v2504 = vsub.f32 %v2497, %v2502
    %v2505 = vmul.f32 %v2503, 1.442695
    %v2506 = vpow.pop %v2505
    %v2507 = vmul.f32 %v2504, 1.442695
    %v2508 = vpow.pop %v2507
    %2509 = vadd.xlane.f32.xlu0 %v2506
    %v2510 = vpop.xlane.xlu0 %2509
    %2511 = vadd.xlane.f32.xlu0 %v2508
    %v2512 = vpop.xlane.xlu0 %2511
    %v2513 = vrcp.pop %v2510
    %v2514 = vmul.f32 %v2510, %v2513
    %v2515 = vsub.f32 1.0, %v2514
    %v2516 = vmul.f32 %v2513, %v2515
    %v2517 = vadd.f32 %v2513, %v2516
    %vm2518 = vweird.f32 %v2510
    %vm2519 = vweird.f32 %v2513
    %vm2520 = vmor %vm2518, %vm2519
    %v2521 = vsel %vm2520, %v2513, %v2517
    %v2522 = vand.u32 2147483647, %v2510
    %vm2523 = vcmp.eq.f32.partialorder %v2522, 8.507059e+37
    %v2524 = vand.u32 %v2510, 2147483648
    %v2525 = vor.u32 1.1754944e-38, %v2524
    %v2526 = vsel %vm2523, %v2525, %v2521
    %v2527 = vmul.f32 %v2506, %v2526
    %v2528 = vrcp.pop %v2512
    %v2529 = vmul.f32 %v2512, %v2528
    %v2530 = vsub.f32 1.0, %v2529
    %v2531 = vmul.f32 %v2528, %v2530
    %v2532 = vadd.f32 %v2528, %v2531
    %vm2533 = vweird.f32 %v2512
    %vm2534 = vweird.f32 %v2528
    %vm2535 = vmor %vm2533, %vm2534
    %v2536 = vsel %vm2535, %v2528, %v2532
    %v2537 = vand.u32 2147483647, %v2512
    %vm2538 = vcmp.eq.f32.partialorder %v2537, 8.507059e+37
    %v2539 = vand.u32 %v2512, 2147483648
    %v2540 = vor.u32 1.1754944e-38, %v2539
    %v2541 = vsel %vm2538, %v2540, %v2536
    %v2542 = vmul.f32 %v2508, %v2541
    %2543 = vst [vmem:[%s13] sm:$0xff] %v2527
    %2544 = vst [vmem:[%s13 + $0x8] sm:$0xff] %v2542
    // Predicated region
    $region78: #{abstract_pu_forward.1} parent=1 // pred_check
      _
    $region79: #{abstract_pu_forward.1} parent=1 // pred_check_branch
      %2546 = sbr.rel (0) target = $region81
    $region80: #{abstract_pu_forward.1} parent=1 // pred_region
      _
    $region81: #{abstract_pu_forward.1} parent=1 // pred_fallthru
      _
    // Predicated region
    $region82: #{abstract_pu_forward.1} parent=1 // pred_check
      _
    $region83: #{abstract_pu_forward.1} parent=1 // pred_check_branch
      %2548 = sbr.rel (0) target = $region85
    $region84: #{abstract_pu_forward.1} parent=1 // pred_region
      _
    $region85: #{abstract_pu_forward.1} parent=1 // pred_fallthru
      _
    %2549 = vsyncpa [#allocation5], 1
    %2550 = vsyncpa [#allocation7], 1
    %2551 = vsyncpa [#allocation10], 1
    %2552 = vsyncpa [#allocation13], 1

</llo_original>
